<compile_context>
chip_gen: v7x
topology: tpu7x:2x2x1
jax: 0.10.0
libtpu: 0.0.40
codegen_flags: <defaults>
</compile_context>

<pallas_src>
import math

import numpy as np
import jax
import jax.numpy as jnp
from jax.experimental import pallas as pl
from jax.experimental.pallas import tpu as pltpu


HEAD_W = 128  # lane-dense packed head-output width (multiple of 128)

# bias/mask slab row indices (single f32 (9, 896) VMEM ref, sliced in-kernel)
_B1, _B2, _B3, _BF1, _BF2, _BEVP, _BHEAD, _VMASK, _PBIAS = range(9)


def conv_shape(n, k, s, pad=0):
    return (n + 2 * pad - k) // s + 1


def _vmem_spec():
    return pl.BlockSpec(memory_space=pltpu.MemorySpace.VMEM)


# ------------------------------ fused kernel --------------------------------

def _policy_fused_kernel(patches_ref, w1_ref, w2_ref, g2_ref, w3_ref,
                         wf1_ref, wf2_ref, wevp_ref, whead_ref, bias_ref,
                         out_ref):
    f32 = jnp.float32
    bf16 = jnp.bfloat16
    B = out_ref.shape[0]

    def mxu(a, b):  # bf16 MXU inputs, f32 accumulation
        return jnp.dot(a.astype(bf16), b.astype(bf16), preferred_element_type=f32)

    # Static slices of the consolidated bias / mask slab (f32).
    b1 = bias_ref[_B1:_B1 + 1, 0:32]
    b2 = bias_ref[_B2:_B2 + 1, 0:64]
    b3 = bias_ref[_B3:_B3 + 1, 0:64]
    bf1 = bias_ref[_BF1:_BF1 + 1, 0:256]
    bf2 = bias_ref[_BF2:_BF2 + 1, 0:448]
    bevp = bias_ref[_BEVP:_BEVP + 1, 0:896]
    bhead = bias_ref[_BHEAD:_BHEAD + 1, 0:HEAD_W]
    vmask = bias_ref[_VMASK:_VMASK + 1, 0:HEAD_W]
    pbias = bias_ref[_PBIAS:_PBIAS + 1, 0:HEAD_W]

    # conv1 as im2col matmul (1/255 scale pre-folded into w1):
    #   (B*OH1*OW1, Cin*8*8) @ (Cin*8*8, 32)
    x1 = jnp.maximum(mxu(patches_ref[...], w1_ref[...]) + b1, 0.0)

    # conv2 via associativity: ONE lane-dense (B*64,32)@(32,16*64) matmul, then
    # 16 independent constant 0/1 gather matmuls (one per 4x4 tap), tree-summed
    # with 4 partial accumulators to bound vreg live ranges.
    yb = mxu(x1, w2_ref[...]).astype(bf16)          # (B*64, 16*64)
    n_taps2 = g2_ref.shape[0]                        # 16
    rows2 = g2_ref.shape[1]                          # 9*B (spatial-major, batch-minor)
    part2 = [jnp.zeros((rows2, 64), f32) for _ in range(4)]
    for kk in range(n_taps2):
        part2[kk % 4] = part2[kk % 4] + jnp.dot(
            g2_ref[kk], yb[:, kk * 64:(kk + 1) * 64], preferred_element_type=f32)
    x2 = jnp.maximum((part2[0] + part2[1]) + (part2[2] + part2[3]) + b2, 0.0)

    # conv3 output spatial is 1x1 -> plain FC.  x2 rows are spatial-major so the
    # input of tap kk is the contiguous row slice [kk*B, (kk+1)*B).
    n_taps3 = w3_ref.shape[0]                        # 9
    part3 = [jnp.zeros((B, 64), f32) for _ in range(3)]
    for kk in range(n_taps3):
        part3[kk % 3] = part3[kk % 3] + mxu(x2[kk * B:(kk + 1) * B, :], w3_ref[kk])
    x3 = jnp.maximum(part3[0] + part3[1] + part3[2] + b3, 0.0)   # (B, 64) == flatten

    # fc1, fc2
    h = jnp.maximum(mxu(x3, wf1_ref[...]) + bf1, 0.0)    # (B, 256)
    h = jnp.maximum(mxu(h, wf2_ref[...]) + bf2, 0.0)     # (B, 448)

    # residual heads: extra_value_fc | extra_policy_fc fused into ONE matmul.
    e = jnp.maximum(mxu(h, wevp_ref[...]) + bevp, 0.0)   # (B, 896)
    xcat = jnp.concatenate([h, h], axis=1) + e           # [x_v | x_pi]  (B, 896)

    # value + policy heads fused into ONE (896, 128) matmul; lane-dense output:
    #   cols 0,1      : int_value, ext_value   (picked out by the 0/1 vmask)
    #   cols 2..2+A-1 : softmax(policy)         (pad cols biased to -1e30 -> exp==0;
    #                                            finite pad, NOT -inf)
    z = mxu(xcat, whead_ref[...]) + bhead                 # (B, 128)
    logits = z + pbias
    m = jnp.max(logits, axis=1, keepdims=True)
    ex = jnp.exp(logits - m)
    probs = ex * pl.reciprocal(jnp.sum(ex, axis=1, keepdims=True), approx=True)
    out_ref[...] = z * vmask + probs


# ------------------------------ JAX wrapper ----------------------------------

def policy_forward(packed, inputs):
    """PolicyModel.forward.  Returns the packed (B, HEAD_W) head slab:
    col 0 = int_value, col 1 = ext_value, cols 2:2+A = softmax(policy).
    (torch.distributions.Categorical is fully determined by the probs.)"""
    B = inputs.shape[0]

    # conv1 im2col patches via ONE XLA op; NHWC out spec -> no transpose needed.
    # Feature order is (Cin, kh, kw), matching the PyTorch weight.reshape order
    # used in pack_params.
    patches = jax.lax.conv_general_dilated_patches(
        inputs, filter_shape=(8, 8), window_strides=(4, 4), padding="VALID",
        dimension_numbers=("NCHW", "OIHW", "NHWC"))
    _, OH, OW, F = patches.shape
    patches = patches.reshape(B * OH * OW, F).astype(jnp.bfloat16)

    return pl.pallas_call(
        _policy_fused_kernel,
        out_shape=jax.ShapeDtypeStruct((B, HEAD_W), jnp.float32),
        in_specs=[_vmem_spec()] * 10,
        out_specs=_vmem_spec(),
    )(patches, packed["w1"], packed["w2"], packed["g2"], packed["w3"],
      packed["wf1"], packed["wf2"], packed["wevp"], packed["whead"],
      packed["bias"])


# --------------------------- one-time param packing --------------------------

def _conv2_gather(batch, in_h, in_w, out_h, out_w, k, s):
    """0/1 gather matrices G[kh*k+kw]: (out_h*out_w*batch, batch*in_h*in_w).

    Output rows are SPATIAL-MAJOR, batch-minor (r = (oh*out_w+ow)*batch + b) so
    that conv3 (1x1 output) can read each tap as a contiguous row slice.
    Block-structured over batch (O(B^2) bytes) -- fine at demo B; see the
    scaling TODO at the top of the file."""
    g = np.zeros((k * k, out_h * out_w * batch, batch * in_h * in_w), np.float32)
    for b in range(batch):
        for oh in range(out_h):
            for ow in range(out_w):
                r = (oh * out_w + ow) * batch + b
                for kh in range(k):
                    for kw in range(k):
                        col = b * in_h * in_w + (oh * s + kh) * in_w + (ow * s + kw)
                        g[kh * k + kw, r, col] = 1.0
    return g


def pack_params(params, state_shape, n_actions, batch, head_width=HEAD_W):
    """Repack PyTorch-layout params ONCE (outside jit) into kernel layout:
    bf16 pre-transposed weights, 1/255 folded into conv1, per-tap conv2/conv3
    weights + constant gather matrices, fused residual/head weights, and a
    single consolidated f32 bias/mask slab."""
    c, w, h = state_shape
    o1a, o1b = conv_shape(w, 8, 4), conv_shape(h, 8, 4)
    o2a, o2b = conv_shape(o1a, 4, 2), conv_shape(o1b, 4, 2)
    o3a, o3b = conv_shape(o2a, 3, 1), conv_shape(o2b, 3, 1)
    assert o3a == 1 and o3b == 1, "kernel assumes conv3 output spatial == 1x1"
    assert 2 + n_actions <= head_width

    A = n_actions
    feat = params["fc2_w"].shape[0]                  # 448
    bf16 = jnp.bfloat16

    def np32(x):
        return np.asarray(x, np.float32)

    # conv1: im2col weight, 1/255 input scale folded in.  (Cin*64, 32)
    w1 = np32(params["conv1_w"]).reshape(params["conv1_w"].shape[0], -1).T * (1.0 / 255.0)

    # conv2: per-tap (32,64) weights concatenated along N -> (32, 16*64) so the
    # conv2 compute is ONE lane-dense matmul followed by 16 gathers.
    w2c = np32(params["conv2_w"])
    w2cat = np.concatenate(
        [w2c[:, :, kh, kw].T for kh in range(4) for kw in range(4)], axis=1)

    # conv3: per-tap (64,64) weights; conv3 is a plain FC (1x1 output).
    w3c = np32(params["conv3_w"])
    w3 = np.stack([w3c[:, :, kh, kw].T for kh in range(3) for kw in range(3)], axis=0)

    # fused extra_value_fc | extra_policy_fc  -> (448, 896)
    wevp = np.concatenate([np32(params["extra_value_w"]).T,
                           np32(params["extra_policy_w"]).T], axis=1)

    # fused value/policy head acting on [x_v | x_pi]  -> (896, 128)
    whead = np.zeros((2 * feat, head_width), np.float32)
    whead[0:feat, 0:1] = np32(params["int_value_w"]).T
    whead[0:feat, 1:2] = np32(params["ext_value_w"]).T
    whead[feat:, 2:2 + A] = np32(params["policy_w"]).T

    # consolidated bias / mask slab (single f32 VMEM ref, sliced in-kernel)
    bias = np.zeros((9, 2 * feat), np.float32)
    bias[_B1, :32] = np32(params["conv1_b"])
    bias[_B2, :64] = np32(params["conv2_b"])
    bias[_B3, :64] = np32(params["conv3_b"])
    bias[_BF1, :256] = np32(params["fc1_b"])
    bias[_BF2, :448] = np32(params["fc2_b"])
    bias[_BEVP, :feat] = np32(params["extra_value_b"])
    bias[_BEVP, feat:2 * feat] = np32(params["extra_policy_b"])
    bias[_BHEAD, 0] = float(params["int_value_b"][0])
    bias[_BHEAD, 1] = float(params["ext_value_b"][0])
    bias[_BHEAD, 2:2 + A] = np32(params["policy_b"])
    bias[_VMASK, 0:2] = 1.0
    bias[_PBIAS, :head_width] = -1e30        # finite pad bias (NOT -inf)
    bias[_PBIAS, 2:2 + A] = 0.0

    g2 = _conv2_gather(batch, o1a, o1b, o2a, o2b, 4, 2)

    return {
        "w1": jnp.asarray(w1, bf16),
        "w2": jnp.asarray(w2cat, bf16),
        "g2": jnp.asarray(g2, bf16),             # 0/1 values: exact in bf16
        "w3": jnp.asarray(w3, bf16),
        "wf1": jnp.asarray(np32(params["fc1_w"]).T, bf16),
        "wf2": jnp.asarray(np32(params["fc2_w"]).T, bf16),
        "wevp": jnp.asarray(wevp, bf16),
        "whead": jnp.asarray(whead, bf16),
        "bias": jnp.asarray(bias, jnp.float32),
    }


# ------------------------------ parameter init -------------------------------

def _orthogonal(key, shape, gain):
    """Deterministic orthogonal init matching torch.nn.init.orthogonal_ semantics."""
    rows = shape[0]
    cols = int(math.prod(shape[1:]))
    a = jax.random.normal(key, (rows, cols), dtype=jnp.float32)
    if rows < cols:
        a = a.T
    q, r = jnp.linalg.qr(a)
    q = q * jnp.sign(jnp.diag(r))
    if rows < cols:
        q = q.T
    return (gain * q).reshape(shape).astype(jnp.float32)


def init_params(key, state_shape, n_actions):
    c, w, h = state_shape
    c1w, c1h = conv_shape(w, 8, 4), conv_shape(h, 8, 4)
    c2w, c2h = conv_shape(c1w, 4, 2), conv_shape(c1h, 4, 2)
    c3w, c3h = conv_shape(c2w, 3, 1), conv_shape(c2h, 3, 1)
    flatten = c3w * c3h * 64

    ks = jax.random.split(key, 10)
    g2 = math.sqrt(2.0)
    g01 = math.sqrt(0.1)
    g001 = math.sqrt(0.01)
    z = lambda n: jnp.zeros((n,), jnp.float32)
    return {
        "conv1_w": _orthogonal(ks[0], (32, c, 8, 8), g2),   "conv1_b": z(32),
        "conv2_w": _orthogonal(ks[1], (64, 32, 4, 4), g2),  "conv2_b": z(64),
        "conv3_w": _orthogonal(ks[2], (64, 64, 3, 3), g2),  "conv3_b": z(64),
        "fc1_w": _orthogonal(ks[3], (256, flatten), g2),    "fc1_b": z(256),
        "fc2_w": _orthogonal(ks[4], (448, 256), g2),        "fc2_b": z(448),
        "extra_value_w": _orthogonal(ks[5], (448, 448), g01),   "extra_value_b": z(448),
        "extra_policy_w": _orthogonal(ks[6], (448, 448), g01),  "extra_policy_b": z(448),
        "policy_w": _orthogonal(ks[7], (n_actions, 448), g001), "policy_b": z(n_actions),
        "int_value_w": _orthogonal(ks[8], (1, 448), g001),  "int_value_b": z(1),
        "ext_value_w": _orthogonal(ks[9], (1, 448), g001),  "ext_value_b": z(1),
    }


# ------------------------------ pure-JAX reference ---------------------------

def reference_forward(params, inputs):
    """Straight port of PolicyModel.forward in plain JAX (correctness check)."""
    dn = ("NCHW", "OIHW", "NCHW")
    hp = jax.lax.Precision.HIGHEST

    def conv(x, w_, b_, s):
        y = jax.lax.conv_general_dilated(x, w_, (s, s), "VALID",
                                         dimension_numbers=dn, precision=hp)
        return jax.nn.relu(y + b_[None, :, None, None])

    def lin(x, w_, b_):
        return jnp.dot(x, w_.T, precision=hp) + b_

    x = inputs / 255.0
    x = conv(x, params["conv1_w"], params["conv1_b"], 4)
    x = conv(x, params["conv2_w"], params["conv2_b"], 2)
    x = conv(x, params["conv3_w"], params["conv3_b"], 1)
    x = x.reshape(x.shape[0], -1)
    x = jax.nn.relu(lin(x, params["fc1_w"], params["fc1_b"]))
    x = jax.nn.relu(lin(x, params["fc2_w"], params["fc2_b"]))
    x_v = x + jax.nn.relu(lin(x, params["extra_value_w"], params["extra_value_b"]))
    x_pi = x + jax.nn.relu(lin(x, params["extra_policy_w"], params["extra_policy_b"]))
    iv = lin(x_v, params["int_value_w"], params["int_value_b"])
    ev = lin(x_v, params["ext_value_w"], params["ext_value_b"])
    logits = lin(x_pi, params["policy_w"], params["policy_b"])
    return iv, ev, jax.nn.softmax(logits, axis=1)


# ----------------------------------- main ------------------------------------

if __name__ == "__main__":
    key = jax.random.PRNGKey(0)
    k_param, k_input = jax.random.split(key)

    batch = 2
    state_shape = (4, 36, 36)   # (c, w, h): 36 -> conv1 8 -> conv2 3 -> conv3 1
    n_actions = 6

    params = init_params(k_param, state_shape, n_actions)
    packed = pack_params(params, state_shape, n_actions, batch)

    inputs = jax.random.uniform(k_input, (batch,) + state_shape,
                                dtype=jnp.float32, minval=0.0, maxval=255.0)

    fwd = jax.jit(policy_forward)
    head = fwd(packed, inputs)                 # packed (B, 128) head slab
    jax.block_until_ready(head)

    # slice the slab in the consumer (keeps the jitted graph slice-free)
    int_value = head[:, 0:1]
    ext_value = head[:, 1:2]
    probs = head[:, 2:2 + n_actions]

    assert head.shape == (batch, HEAD_W)
    assert int_value.shape == (batch, 1)
    assert ext_value.shape == (batch, 1)
    assert probs.shape == (batch, n_actions)
    assert bool(jnp.all(jnp.isfinite(head)))
    assert bool(jnp.allclose(jnp.sum(probs, axis=1), 1.0, atol=5e-3))

    # Cross-check against the pure-JAX reference (tolerances account for bf16
    # weights/activations on the MXU path + approx reciprocal in the softmax).
    iv_ref, ev_ref, probs_ref = reference_forward(params, inputs)
    assert bool(jnp.allclose(int_value, iv_ref, atol=3e-2, rtol=5e-2))
    assert bool(jnp.allclose(ext_value, ev_ref, atol=3e-2, rtol=5e-2))
    assert bool(jnp.allclose(probs, probs_ref, atol=3e-2, rtol=5e-2))

    # TODO(synk): torch.distributions.Categorical (`dist`) has no Pallas/JAX
    # object equivalent; `probs` fully determines it and is returned instead.
    print("KERNEL_OK")
</pallas_src>

<mosaic_0001>
module attributes {stable_mosaic.version = 11 : i64} {
  func.func @_policy_fused_kernel(%arg0: memref<128x256xbf16, #tpu.memory_space<vmem>>, %arg1: memref<256x32xbf16, #tpu.memory_space<vmem>>, %arg2: memref<32x1024xbf16, #tpu.memory_space<vmem>>, %arg3: memref<16x18x128xbf16, #tpu.memory_space<vmem>>, %arg4: memref<9x64x64xbf16, #tpu.memory_space<vmem>>, %arg5: memref<64x256xbf16, #tpu.memory_space<vmem>>, %arg6: memref<256x448xbf16, #tpu.memory_space<vmem>>, %arg7: memref<448x896xbf16, #tpu.memory_space<vmem>>, %arg8: memref<896x128xbf16, #tpu.memory_space<vmem>>, %arg9: memref<9x896xf32, #tpu.memory_space<vmem>>, %arg10: memref<2x128xf32, #tpu.memory_space<vmem>>) attributes {dimension_semantics = [], scalar_prefetch = 0 : i64, scratch_operands = 0 : i64, tpu.core_type = #tpu.core_type<tc>} {
    %c0 = arith.constant 0 : index
    %c0_0 = arith.constant 0 : index
    %0 = vector.load %arg9[%c0, %c0_0] : memref<9x896xf32, #tpu.memory_space<vmem>>, vector<1x32xf32>
    %c1 = arith.constant 1 : index
    %c0_1 = arith.constant 0 : index
    %1 = vector.load %arg9[%c1, %c0_1] : memref<9x896xf32, #tpu.memory_space<vmem>>, vector<1x64xf32>
    %c2 = arith.constant 2 : index
    %c0_2 = arith.constant 0 : index
    %2 = vector.load %arg9[%c2, %c0_2] : memref<9x896xf32, #tpu.memory_space<vmem>>, vector<1x64xf32>
    %c3 = arith.constant 3 : index
    %c0_3 = arith.constant 0 : index
    %3 = vector.load %arg9[%c3, %c0_3] : memref<9x896xf32, #tpu.memory_space<vmem>>, vector<1x256xf32>
    %c4 = arith.constant 4 : index
    %c0_4 = arith.constant 0 : index
    %4 = vector.load %arg9[%c4, %c0_4] : memref<9x896xf32, #tpu.memory_space<vmem>>, vector<1x448xf32>
    %c5 = arith.constant 5 : index
    %c0_5 = arith.constant 0 : index
    %5 = vector.load %arg9[%c5, %c0_5] : memref<9x896xf32, #tpu.memory_space<vmem>>, vector<1x896xf32>
    %c6 = arith.constant 6 : index
    %c0_6 = arith.constant 0 : index
    %6 = vector.load %arg9[%c6, %c0_6] : memref<9x896xf32, #tpu.memory_space<vmem>>, vector<1x128xf32>
    %c7 = arith.constant 7 : index
    %c0_7 = arith.constant 0 : index
    %7 = vector.load %arg9[%c7, %c0_7] : memref<9x896xf32, #tpu.memory_space<vmem>>, vector<1x128xf32>
    %c8 = arith.constant 8 : index
    %c0_8 = arith.constant 0 : index
    %8 = vector.load %arg9[%c8, %c0_8] : memref<9x896xf32, #tpu.memory_space<vmem>>, vector<1x128xf32>
    %c0_9 = arith.constant 0 : index
    %c0_10 = arith.constant 0 : index
    %9 = vector.load %arg0[%c0_9, %c0_10] : memref<128x256xbf16, #tpu.memory_space<vmem>>, vector<128x256xbf16>
    %c0_11 = arith.constant 0 : index
    %c0_12 = arith.constant 0 : index
    %10 = vector.load %arg1[%c0_11, %c0_12] : memref<256x32xbf16, #tpu.memory_space<vmem>>, vector<256x32xbf16>
    %cst = arith.constant dense<0.000000e+00> : vector<128x32xf32>
    %11 = tpu.matmul %9, %10, %cst {dimension_numbers = #tpu.dot_dimension_numbers<[1], [0], [0], [1], [0, 0, 1, 1], [], []>} : vector<128x256xbf16>, vector<256x32xbf16>, vector<128x32xf32> -> vector<128x32xf32>
    %12 = vector.broadcast %0 : vector<1x32xf32> to vector<128x32xf32>
    %13 = arith.addf %11, %12 : vector<128x32xf32>
    %cst_13 = arith.constant 0.000000e+00 : f32
    %14 = vector.broadcast %cst_13 : f32 to vector<128x32xf32>
    %15 = arith.maximumf %13, %14 : vector<128x32xf32>
    %c0_14 = arith.constant 0 : index
    %c0_15 = arith.constant 0 : index
    %16 = vector.load %arg2[%c0_14, %c0_15] : memref<32x1024xbf16, #tpu.memory_space<vmem>>, vector<32x1024xbf16>
    %17 = arith.truncf %15 : vector<128x32xf32> to vector<128x32xbf16>
    %cst_16 = arith.constant dense<0.000000e+00> : vector<128x1024xf32>
    %18 = tpu.matmul %17, %16, %cst_16 {dimension_numbers = #tpu.dot_dimension_numbers<[1], [0], [0], [1], [0, 0, 1, 1], [], []>} : vector<128x32xbf16>, vector<32x1024xbf16>, vector<128x1024xf32> -> vector<128x1024xf32>
    %19 = arith.truncf %18 : vector<128x1024xf32> to vector<128x1024xbf16>
    %cst_17 = arith.constant 0.000000e+00 : f32
    %20 = vector.broadcast %cst_17 : f32 to vector<18x64xf32>
    %cst_18 = arith.constant 0.000000e+00 : f32
    %21 = vector.broadcast %cst_18 : f32 to vector<18x64xf32>
    %cst_19 = arith.constant 0.000000e+00 : f32
    %22 = vector.broadcast %cst_19 : f32 to vector<18x64xf32>
    %cst_20 = arith.constant 0.000000e+00 : f32
    %23 = vector.broadcast %cst_20 : f32 to vector<18x64xf32>
    %c0_21 = arith.constant 0 : index
    %c0_22 = arith.constant 0 : index
    %c0_23 = arith.constant 0 : index
    %24 = vector.load %arg3[%c0_21, %c0_22, %c0_23] : memref<16x18x128xbf16, #tpu.memory_space<vmem>>, vector<1x18x128xbf16>
    %25 = vector.shape_cast %24 : vector<1x18x128xbf16> to vector<18x128xbf16>
    %26 = vector.extract_strided_slice %19 {offsets = [0, 0], sizes = [128, 64], strides = [1, 1]} : vector<128x1024xbf16> to vector<128x64xbf16>
    %cst_24 = arith.constant dense<0.000000e+00> : vector<18x64xf32>
    %27 = tpu.matmul %25, %26, %cst_24 {dimension_numbers = #tpu.dot_dimension_numbers<[1], [0], [0], [1], [0, 0, 1, 1], [], []>} : vector<18x128xbf16>, vector<128x64xbf16>, vector<18x64xf32> -> vector<18x64xf32>
    %28 = arith.addf %20, %27 : vector<18x64xf32>
    %c1_25 = arith.constant 1 : index
    %c0_26 = arith.constant 0 : index
    %c0_27 = arith.constant 0 : index
    %29 = vector.load %arg3[%c1_25, %c0_26, %c0_27] : memref<16x18x128xbf16, #tpu.memory_space<vmem>>, vector<1x18x128xbf16>
    %30 = vector.shape_cast %29 : vector<1x18x128xbf16> to vector<18x128xbf16>
    %31 = vector.extract_strided_slice %19 {offsets = [0, 64], sizes = [128, 64], strides = [1, 1]} : vector<128x1024xbf16> to vector<128x64xbf16>
    %cst_28 = arith.constant dense<0.000000e+00> : vector<18x64xf32>
    %32 = tpu.matmul %30, %31, %cst_28 {dimension_numbers = #tpu.dot_dimension_numbers<[1], [0], [0], [1], [0, 0, 1, 1], [], []>} : vector<18x128xbf16>, vector<128x64xbf16>, vector<18x64xf32> -> vector<18x64xf32>
    %33 = arith.addf %21, %32 : vector<18x64xf32>
    %c2_29 = arith.constant 2 : index
    %c0_30 = arith.constant 0 : index
    %c0_31 = arith.constant 0 : index
    %34 = vector.load %arg3[%c2_29, %c0_30, %c0_31] : memref<16x18x128xbf16, #tpu.memory_space<vmem>>, vector<1x18x128xbf16>
    %35 = vector.shape_cast %34 : vector<1x18x128xbf16> to vector<18x128xbf16>
    %36 = vector.extract_strided_slice %19 {offsets = [0, 128], sizes = [128, 64], strides = [1, 1]} : vector<128x1024xbf16> to vector<128x64xbf16>
    %cst_32 = arith.constant dense<0.000000e+00> : vector<18x64xf32>
    %37 = tpu.matmul %35, %36, %cst_32 {dimension_numbers = #tpu.dot_dimension_numbers<[1], [0], [0], [1], [0, 0, 1, 1], [], []>} : vector<18x128xbf16>, vector<128x64xbf16>, vector<18x64xf32> -> vector<18x64xf32>
    %38 = arith.addf %22, %37 : vector<18x64xf32>
    %c3_33 = arith.constant 3 : index
    %c0_34 = arith.constant 0 : index
    %c0_35 = arith.constant 0 : index
    %39 = vector.load %arg3[%c3_33, %c0_34, %c0_35] : memref<16x18x128xbf16, #tpu.memory_space<vmem>>, vector<1x18x128xbf16>
    %40 = vector.shape_cast %39 : vector<1x18x128xbf16> to vector<18x128xbf16>
    %41 = vector.extract_strided_slice %19 {offsets = [0, 192], sizes = [128, 64], strides = [1, 1]} : vector<128x1024xbf16> to vector<128x64xbf16>
    %cst_36 = arith.constant dense<0.000000e+00> : vector<18x64xf32>
    %42 = tpu.matmul %40, %41, %cst_36 {dimension_numbers = #tpu.dot_dimension_numbers<[1], [0], [0], [1], [0, 0, 1, 1], [], []>} : vector<18x128xbf16>, vector<128x64xbf16>, vector<18x64xf32> -> vector<18x64xf32>
    %43 = arith.addf %23, %42 : vector<18x64xf32>
    %c4_37 = arith.constant 4 : index
    %c0_38 = arith.constant 0 : index
    %c0_39 = arith.constant 0 : index
    %44 = vector.load %arg3[%c4_37, %c0_38, %c0_39] : memref<16x18x128xbf16, #tpu.memory_space<vmem>>, vector<1x18x128xbf16>
    %45 = vector.shape_cast %44 : vector<1x18x128xbf16> to vector<18x128xbf16>
    %46 = vector.extract_strided_slice %19 {offsets = [0, 256], sizes = [128, 64], strides = [1, 1]} : vector<128x1024xbf16> to vector<128x64xbf16>
    %cst_40 = arith.constant dense<0.000000e+00> : vector<18x64xf32>
    %47 = tpu.matmul %45, %46, %cst_40 {dimension_numbers = #tpu.dot_dimension_numbers<[1], [0], [0], [1], [0, 0, 1, 1], [], []>} : vector<18x128xbf16>, vector<128x64xbf16>, vector<18x64xf32> -> vector<18x64xf32>
    %48 = arith.addf %28, %47 : vector<18x64xf32>
    %c5_41 = arith.constant 5 : index
    %c0_42 = arith.constant 0 : index
    %c0_43 = arith.constant 0 : index
    %49 = vector.load %arg3[%c5_41, %c0_42, %c0_43] : memref<16x18x128xbf16, #tpu.memory_space<vmem>>, vector<1x18x128xbf16>
    %50 = vector.shape_cast %49 : vector<1x18x128xbf16> to vector<18x128xbf16>
    %51 = vector.extract_strided_slice %19 {offsets = [0, 320], sizes = [128, 64], strides = [1, 1]} : vector<128x1024xbf16> to vector<128x64xbf16>
    %cst_44 = arith.constant dense<0.000000e+00> : vector<18x64xf32>
    %52 = tpu.matmul %50, %51, %cst_44 {dimension_numbers = #tpu.dot_dimension_numbers<[1], [0], [0], [1], [0, 0, 1, 1], [], []>} : vector<18x128xbf16>, vector<128x64xbf16>, vector<18x64xf32> -> vector<18x64xf32>
    %53 = arith.addf %33, %52 : vector<18x64xf32>
    %c6_45 = arith.constant 6 : index
    %c0_46 = arith.constant 0 : index
    %c0_47 = arith.constant 0 : index
    %54 = vector.load %arg3[%c6_45, %c0_46, %c0_47] : memref<16x18x128xbf16, #tpu.memory_space<vmem>>, vector<1x18x128xbf16>
    %55 = vector.shape_cast %54 : vector<1x18x128xbf16> to vector<18x128xbf16>
    %56 = vector.extract_strided_slice %19 {offsets = [0, 384], sizes = [128, 64], strides = [1, 1]} : vector<128x1024xbf16> to vector<128x64xbf16>
    %cst_48 = arith.constant dense<0.000000e+00> : vector<18x64xf32>
    %57 = tpu.matmul %55, %56, %cst_48 {dimension_numbers = #tpu.dot_dimension_numbers<[1], [0], [0], [1], [0, 0, 1, 1], [], []>} : vector<18x128xbf16>, vector<128x64xbf16>, vector<18x64xf32> -> vector<18x64xf32>
    %58 = arith.addf %38, %57 : vector<18x64xf32>
    %c7_49 = arith.constant 7 : index
    %c0_50 = arith.constant 0 : index
    %c0_51 = arith.constant 0 : index
    %59 = vector.load %arg3[%c7_49, %c0_50, %c0_51] : memref<16x18x128xbf16, #tpu.memory_space<vmem>>, vector<1x18x128xbf16>
    %60 = vector.shape_cast %59 : vector<1x18x128xbf16> to vector<18x128xbf16>
    %61 = vector.extract_strided_slice %19 {offsets = [0, 448], sizes = [128, 64], strides = [1, 1]} : vector<128x1024xbf16> to vector<128x64xbf16>
    %cst_52 = arith.constant dense<0.000000e+00> : vector<18x64xf32>
    %62 = tpu.matmul %60, %61, %cst_52 {dimension_numbers = #tpu.dot_dimension_numbers<[1], [0], [0], [1], [0, 0, 1, 1], [], []>} : vector<18x128xbf16>, vector<128x64xbf16>, vector<18x64xf32> -> vector<18x64xf32>
    %63 = arith.addf %43, %62 : vector<18x64xf32>
    %c8_53 = arith.constant 8 : index
    %c0_54 = arith.constant 0 : index
    %c0_55 = arith.constant 0 : index
    %64 = vector.load %arg3[%c8_53, %c0_54, %c0_55] : memref<16x18x128xbf16, #tpu.memory_space<vmem>>, vector<1x18x128xbf16>
    %65 = vector.shape_cast %64 : vector<1x18x128xbf16> to vector<18x128xbf16>
    %66 = vector.extract_strided_slice %19 {offsets = [0, 512], sizes = [128, 64], strides = [1, 1]} : vector<128x1024xbf16> to vector<128x64xbf16>
    %cst_56 = arith.constant dense<0.000000e+00> : vector<18x64xf32>
    %67 = tpu.matmul %65, %66, %cst_56 {dimension_numbers = #tpu.dot_dimension_numbers<[1], [0], [0], [1], [0, 0, 1, 1], [], []>} : vector<18x128xbf16>, vector<128x64xbf16>, vector<18x64xf32> -> vector<18x64xf32>
    %68 = arith.addf %48, %67 : vector<18x64xf32>
    %c9 = arith.constant 9 : index
    %c0_57 = arith.constant 0 : index
    %c0_58 = arith.constant 0 : index
    %69 = vector.load %arg3[%c9, %c0_57, %c0_58] : memref<16x18x128xbf16, #tpu.memory_space<vmem>>, vector<1x18x128xbf16>
    %70 = vector.shape_cast %69 : vector<1x18x128xbf16> to vector<18x128xbf16>
    %71 = vector.extract_strided_slice %19 {offsets = [0, 576], sizes = [128, 64], strides = [1, 1]} : vector<128x1024xbf16> to vector<128x64xbf16>
    %cst_59 = arith.constant dense<0.000000e+00> : vector<18x64xf32>
    %72 = tpu.matmul %70, %71, %cst_59 {dimension_numbers = #tpu.dot_dimension_numbers<[1], [0], [0], [1], [0, 0, 1, 1], [], []>} : vector<18x128xbf16>, vector<128x64xbf16>, vector<18x64xf32> -> vector<18x64xf32>
    %73 = arith.addf %53, %72 : vector<18x64xf32>
    %c10 = arith.constant 10 : index
    %c0_60 = arith.constant 0 : index
    %c0_61 = arith.constant 0 : index
    %74 = vector.load %arg3[%c10, %c0_60, %c0_61] : memref<16x18x128xbf16, #tpu.memory_space<vmem>>, vector<1x18x128xbf16>
    %75 = vector.shape_cast %74 : vector<1x18x128xbf16> to vector<18x128xbf16>
    %76 = vector.extract_strided_slice %19 {offsets = [0, 640], sizes = [128, 64], strides = [1, 1]} : vector<128x1024xbf16> to vector<128x64xbf16>
    %cst_62 = arith.constant dense<0.000000e+00> : vector<18x64xf32>
    %77 = tpu.matmul %75, %76, %cst_62 {dimension_numbers = #tpu.dot_dimension_numbers<[1], [0], [0], [1], [0, 0, 1, 1], [], []>} : vector<18x128xbf16>, vector<128x64xbf16>, vector<18x64xf32> -> vector<18x64xf32>
    %78 = arith.addf %58, %77 : vector<18x64xf32>
    %c11 = arith.constant 11 : index
    %c0_63 = arith.constant 0 : index
    %c0_64 = arith.constant 0 : index
    %79 = vector.load %arg3[%c11, %c0_63, %c0_64] : memref<16x18x128xbf16, #tpu.memory_space<vmem>>, vector<1x18x128xbf16>
    %80 = vector.shape_cast %79 : vector<1x18x128xbf16> to vector<18x128xbf16>
    %81 = vector.extract_strided_slice %19 {offsets = [0, 704], sizes = [128, 64], strides = [1, 1]} : vector<128x1024xbf16> to vector<128x64xbf16>
    %cst_65 = arith.constant dense<0.000000e+00> : vector<18x64xf32>
    %82 = tpu.matmul %80, %81, %cst_65 {dimension_numbers = #tpu.dot_dimension_numbers<[1], [0], [0], [1], [0, 0, 1, 1], [], []>} : vector<18x128xbf16>, vector<128x64xbf16>, vector<18x64xf32> -> vector<18x64xf32>
    %83 = arith.addf %63, %82 : vector<18x64xf32>
    %c12 = arith.constant 12 : index
    %c0_66 = arith.constant 0 : index
    %c0_67 = arith.constant 0 : index
    %84 = vector.load %arg3[%c12, %c0_66, %c0_67] : memref<16x18x128xbf16, #tpu.memory_space<vmem>>, vector<1x18x128xbf16>
    %85 = vector.shape_cast %84 : vector<1x18x128xbf16> to vector<18x128xbf16>
    %86 = vector.extract_strided_slice %19 {offsets = [0, 768], sizes = [128, 64], strides = [1, 1]} : vector<128x1024xbf16> to vector<128x64xbf16>
    %cst_68 = arith.constant dense<0.000000e+00> : vector<18x64xf32>
    %87 = tpu.matmul %85, %86, %cst_68 {dimension_numbers = #tpu.dot_dimension_numbers<[1], [0], [0], [1], [0, 0, 1, 1], [], []>} : vector<18x128xbf16>, vector<128x64xbf16>, vector<18x64xf32> -> vector<18x64xf32>
    %88 = arith.addf %68, %87 : vector<18x64xf32>
    %c13 = arith.constant 13 : index
    %c0_69 = arith.constant 0 : index
    %c0_70 = arith.constant 0 : index
    %89 = vector.load %arg3[%c13, %c0_69, %c0_70] : memref<16x18x128xbf16, #tpu.memory_space<vmem>>, vector<1x18x128xbf16>
    %90 = vector.shape_cast %89 : vector<1x18x128xbf16> to vector<18x128xbf16>
    %91 = vector.extract_strided_slice %19 {offsets = [0, 832], sizes = [128, 64], strides = [1, 1]} : vector<128x1024xbf16> to vector<128x64xbf16>
    %cst_71 = arith.constant dense<0.000000e+00> : vector<18x64xf32>
    %92 = tpu.matmul %90, %91, %cst_71 {dimension_numbers = #tpu.dot_dimension_numbers<[1], [0], [0], [1], [0, 0, 1, 1], [], []>} : vector<18x128xbf16>, vector<128x64xbf16>, vector<18x64xf32> -> vector<18x64xf32>
    %93 = arith.addf %73, %92 : vector<18x64xf32>
    %c14 = arith.constant 14 : index
    %c0_72 = arith.constant 0 : index
    %c0_73 = arith.constant 0 : index
    %94 = vector.load %arg3[%c14, %c0_72, %c0_73] : memref<16x18x128xbf16, #tpu.memory_space<vmem>>, vector<1x18x128xbf16>
    %95 = vector.shape_cast %94 : vector<1x18x128xbf16> to vector<18x128xbf16>
    %96 = vector.extract_strided_slice %19 {offsets = [0, 896], sizes = [128, 64], strides = [1, 1]} : vector<128x1024xbf16> to vector<128x64xbf16>
    %cst_74 = arith.constant dense<0.000000e+00> : vector<18x64xf32>
    %97 = tpu.matmul %95, %96, %cst_74 {dimension_numbers = #tpu.dot_dimension_numbers<[1], [0], [0], [1], [0, 0, 1, 1], [], []>} : vector<18x128xbf16>, vector<128x64xbf16>, vector<18x64xf32> -> vector<18x64xf32>
    %98 = arith.addf %78, %97 : vector<18x64xf32>
    %c15 = arith.constant 15 : index
    %c0_75 = arith.constant 0 : index
    %c0_76 = arith.constant 0 : index
    %99 = vector.load %arg3[%c15, %c0_75, %c0_76] : memref<16x18x128xbf16, #tpu.memory_space<vmem>>, vector<1x18x128xbf16>
    %100 = vector.shape_cast %99 : vector<1x18x128xbf16> to vector<18x128xbf16>
    %101 = vector.extract_strided_slice %19 {offsets = [0, 960], sizes = [128, 64], strides = [1, 1]} : vector<128x1024xbf16> to vector<128x64xbf16>
    %cst_77 = arith.constant dense<0.000000e+00> : vector<18x64xf32>
    %102 = tpu.matmul %100, %101, %cst_77 {dimension_numbers = #tpu.dot_dimension_numbers<[1], [0], [0], [1], [0, 0, 1, 1], [], []>} : vector<18x128xbf16>, vector<128x64xbf16>, vector<18x64xf32> -> vector<18x64xf32>
    %103 = arith.addf %83, %102 : vector<18x64xf32>
    %104 = arith.addf %88, %93 : vector<18x64xf32>
    %105 = arith.addf %98, %103 : vector<18x64xf32>
    %106 = arith.addf %104, %105 : vector<18x64xf32>
    %107 = vector.broadcast %1 : vector<1x64xf32> to vector<18x64xf32>
    %108 = arith.addf %106, %107 : vector<18x64xf32>
    %cst_78 = arith.constant 0.000000e+00 : f32
    %109 = vector.broadcast %cst_78 : f32 to vector<18x64xf32>
    %110 = arith.maximumf %108, %109 : vector<18x64xf32>
    %cst_79 = arith.constant 0.000000e+00 : f32
    %111 = vector.broadcast %cst_79 : f32 to vector<2x64xf32>
    %cst_80 = arith.constant 0.000000e+00 : f32
    %112 = vector.broadcast %cst_80 : f32 to vector<2x64xf32>
    %cst_81 = arith.constant 0.000000e+00 : f32
    %113 = vector.broadcast %cst_81 : f32 to vector<2x64xf32>
    %114 = vector.extract_strided_slice %110 {offsets = [0, 0], sizes = [2, 64], strides = [1, 1]} : vector<18x64xf32> to vector<2x64xf32>
    %c0_82 = arith.constant 0 : index
    %c0_83 = arith.constant 0 : index
    %c0_84 = arith.constant 0 : index
    %115 = vector.load %arg4[%c0_82, %c0_83, %c0_84] : memref<9x64x64xbf16, #tpu.memory_space<vmem>>, vector<1x64x64xbf16>
    %116 = vector.shape_cast %115 : vector<1x64x64xbf16> to vector<64x64xbf16>
    %117 = arith.truncf %114 : vector<2x64xf32> to vector<2x64xbf16>
    %cst_85 = arith.constant dense<0.000000e+00> : vector<2x64xf32>
    %118 = tpu.matmul %117, %116, %cst_85 {dimension_numbers = #tpu.dot_dimension_numbers<[1], [0], [0], [1], [0, 0, 1, 1], [], []>} : vector<2x64xbf16>, vector<64x64xbf16>, vector<2x64xf32> -> vector<2x64xf32>
    %119 = arith.addf %111, %118 : vector<2x64xf32>
    %120 = vector.extract_strided_slice %110 {offsets = [2, 0], sizes = [2, 64], strides = [1, 1]} : vector<18x64xf32> to vector<2x64xf32>
    %c1_86 = arith.constant 1 : index
    %c0_87 = arith.constant 0 : index
    %c0_88 = arith.constant 0 : index
    %121 = vector.load %arg4[%c1_86, %c0_87, %c0_88] : memref<9x64x64xbf16, #tpu.memory_space<vmem>>, vector<1x64x64xbf16>
    %122 = vector.shape_cast %121 : vector<1x64x64xbf16> to vector<64x64xbf16>
    %123 = arith.truncf %120 : vector<2x64xf32> to vector<2x64xbf16>
    %cst_89 = arith.constant dense<0.000000e+00> : vector<2x64xf32>
    %124 = tpu.matmul %123, %122, %cst_89 {dimension_numbers = #tpu.dot_dimension_numbers<[1], [0], [0], [1], [0, 0, 1, 1], [], []>} : vector<2x64xbf16>, vector<64x64xbf16>, vector<2x64xf32> -> vector<2x64xf32>
    %125 = arith.addf %112, %124 : vector<2x64xf32>
    %126 = vector.extract_strided_slice %110 {offsets = [4, 0], sizes = [2, 64], strides = [1, 1]} : vector<18x64xf32> to vector<2x64xf32>
    %c2_90 = arith.constant 2 : index
    %c0_91 = arith.constant 0 : index
    %c0_92 = arith.constant 0 : index
    %127 = vector.load %arg4[%c2_90, %c0_91, %c0_92] : memref<9x64x64xbf16, #tpu.memory_space<vmem>>, vector<1x64x64xbf16>
    %128 = vector.shape_cast %127 : vector<1x64x64xbf16> to vector<64x64xbf16>
    %129 = arith.truncf %126 : vector<2x64xf32> to vector<2x64xbf16>
    %cst_93 = arith.constant dense<0.000000e+00> : vector<2x64xf32>
    %130 = tpu.matmul %129, %128, %cst_93 {dimension_numbers = #tpu.dot_dimension_numbers<[1], [0], [0], [1], [0, 0, 1, 1], [], []>} : vector<2x64xbf16>, vector<64x64xbf16>, vector<2x64xf32> -> vector<2x64xf32>
    %131 = arith.addf %113, %130 : vector<2x64xf32>
    %132 = vector.extract_strided_slice %110 {offsets = [6, 0], sizes = [2, 64], strides = [1, 1]} : vector<18x64xf32> to vector<2x64xf32>
    %c3_94 = arith.constant 3 : index
    %c0_95 = arith.constant 0 : index
    %c0_96 = arith.constant 0 : index
    %133 = vector.load %arg4[%c3_94, %c0_95, %c0_96] : memref<9x64x64xbf16, #tpu.memory_space<vmem>>, vector<1x64x64xbf16>
    %134 = vector.shape_cast %133 : vector<1x64x64xbf16> to vector<64x64xbf16>
    %135 = arith.truncf %132 : vector<2x64xf32> to vector<2x64xbf16>
    %cst_97 = arith.constant dense<0.000000e+00> : vector<2x64xf32>
    %136 = tpu.matmul %135, %134, %cst_97 {dimension_numbers = #tpu.dot_dimension_numbers<[1], [0], [0], [1], [0, 0, 1, 1], [], []>} : vector<2x64xbf16>, vector<64x64xbf16>, vector<2x64xf32> -> vector<2x64xf32>
    %137 = arith.addf %119, %136 : vector<2x64xf32>
    %138 = vector.extract_strided_slice %110 {offsets = [8, 0], sizes = [2, 64], strides = [1, 1]} : vector<18x64xf32> to vector<2x64xf32>
    %c4_98 = arith.constant 4 : index
    %c0_99 = arith.constant 0 : index
    %c0_100 = arith.constant 0 : index
    %139 = vector.load %arg4[%c4_98, %c0_99, %c0_100] : memref<9x64x64xbf16, #tpu.memory_space<vmem>>, vector<1x64x64xbf16>
    %140 = vector.shape_cast %139 : vector<1x64x64xbf16> to vector<64x64xbf16>
    %141 = arith.truncf %138 : vector<2x64xf32> to vector<2x64xbf16>
    %cst_101 = arith.constant dense<0.000000e+00> : vector<2x64xf32>
    %142 = tpu.matmul %141, %140, %cst_101 {dimension_numbers = #tpu.dot_dimension_numbers<[1], [0], [0], [1], [0, 0, 1, 1], [], []>} : vector<2x64xbf16>, vector<64x64xbf16>, vector<2x64xf32> -> vector<2x64xf32>
    %143 = arith.addf %125, %142 : vector<2x64xf32>
    %144 = vector.extract_strided_slice %110 {offsets = [10, 0], sizes = [2, 64], strides = [1, 1]} : vector<18x64xf32> to vector<2x64xf32>
    %c5_102 = arith.constant 5 : index
    %c0_103 = arith.constant 0 : index
    %c0_104 = arith.constant 0 : index
    %145 = vector.load %arg4[%c5_102, %c0_103, %c0_104] : memref<9x64x64xbf16, #tpu.memory_space<vmem>>, vector<1x64x64xbf16>
    %146 = vector.shape_cast %145 : vector<1x64x64xbf16> to vector<64x64xbf16>
    %147 = arith.truncf %144 : vector<2x64xf32> to vector<2x64xbf16>
    %cst_105 = arith.constant dense<0.000000e+00> : vector<2x64xf32>
    %148 = tpu.matmul %147, %146, %cst_105 {dimension_numbers = #tpu.dot_dimension_numbers<[1], [0], [0], [1], [0, 0, 1, 1], [], []>} : vector<2x64xbf16>, vector<64x64xbf16>, vector<2x64xf32> -> vector<2x64xf32>
    %149 = arith.addf %131, %148 : vector<2x64xf32>
    %150 = vector.extract_strided_slice %110 {offsets = [12, 0], sizes = [2, 64], strides = [1, 1]} : vector<18x64xf32> to vector<2x64xf32>
    %c6_106 = arith.constant 6 : index
    %c0_107 = arith.constant 0 : index
    %c0_108 = arith.constant 0 : index
    %151 = vector.load %arg4[%c6_106, %c0_107, %c0_108] : memref<9x64x64xbf16, #tpu.memory_space<vmem>>, vector<1x64x64xbf16>
    %152 = vector.shape_cast %151 : vector<1x64x64xbf16> to vector<64x64xbf16>
    %153 = arith.truncf %150 : vector<2x64xf32> to vector<2x64xbf16>
    %cst_109 = arith.constant dense<0.000000e+00> : vector<2x64xf32>
    %154 = tpu.matmul %153, %152, %cst_109 {dimension_numbers = #tpu.dot_dimension_numbers<[1], [0], [0], [1], [0, 0, 1, 1], [], []>} : vector<2x64xbf16>, vector<64x64xbf16>, vector<2x64xf32> -> vector<2x64xf32>
    %155 = arith.addf %137, %154 : vector<2x64xf32>
    %156 = vector.extract_strided_slice %110 {offsets = [14, 0], sizes = [2, 64], strides = [1, 1]} : vector<18x64xf32> to vector<2x64xf32>
    %c7_110 = arith.constant 7 : index
    %c0_111 = arith.constant 0 : index
    %c0_112 = arith.constant 0 : index
    %157 = vector.load %arg4[%c7_110, %c0_111, %c0_112] : memref<9x64x64xbf16, #tpu.memory_space<vmem>>, vector<1x64x64xbf16>
    %158 = vector.shape_cast %157 : vector<1x64x64xbf16> to vector<64x64xbf16>
    %159 = arith.truncf %156 : vector<2x64xf32> to vector<2x64xbf16>
    %cst_113 = arith.constant dense<0.000000e+00> : vector<2x64xf32>
    %160 = tpu.matmul %159, %158, %cst_113 {dimension_numbers = #tpu.dot_dimension_numbers<[1], [0], [0], [1], [0, 0, 1, 1], [], []>} : vector<2x64xbf16>, vector<64x64xbf16>, vector<2x64xf32> -> vector<2x64xf32>
    %161 = arith.addf %143, %160 : vector<2x64xf32>
    %162 = vector.extract_strided_slice %110 {offsets = [16, 0], sizes = [2, 64], strides = [1, 1]} : vector<18x64xf32> to vector<2x64xf32>
    %c8_114 = arith.constant 8 : index
    %c0_115 = arith.constant 0 : index
    %c0_116 = arith.constant 0 : index
    %163 = vector.load %arg4[%c8_114, %c0_115, %c0_116] : memref<9x64x64xbf16, #tpu.memory_space<vmem>>, vector<1x64x64xbf16>
    %164 = vector.shape_cast %163 : vector<1x64x64xbf16> to vector<64x64xbf16>
    %165 = arith.truncf %162 : vector<2x64xf32> to vector<2x64xbf16>
    %cst_117 = arith.constant dense<0.000000e+00> : vector<2x64xf32>
    %166 = tpu.matmul %165, %164, %cst_117 {dimension_numbers = #tpu.dot_dimension_numbers<[1], [0], [0], [1], [0, 0, 1, 1], [], []>} : vector<2x64xbf16>, vector<64x64xbf16>, vector<2x64xf32> -> vector<2x64xf32>
    %167 = arith.addf %149, %166 : vector<2x64xf32>
    %168 = arith.addf %155, %161 : vector<2x64xf32>
    %169 = arith.addf %168, %167 : vector<2x64xf32>
    %170 = vector.broadcast %2 : vector<1x64xf32> to vector<2x64xf32>
    %171 = arith.addf %169, %170 : vector<2x64xf32>
    %cst_118 = arith.constant 0.000000e+00 : f32
    %172 = vector.broadcast %cst_118 : f32 to vector<2x64xf32>
    %173 = arith.maximumf %171, %172 : vector<2x64xf32>
    %c0_119 = arith.constant 0 : index
    %c0_120 = arith.constant 0 : index
    %174 = vector.load %arg5[%c0_119, %c0_120] : memref<64x256xbf16, #tpu.memory_space<vmem>>, vector<64x256xbf16>
    %175 = arith.truncf %173 : vector<2x64xf32> to vector<2x64xbf16>
    %cst_121 = arith.constant dense<0.000000e+00> : vector<2x256xf32>
    %176 = tpu.matmul %175, %174, %cst_121 {dimension_numbers = #tpu.dot_dimension_numbers<[1], [0], [0], [1], [0, 0, 1, 1], [], []>} : vector<2x64xbf16>, vector<64x256xbf16>, vector<2x256xf32> -> vector<2x256xf32>
    %177 = vector.broadcast %3 : vector<1x256xf32> to vector<2x256xf32>
    %178 = arith.addf %176, %177 : vector<2x256xf32>
    %cst_122 = arith.constant 0.000000e+00 : f32
    %179 = vector.broadcast %cst_122 : f32 to vector<2x256xf32>
    %180 = arith.maximumf %178, %179 : vector<2x256xf32>
    %c0_123 = arith.constant 0 : index
    %c0_124 = arith.constant 0 : index
    %181 = vector.load %arg6[%c0_123, %c0_124] : memref<256x448xbf16, #tpu.memory_space<vmem>>, vector<256x448xbf16>
    %182 = arith.truncf %180 : vector<2x256xf32> to vector<2x256xbf16>
    %cst_125 = arith.constant dense<0.000000e+00> : vector<2x448xf32>
    %183 = tpu.matmul %182, %181, %cst_125 {dimension_numbers = #tpu.dot_dimension_numbers<[1], [0], [0], [1], [0, 0, 1, 1], [], []>} : vector<2x256xbf16>, vector<256x448xbf16>, vector<2x448xf32> -> vector<2x448xf32>
    %184 = vector.broadcast %4 : vector<1x448xf32> to vector<2x448xf32>
    %185 = arith.addf %183, %184 : vector<2x448xf32>
    %cst_126 = arith.constant 0.000000e+00 : f32
    %186 = vector.broadcast %cst_126 : f32 to vector<2x448xf32>
    %187 = arith.maximumf %185, %186 : vector<2x448xf32>
    %c0_127 = arith.constant 0 : index
    %c0_128 = arith.constant 0 : index
    %188 = vector.load %arg7[%c0_127, %c0_128] : memref<448x896xbf16, #tpu.memory_space<vmem>>, vector<448x896xbf16>
    %189 = arith.truncf %187 : vector<2x448xf32> to vector<2x448xbf16>
    %cst_129 = arith.constant dense<0.000000e+00> : vector<2x896xf32>
    %190 = tpu.matmul %189, %188, %cst_129 {dimension_numbers = #tpu.dot_dimension_numbers<[1], [0], [0], [1], [0, 0, 1, 1], [], []>} : vector<2x448xbf16>, vector<448x896xbf16>, vector<2x896xf32> -> vector<2x896xf32>
    %191 = vector.broadcast %5 : vector<1x896xf32> to vector<2x896xf32>
    %192 = arith.addf %190, %191 : vector<2x896xf32>
    %cst_130 = arith.constant 0.000000e+00 : f32
    %193 = vector.broadcast %cst_130 : f32 to vector<2x896xf32>
    %194 = arith.maximumf %192, %193 : vector<2x896xf32>
    %195 = tpu.concatenate %187, %187 in 1 : vector<2x448xf32>, vector<2x448xf32> -> vector<2x896xf32>
    %196 = arith.addf %195, %194 : vector<2x896xf32>
    %c0_131 = arith.constant 0 : index
    %c0_132 = arith.constant 0 : index
    %197 = vector.load %arg8[%c0_131, %c0_132] : memref<896x128xbf16, #tpu.memory_space<vmem>>, vector<896x128xbf16>
    %198 = arith.truncf %196 : vector<2x896xf32> to vector<2x896xbf16>
    %cst_133 = arith.constant dense<0.000000e+00> : vector<2x128xf32>
    %199 = tpu.matmul %198, %197, %cst_133 {dimension_numbers = #tpu.dot_dimension_numbers<[1], [0], [0], [1], [0, 0, 1, 1], [], []>} : vector<2x896xbf16>, vector<896x128xbf16>, vector<2x128xf32> -> vector<2x128xf32>
    %200 = vector.broadcast %6 : vector<1x128xf32> to vector<2x128xf32>
    %201 = arith.addf %199, %200 : vector<2x128xf32>
    %202 = vector.broadcast %8 : vector<1x128xf32> to vector<2x128xf32>
    %203 = arith.addf %201, %202 : vector<2x128xf32>
    %cst_134 = arith.constant dense<0xFF800000> : vector<2xf32>
    %204 = vector.multi_reduction <maximumf>, %203, %cst_134 [1] : vector<2x128xf32> to vector<2xf32>
    %205 = vector.shape_cast %204 : vector<2xf32> to vector<2x1xf32>
    %206 = vector.broadcast %205 : vector<2x1xf32> to vector<2x128xf32>
    %207 = arith.subf %203, %206 : vector<2x128xf32>
    %208 = math.exp %207 : vector<2x128xf32>
    %cst_135 = arith.constant dense<0.000000e+00> : vector<2xf32>
    %209 = vector.multi_reduction <add>, %208, %cst_135 [1] : vector<2x128xf32> to vector<2xf32>
    %210 = vector.shape_cast %209 : vector<2xf32> to vector<2x1xf32>
    %211 = tpu.reciprocal %210 {approx = true} : vector<2x1xf32> -> vector<2x1xf32>
    %212 = vector.broadcast %211 : vector<2x1xf32> to vector<2x128xf32>
    %213 = arith.mulf %208, %212 : vector<2x128xf32>
    %214 = vector.broadcast %7 : vector<1x128xf32> to vector<2x128xf32>
    %215 = arith.mulf %201, %214 : vector<2x128xf32>
    %216 = arith.addf %215, %213 : vector<2x128xf32>
    %c0_136 = arith.constant 0 : index
    %c0_137 = arith.constant 0 : index
    %217 = vector.load %arg10[%c0_136, %c0_137] : memref<2x128xf32, #tpu.memory_space<vmem>>, vector<2x128xf32>
    tpu.vector_store %arg10[%c0_136, %c0_137], %216 {strides = array<i32>} : memref<2x128xf32, #tpu.memory_space<vmem>>, vector<2x128xf32>,
    return
  }
}

</mosaic_0001>

<llo_original>
// kernel: policy_forward.1
$region0: #{policy_forward.1}
  #allocation0 [shape = 'u32[]', space=smem, size = 0x4, offset = 0x4, fixed_abs, tag = 'smem constant byte address 0x4 - core index']
  #allocation1 [shape = 'u32[144,128]{1,0:T(1,128)}', space=vmem, size = 0x12000, scoped, tag = 'internal scratch']
  %s0 = inlined_call_operand.vmem [shape: bf16[128,256], index: 0, kind: input, shape index: {}]
  %s1 = inlined_call_operand.vmem [shape: bf16[256,32], index: 1, kind: input, shape index: {}]
  %s2 = inlined_call_operand.vmem [shape: bf16[32,1024], index: 2, kind: input, shape index: {}]
  %s3 = inlined_call_operand.vmem [shape: bf16[16,18,128], index: 3, kind: input, shape index: {}]
  %s4 = inlined_call_operand.vmem [shape: bf16[9,64,64], index: 4, kind: input, shape index: {}]
  %s5 = inlined_call_operand.vmem [shape: bf16[64,256], index: 5, kind: input, shape index: {}]
  %s6 = inlined_call_operand.vmem [shape: bf16[256,448], index: 6, kind: input, shape index: {}]
  %s7 = inlined_call_operand.vmem [shape: bf16[448,896], index: 7, kind: input, shape index: {}]
  %s8 = inlined_call_operand.vmem [shape: bf16[896,128], index: 8, kind: input, shape index: {}]
  %s9 = inlined_call_operand.vmem [shape: f32[9,896], index: 9, kind: input, shape index: {}]
  %s10 = inlined_call_operand.hbm [shape: f32[2,128], index: 10, kind: output, shape index: {}]
  %s11 = sld [smem:[#allocation0]]
  $region50: #{policy_forward.1} parent=0
    _
  %s13 = ssub.s32 1, %s11
  %s14 = scalar_select 0, %s13, %s11
  $region1: #{policy_forward.1} parent=0
    #allocation2 [shape = 'u8[1024]{0}', space=vmem, size = 0x400, scoped, tag = 'output window, operand 0, single buffered']
    #allocation3 [shape = 's32[1]{0}', space=sflag, size = 0x4, scoped, tag = 'scoped memory for policy_forward.1']
    %15 = vsyncpa [#allocation3], 0
    // Predicated region
    $region2: #{policy_forward.1} parent=1 // pred_check
      _
    $region3: #{policy_forward.1} parent=1 // pred_check_branch
      %17 = sbr.rel (0) target = $region5
    $region4: #{policy_forward.1} parent=1 // pred_region
      _
    $region5: #{policy_forward.1} parent=1 // pred_fallthru
      _
    // Predicated region
    $region6: #{policy_forward.1} parent=1 // pred_check
      _
    $region7: #{policy_forward.1} parent=1 // pred_check_branch
      %19 = sbr.rel (0) target = $region9
    $region8: #{policy_forward.1} parent=1 // pred_region
      _
    $region9: #{policy_forward.1} parent=1 // pred_fallthru
      _
    // Predicated region
    $region10: #{policy_forward.1} parent=1 // pred_check
      _
    $region11: #{policy_forward.1} parent=1 // pred_check_branch
      %21 = sbr.rel (0) target = $region13
    $region12: #{policy_forward.1} parent=1 // pred_region
      _
    $region13: #{policy_forward.1} parent=1 // pred_fallthru
      _
    // Predicated region
    $region14: #{policy_forward.1} parent=1 // pred_check
      _
    $region15: #{policy_forward.1} parent=1 // pred_check_branch
      %23 = sbr.rel (0) target = $region17
    $region16: #{policy_forward.1} parent=1 // pred_region
      _
    $region17: #{policy_forward.1} parent=1 // pred_fallthru
      _
    // Predicated region
    $region18: #{policy_forward.1} parent=1 // pred_check
      _
    $region19: #{policy_forward.1} parent=1 // pred_check_branch
      %25 = sbr.rel (0) target = $region21
    $region20: #{policy_forward.1} parent=1 // pred_region
      _
    $region21: #{policy_forward.1} parent=1 // pred_fallthru
      _
    // Predicated region
    $region22: #{policy_forward.1} parent=1 // pred_check
      _
    $region23: #{policy_forward.1} parent=1 // pred_check_branch
      %27 = sbr.rel (0) target = $region25
    $region24: #{policy_forward.1} parent=1 // pred_region
      _
    $region25: #{policy_forward.1} parent=1 // pred_fallthru
      _
    // Predicated region
    $region26: #{policy_forward.1} parent=1 // pred_check
      _
    $region27: #{policy_forward.1} parent=1 // pred_check_branch
      %29 = sbr.rel (0) target = $region29
    $region28: #{policy_forward.1} parent=1 // pred_region
      _
    $region29: #{policy_forward.1} parent=1 // pred_fallthru
      _
    // Predicated region
    $region30: #{policy_forward.1} parent=1 // pred_check
      _
    $region31: #{policy_forward.1} parent=1 // pred_check_branch
      %31 = sbr.rel (0) target = $region33
    $region32: #{policy_forward.1} parent=1 // pred_region
      _
    $region33: #{policy_forward.1} parent=1 // pred_fallthru
      _
    // Predicated region
    $region34: #{policy_forward.1} parent=1 // pred_check
      _
    $region35: #{policy_forward.1} parent=1 // pred_check_branch
      %33 = sbr.rel (0) target = $region37
    $region36: #{policy_forward.1} parent=1 // pred_region
      _
    $region37: #{policy_forward.1} parent=1 // pred_fallthru
      _
    // Predicated region
    $region38: #{policy_forward.1} parent=1 // pred_check
      _
    $region39: #{policy_forward.1} parent=1 // pred_check_branch
      %35 = sbr.rel (0) target = $region41
    $region40: #{policy_forward.1} parent=1 // pred_region
      _
    $region41: #{policy_forward.1} parent=1 // pred_fallthru
      _
    %v37 = vld [vmem:[%s9] ss:$0 sm:$0xff]
    %v38 = vld [vmem:[%s9 + $0x1] ss:$0 sm:$0xff]
    %v39 = vld [vmem:[%s9 + $0x2] ss:$0 sm:$0xff]
    %s40 = scalar_lea.vmem %s9, 3
    %v41 = vld [vmem:[%s40] ss:$8 sm:$0x3]
    %s42 = scalar_lea.vmem %s9, 4
    %v43 = vld [vmem:[%s42] ss:$8 sm:$0xf]
    %s44 = scalar_lea.vmem %s9, 5
    %v45 = vld [vmem:[%s44] ss:$8 sm:$0xf]
    %v46 = vld [vmem:[%s44] ss:$8 sm:$0xf0]
    %v47 = vor.u32 %v45, %v46
    %v48 = vld [vmem:[%s9 + $0x6] ss:$0 sm:$0xff]
    %v49 = vld [vmem:[%s9 + $0x7] ss:$0 sm:$0xff]
    %v50 = vld [vmem:[%s9 + $0x38] ss:$0 sm:$0xff]
    %v51 = vld [vmem:[%s0] sm:$0xff]
    %v52 = vld [vmem:[%s0 + $0x8] sm:$0xff]
    %v53 = vld [vmem:[%s0 + $0x10] sm:$0xff]
    %v54 = vld [vmem:[%s0 + $0x18] sm:$0xff]
    %v55 = vld [vmem:[%s0 + $0x20] sm:$0xff]
    %v56 = vld [vmem:[%s0 + $0x28] sm:$0xff]
    %v57 = vld [vmem:[%s0 + $0x30] sm:$0xff]
    %v58 = vld [vmem:[%s0 + $0x38] sm:$0xff]
    %v59 = vld [vmem:[%s0 + $0x40] sm:$0xff]
    %v60 = vld [vmem:[%s0 + $0x48] sm:$0xff]
    %v61 = vld [vmem:[%s0 + $0x50] sm:$0xff]
    %v62 = vld [vmem:[%s0 + $0x58] sm:$0xff]
    %v63 = vld [vmem:[%s0 + $0x60] sm:$0xff]
    %v64 = vld [vmem:[%s0 + $0x68] sm:$0xff]
    %v65 = vld [vmem:[%s0 + $0x70] sm:$0xff]
    %v66 = vld [vmem:[%s0 + $0x78] sm:$0xff]
    %v67 = vld [vmem:[%s1] sm:$0xf]
    %v68 = vld [vmem:[%s1 + $0x4] sm:$0xf]
    %v69 = vld [vmem:[%s1 + $0x8] sm:$0xf]
    %v70 = vld [vmem:[%s1 + $0xc] sm:$0xf]
    %v71 = vld [vmem:[%s1 + $0x10] sm:$0xf]
    %v72 = vld [vmem:[%s1 + $0x14] sm:$0xf]
    %v73 = vld [vmem:[%s1 + $0x18] sm:$0xf]
    %v74 = vld [vmem:[%s1 + $0x1c] sm:$0xf]
    %v75 = vld [vmem:[%s1 + $0x20] sm:$0xf]
    %v76 = vld [vmem:[%s1 + $0x24] sm:$0xf]
    %v77 = vld [vmem:[%s1 + $0x28] sm:$0xf]
    %v78 = vld [vmem:[%s1 + $0x2c] sm:$0xf]
    %v79 = vld [vmem:[%s1 + $0x30] sm:$0xf]
    %v80 = vld [vmem:[%s1 + $0x34] sm:$0xf]
    %v81 = vld [vmem:[%s1 + $0x38] sm:$0xf]
    %v82 = vld [vmem:[%s1 + $0x3c] sm:$0xf]
    %v83 = vld [vmem:[%s1 + $0x40] sm:$0xf]
    %v84 = vld [vmem:[%s1 + $0x44] sm:$0xf]
    %v85 = vld [vmem:[%s1 + $0x48] sm:$0xf]
    %v86 = vld [vmem:[%s1 + $0x4c] sm:$0xf]
    %v87 = vld [vmem:[%s1 + $0x50] sm:$0xf]
    %v88 = vld [vmem:[%s1 + $0x54] sm:$0xf]
    %v89 = vld [vmem:[%s1 + $0x58] sm:$0xf]
    %v90 = vld [vmem:[%s1 + $0x5c] sm:$0xf]
    %v91 = vld [vmem:[%s1 + $0x60] sm:$0xf]
    %v92 = vld [vmem:[%s1 + $0x64] sm:$0xf]
    %v93 = vld [vmem:[%s1 + $0x68] sm:$0xf]
    %v94 = vld [vmem:[%s1 + $0x6c] sm:$0xf]
    %v95 = vld [vmem:[%s1 + $0x70] sm:$0xf]
    %v96 = vld [vmem:[%s1 + $0x74] sm:$0xf]
    %v97 = vld [vmem:[%s1 + $0x78] sm:$0xf]
    %v98 = vld [vmem:[%s1 + $0x7c] sm:$0xf]
    %v115 = vunpack.c.l.b16 %v51
    %v116 = vunpack.c.h.b16 %v51
    %v117 = vunpack.c.l.b16 %v52
    %v118 = vunpack.c.h.b16 %v52
    %v119 = vunpack.c.l.b16 %v53
    %v120 = vunpack.c.h.b16 %v53
    %v121 = vunpack.c.l.b16 %v54
    %v122 = vunpack.c.h.b16 %v54
    %v123 = vunpack.c.l.b16 %v55
    %v124 = vunpack.c.h.b16 %v55
    %v125 = vunpack.c.l.b16 %v56
    %v126 = vunpack.c.h.b16 %v56
    %v127 = vunpack.c.l.b16 %v57
    %v128 = vunpack.c.h.b16 %v57
    %v129 = vunpack.c.l.b16 %v58
    %v130 = vunpack.c.h.b16 %v58
    %v131 = vunpack.c.l.b16 %v59
    %v132 = vunpack.c.h.b16 %v59
    %v133 = vunpack.c.l.b16 %v60
    %v134 = vunpack.c.h.b16 %v60
    %v135 = vunpack.c.l.b16 %v61
    %v136 = vunpack.c.h.b16 %v61
    %v137 = vunpack.c.l.b16 %v62
    %v138 = vunpack.c.h.b16 %v62
    %v139 = vunpack.c.l.b16 %v63
    %v140 = vunpack.c.h.b16 %v63
    %v141 = vunpack.c.l.b16 %v64
    %v142 = vunpack.c.h.b16 %v64
    %v143 = vunpack.c.l.b16 %v65
    %v144 = vunpack.c.h.b16 %v65
    %v145 = vunpack.c.l.b16 %v66
    %v146 = vunpack.c.h.b16 %v66
    %v147 = vpack.c.b16 %v117, %v115
    %v148 = vpack.c.b16 %v118, %v116
    %v149 = vpack.c.b16 %v121, %v119
    %v150 = vpack.c.b16 %v122, %v120
    %v151 = vpack.c.b16 %v125, %v123
    %v152 = vpack.c.b16 %v126, %v124
    %v153 = vpack.c.b16 %v129, %v127
    %v154 = vpack.c.b16 %v130, %v128
    %v155 = vpack.c.b16 %v133, %v131
    %v156 = vpack.c.b16 %v134, %v132
    %v157 = vpack.c.b16 %v137, %v135
    %v158 = vpack.c.b16 %v138, %v136
    %v159 = vpack.c.b16 %v141, %v139
    %v160 = vpack.c.b16 %v142, %v140
    %v161 = vpack.c.b16 %v145, %v143
    %v162 = vpack.c.b16 %v146, %v144
    %v211 = vunpack.c.l.b16 %v67
    %v212 = vunpack.c.l.b16 %v68
    %v213 = vunpack.c.l.b16 %v69
    %v214 = vunpack.c.l.b16 %v70
    %v215 = vunpack.c.l.b16 %v71
    %v216 = vunpack.c.l.b16 %v72
    %v217 = vunpack.c.l.b16 %v73
    %v218 = vunpack.c.l.b16 %v74
    %v219 = vunpack.c.l.b16 %v75
    %v220 = vunpack.c.l.b16 %v76
    %v221 = vunpack.c.l.b16 %v77
    %v222 = vunpack.c.l.b16 %v78
    %v223 = vunpack.c.l.b16 %v79
    %v224 = vunpack.c.l.b16 %v80
    %v225 = vunpack.c.l.b16 %v81
    %v226 = vunpack.c.l.b16 %v82
    %v227 = vunpack.c.l.b16 %v83
    %v228 = vunpack.c.l.b16 %v84
    %v229 = vunpack.c.l.b16 %v85
    %v230 = vunpack.c.l.b16 %v86
    %v231 = vunpack.c.l.b16 %v87
    %v232 = vunpack.c.l.b16 %v88
    %v233 = vunpack.c.l.b16 %v89
    %v234 = vunpack.c.l.b16 %v90
    %v235 = vunpack.c.l.b16 %v91
    %v236 = vunpack.c.l.b16 %v92
    %v237 = vunpack.c.l.b16 %v93
    %v238 = vunpack.c.l.b16 %v94
    %v239 = vunpack.c.l.b16 %v95
    %v240 = vunpack.c.l.b16 %v96
    %v241 = vunpack.c.l.b16 %v97
    %v242 = vunpack.c.l.b16 %v98
    %v243 = vpack.c.b16 %v212, %v211
    %v244 = vpack.c.b16 %v214, %v213
    %v245 = vpack.c.b16 %v216, %v215
    %v246 = vpack.c.b16 %v218, %v217
    %v247 = vpack.c.b16 %v220, %v219
    %v248 = vpack.c.b16 %v222, %v221
    %v249 = vpack.c.b16 %v224, %v223
    %v250 = vpack.c.b16 %v226, %v225
    %v251 = vpack.c.b16 %v228, %v227
    %v252 = vpack.c.b16 %v230, %v229
    %v253 = vpack.c.b16 %v232, %v231
    %v254 = vpack.c.b16 %v234, %v233
    %v255 = vpack.c.b16 %v236, %v235
    %v256 = vpack.c.b16 %v238, %v237
    %v257 = vpack.c.b16 %v240, %v239
    %v258 = vpack.c.b16 %v242, %v241
    %275 = vmatprep.subr.bf16.mxu0 0
    %276 = vmatpush1.bf16.msra.mxu0 %v243
    %277 = vmatprep.subr.bf16.mxu0 0
    %278 = vmatpush1.bf16.msra.mxu0 %v244
    %279 = vmatprep.subr.bf16.mxu0 0
    %280 = vmatpush1.bf16.msra.mxu0 %v245
    %281 = vmatprep.subr.bf16.mxu0 0
    %282 = vmatpush1.bf16.msra.mxu0 %v246
    %283 = vmatprep.subr.bf16.mxu0 0
    %284 = vmatpush1.bf16.msra.mxu0 %v247
    %285 = vmatprep.subr.bf16.mxu0 0
    %286 = vmatpush1.bf16.msra.mxu0 %v248
    %287 = vmatprep.subr.bf16.mxu0 0
    %288 = vmatpush1.bf16.msra.mxu0 %v249
    %289 = vmatprep.subr.bf16.mxu0 0
    %290 = vmatpush1.bf16.msra.mxu0 %v250
    %291 = vmatprep.subr.bf16.mxu0 0
    %292 = vmatpush1.bf16.msra.mxu0 %v251
    %293 = vmatprep.subr.bf16.mxu0 0
    %294 = vmatpush1.bf16.msra.mxu0 %v252
    %295 = vmatprep.subr.bf16.mxu0 0
    %296 = vmatpush1.bf16.msra.mxu0 %v253
    %297 = vmatprep.subr.bf16.mxu0 0
    %298 = vmatpush1.bf16.msra.mxu0 %v254
    %299 = vmatprep.subr.bf16.mxu0 0
    %300 = vmatpush1.bf16.msra.mxu0 %v255
    %301 = vmatprep.subr.bf16.mxu0 0
    %302 = vmatpush1.bf16.msra.mxu0 %v256
    %303 = vmatprep.subr.bf16.mxu0 0
    %304 = vmatpush1.bf16.msra.mxu0 %v257
    %305 = vmatprep.subr.bf16.mxu0 0
    %306 = vmatpush1.bf16.msra.mxu0 %v258
    %307 = vmatprep.mubr.bf16.mxu0 %v148
    %308 = vmatmul.mubr.bf16.gmra.mrb[0].mxu0 %v147
    %v309 = vpop.f32.mrb[0].mxu0
    %v310 = vadd.f32 %v37, %v309
    %v311 = vpop.f32.mrb[0].mxu0
    %v312 = vpop.f32.mrb[0].mxu0
    %v313 = vadd.f32 %v37, %v312
    %v314 = vpop.f32.mrb[0].mxu0
    %315 = vmatprep.mubr.bf16.mxu0 %v150
    %316 = vmatmul.mubr.bf16.gmra.mrb[0].mxu0 %v149
    %v317 = vpop.f32.mrb[0].mxu0
    %v318 = vadd.f32 %v37, %v317
    %v319 = vpop.f32.mrb[0].mxu0
    %v320 = vpop.f32.mrb[0].mxu0
    %v321 = vadd.f32 %v37, %v320
    %v322 = vpop.f32.mrb[0].mxu0
    %323 = vmatprep.mubr.bf16.mxu0 %v152
    %324 = vmatmul.mubr.bf16.gmra.mrb[0].mxu0 %v151
    %v325 = vpop.f32.mrb[0].mxu0
    %v326 = vadd.f32 %v37, %v325
    %v327 = vpop.f32.mrb[0].mxu0
    %v328 = vpop.f32.mrb[0].mxu0
    %v329 = vadd.f32 %v37, %v328
    %v330 = vpop.f32.mrb[0].mxu0
    %331 = vmatprep.mubr.bf16.mxu0 %v154
    %332 = vmatmul.mubr.bf16.gmra.mrb[0].mxu0 %v153
    %v333 = vpop.f32.mrb[0].mxu0
    %v334 = vadd.f32 %v37, %v333
    %v335 = vpop.f32.mrb[0].mxu0
    %v336 = vpop.f32.mrb[0].mxu0
    %v337 = vadd.f32 %v37, %v336
    %v338 = vpop.f32.mrb[0].mxu0
    %339 = vmatprep.mubr.bf16.mxu0 %v156
    %340 = vmatmul.mubr.bf16.gmra.mrb[0].mxu0 %v155
    %v341 = vpop.f32.mrb[0].mxu0
    %v342 = vadd.f32 %v37, %v341
    %v343 = vpop.f32.mrb[0].mxu0
    %v344 = vpop.f32.mrb[0].mxu0
    %v345 = vadd.f32 %v37, %v344
    %v346 = vpop.f32.mrb[0].mxu0
    %347 = vmatprep.mubr.bf16.mxu0 %v158
    %348 = vmatmul.mubr.bf16.gmra.mrb[0].mxu0 %v157
    %v349 = vpop.f32.mrb[0].mxu0
    %v350 = vadd.f32 %v37, %v349
    %v351 = vpop.f32.mrb[0].mxu0
    %v352 = vpop.f32.mrb[0].mxu0
    %v353 = vadd.f32 %v37, %v352
    %v354 = vpop.f32.mrb[0].mxu0
    %355 = vmatprep.mubr.bf16.mxu0 %v160
    %356 = vmatmul.mubr.bf16.gmra.mrb[0].mxu0 %v159
    %v357 = vpop.f32.mrb[0].mxu0
    %v358 = vadd.f32 %v37, %v357
    %v359 = vpop.f32.mrb[0].mxu0
    %v360 = vpop.f32.mrb[0].mxu0
    %v361 = vadd.f32 %v37, %v360
    %v362 = vpop.f32.mrb[0].mxu0
    %363 = vmatprep.mubr.bf16.mxu0 %v162
    %364 = vmatmul.mubr.bf16.gmra.mrb[0].mxu0 %v161
    %v365 = vpop.f32.mrb[0].mxu0
    %v366 = vadd.f32 %v37, %v365
    %v367 = vpop.f32.mrb[0].mxu0
    %v368 = vpop.f32.mrb[0].mxu0
    %v369 = vadd.f32 %v37, %v368
    %v370 = vpop.f32.mrb[0].mxu0
    %371 = vdwg.mxu0
    %v372 = vmax.f32 %v310, 0.0
    %v373 = vmax.f32 %v313, 0.0
    %v374 = vmax.f32 %v318, 0.0
    %v375 = vmax.f32 %v321, 0.0
    %v376 = vmax.f32 %v326, 0.0
    %v377 = vmax.f32 %v329, 0.0
    %v378 = vmax.f32 %v334, 0.0
    %v379 = vmax.f32 %v337, 0.0
    %v380 = vmax.f32 %v342, 0.0
    %v381 = vmax.f32 %v345, 0.0
    %v382 = vmax.f32 %v350, 0.0
    %v383 = vmax.f32 %v353, 0.0
    %v384 = vmax.f32 %v358, 0.0
    %v385 = vmax.f32 %v361, 0.0
    %v386 = vmax.f32 %v366, 0.0
    %v387 = vmax.f32 %v369, 0.0
    %v388 = vld [vmem:[%s2] sm:$0xff]
    %v389 = vld [vmem:[%s2 + $0x8] sm:$0xff]
    %v390 = vld [vmem:[%s2 + $0x10] sm:$0xff]
    %v391 = vld [vmem:[%s2 + $0x18] sm:$0xff]
    %v392 = vld [vmem:[%s2 + $0x20] sm:$0xff]
    %v393 = vld [vmem:[%s2 + $0x28] sm:$0xff]
    %v394 = vld [vmem:[%s2 + $0x30] sm:$0xff]
    %v395 = vld [vmem:[%s2 + $0x38] sm:$0xff]
    %v396 = vld [vmem:[%s2 + $0x40] sm:$0xff]
    %v397 = vld [vmem:[%s2 + $0x48] sm:$0xff]
    %v398 = vld [vmem:[%s2 + $0x50] sm:$0xff]
    %v399 = vld [vmem:[%s2 + $0x58] sm:$0xff]
    %v400 = vld [vmem:[%s2 + $0x60] sm:$0xff]
    %v401 = vld [vmem:[%s2 + $0x68] sm:$0xff]
    %v402 = vld [vmem:[%s2 + $0x70] sm:$0xff]
    %v403 = vld [vmem:[%s2 + $0x78] sm:$0xff]
    %v404 = vpack.c.bf16 %v373, %v372
    %v405 = vpack.c.bf16 %v375, %v374
    %v406 = vpack.c.bf16 %v377, %v376
    %v407 = vpack.c.bf16 %v379, %v378
    %v408 = vpack.c.bf16 %v381, %v380
    %v409 = vpack.c.bf16 %v383, %v382
    %v410 = vpack.c.bf16 %v385, %v384
    %v411 = vpack.c.bf16 %v387, %v386
    %v428 = vunpack.c.l.b16 %v388
    %v429 = vunpack.c.h.b16 %v388
    %v430 = vunpack.c.l.b16 %v389
    %v431 = vunpack.c.h.b16 %v389
    %v432 = vunpack.c.l.b16 %v390
    %v433 = vunpack.c.h.b16 %v390
    %v434 = vunpack.c.l.b16 %v391
    %v435 = vunpack.c.h.b16 %v391
    %v436 = vunpack.c.l.b16 %v392
    %v437 = vunpack.c.h.b16 %v392
    %v438 = vunpack.c.l.b16 %v393
    %v439 = vunpack.c.h.b16 %v393
    %v440 = vunpack.c.l.b16 %v394
    %v441 = vunpack.c.h.b16 %v394
    %v442 = vunpack.c.l.b16 %v395
    %v443 = vunpack.c.h.b16 %v395
    %v444 = vunpack.c.l.b16 %v396
    %v445 = vunpack.c.h.b16 %v396
    %v446 = vunpack.c.l.b16 %v397
    %v447 = vunpack.c.h.b16 %v397
    %v448 = vunpack.c.l.b16 %v398
    %v449 = vunpack.c.h.b16 %v398
    %v450 = vunpack.c.l.b16 %v399
    %v451 = vunpack.c.h.b16 %v399
    %v452 = vunpack.c.l.b16 %v400
    %v453 = vunpack.c.h.b16 %v400
    %v454 = vunpack.c.l.b16 %v401
    %v455 = vunpack.c.h.b16 %v401
    %v456 = vunpack.c.l.b16 %v402
    %v457 = vunpack.c.h.b16 %v402
    %v458 = vunpack.c.l.b16 %v403
    %v459 = vunpack.c.h.b16 %v403
    %v460 = vpack.c.b16 %v436, %v428
    %v461 = vpack.c.b16 %v437, %v429
    %v462 = vpack.c.b16 %v438, %v430
    %v463 = vpack.c.b16 %v439, %v431
    %v464 = vpack.c.b16 %v440, %v432
    %v465 = vpack.c.b16 %v441, %v433
    %v466 = vpack.c.b16 %v442, %v434
    %v467 = vpack.c.b16 %v443, %v435
    %v468 = vpack.c.b16 %v452, %v444
    %v469 = vpack.c.b16 %v453, %v445
    %v470 = vpack.c.b16 %v454, %v446
    %v471 = vpack.c.b16 %v455, %v447
    %v472 = vpack.c.b16 %v456, %v448
    %v473 = vpack.c.b16 %v457, %v449
    %v474 = vpack.c.b16 %v458, %v450
    %v475 = vpack.c.b16 %v459, %v451
    %vm492 = vcmask 261120
    %v494 = vsel %vm492, %v404, 0
    %v497 = vsel %vm492, %v405, 0
    %v500 = vsel %vm492, %v406, 0
    %v503 = vsel %vm492, %v407, 0
    %v506 = vsel %vm492, %v408, 0
    %v509 = vsel %vm492, %v409, 0
    %v512 = vsel %vm492, %v410, 0
    %v515 = vsel %vm492, %v411, 0
    %517 = vmatprep.subr.bf16.mxu0 %v461
    %518 = vmatpush1.bf16.msra.mxu0 %v460
    %519 = vmatprep.subr.bf16.mxu0 %v469
    %520 = vmatpush1.bf16.msra.mxu0 %v468
    %521 = vmatprep.subr.bf16.mxu0 0
    %522 = vmatpush1.bf16.msra.mxu0 0
    %523 = vmatprep.subr.bf16.mxu0 0
    %524 = vmatpush1.bf16.msra.mxu0 0
    %525 = vmatprep.subr.bf16.mxu0 0
    %526 = vmatpush1.bf16.msra.mxu0 0
    %527 = vmatprep.subr.bf16.mxu0 0
    %528 = vmatpush1.bf16.msra.mxu0 0
    %529 = vmatprep.subr.bf16.mxu0 0
    %530 = vmatpush1.bf16.msra.mxu0 0
    %531 = vmatprep.subr.bf16.mxu0 0
    %532 = vmatpush1.bf16.msra.mxu0 0
    %533 = vmatprep.subr.bf16.mxu0 0
    %534 = vmatpush1.bf16.msra.mxu0 0
    %535 = vmatprep.subr.bf16.mxu0 0
    %536 = vmatpush1.bf16.msra.mxu0 0
    %537 = vmatprep.subr.bf16.mxu0 0
    %538 = vmatpush1.bf16.msra.mxu0 0
    %539 = vmatprep.subr.bf16.mxu0 0
    %540 = vmatpush1.bf16.msra.mxu0 0
    %541 = vmatprep.subr.bf16.mxu0 0
    %542 = vmatpush1.bf16.msra.mxu0 0
    %543 = vmatprep.subr.bf16.mxu0 0
    %544 = vmatpush1.bf16.msra.mxu0 0
    %545 = vmatprep.subr.bf16.mxu0 0
    %546 = vmatpush1.bf16.msra.mxu0 0
    %547 = vmatprep.subr.bf16.mxu0 0
    %548 = vmatpush1.bf16.msra.mxu0 0
    %549 = vmatprep.mubr.bf16.mxu0 0
    %550 = vmatmul.mubr.bf16.gmra.mrb[0].mxu0 %v494
    %v551 = vpop.f32.mrb[0].mxu0
    %v552 = vadd.f32 0.0, %v551
    %v553 = vpop.f32.mrb[0].mxu0
    %v554 = vadd.f32 0.0, %v553
    %v555 = vpop.f32.mrb[0].mxu0
    %v556 = vadd.f32 0.0, %v555
    %v557 = vpop.f32.mrb[0].mxu0
    %v558 = vadd.f32 0.0, %v557
    %559 = vmatprep.mubr.bf16.mxu0 0
    %560 = vmatmul.mubr.bf16.gmra.mrb[0].mxu0 %v497
    %v561 = vpop.f32.mrb[0].mxu0
    %v562 = vadd.f32 0.0, %v561
    %v563 = vpop.f32.mrb[0].mxu0
    %v564 = vadd.f32 0.0, %v563
    %v565 = vpop.f32.mrb[0].mxu0
    %v566 = vadd.f32 0.0, %v565
    %v567 = vpop.f32.mrb[0].mxu0
    %v568 = vadd.f32 0.0, %v567
    %569 = vmatprep.mubr.bf16.mxu0 0
    %570 = vmatmul.mubr.bf16.gmra.mrb[0].mxu0 %v500
    %v571 = vpop.f32.mrb[0].mxu0
    %v572 = vadd.f32 0.0, %v571
    %v573 = vpop.f32.mrb[0].mxu0
    %v574 = vadd.f32 0.0, %v573
    %v575 = vpop.f32.mrb[0].mxu0
    %v576 = vadd.f32 0.0, %v575
    %v577 = vpop.f32.mrb[0].mxu0
    %v578 = vadd.f32 0.0, %v577
    %579 = vmatprep.mubr.bf16.mxu0 0
    %580 = vmatmul.mubr.bf16.gmra.mrb[0].mxu0 %v503
    %v581 = vpop.f32.mrb[0].mxu0
    %v582 = vadd.f32 0.0, %v581
    %v583 = vpop.f32.mrb[0].mxu0
    %v584 = vadd.f32 0.0, %v583
    %v585 = vpop.f32.mrb[0].mxu0
    %v586 = vadd.f32 0.0, %v585
    %v587 = vpop.f32.mrb[0].mxu0
    %v588 = vadd.f32 0.0, %v587
    %589 = vmatprep.mubr.bf16.mxu0 0
    %590 = vmatmul.mubr.bf16.gmra.mrb[0].mxu0 %v506
    %v591 = vpop.f32.mrb[0].mxu0
    %v592 = vadd.f32 0.0, %v591
    %v593 = vpop.f32.mrb[0].mxu0
    %v594 = vadd.f32 0.0, %v593
    %v595 = vpop.f32.mrb[0].mxu0
    %v596 = vadd.f32 0.0, %v595
    %v597 = vpop.f32.mrb[0].mxu0
    %v598 = vadd.f32 0.0, %v597
    %599 = vmatprep.mubr.bf16.mxu0 0
    %600 = vmatmul.mubr.bf16.gmra.mrb[0].mxu0 %v509
    %v601 = vpop.f32.mrb[0].mxu0
    %v602 = vadd.f32 0.0, %v601
    %v603 = vpop.f32.mrb[0].mxu0
    %v604 = vadd.f32 0.0, %v603
    %v605 = vpop.f32.mrb[0].mxu0
    %v606 = vadd.f32 0.0, %v605
    %v607 = vpop.f32.mrb[0].mxu0
    %v608 = vadd.f32 0.0, %v607
    %609 = vmatprep.mubr.bf16.mxu0 0
    %610 = vmatmul.mubr.bf16.gmra.mrb[0].mxu0 %v512
    %v611 = vpop.f32.mrb[0].mxu0
    %v612 = vadd.f32 0.0, %v611
    %v613 = vpop.f32.mrb[0].mxu0
    %v614 = vadd.f32 0.0, %v613
    %v615 = vpop.f32.mrb[0].mxu0
    %v616 = vadd.f32 0.0, %v615
    %v617 = vpop.f32.mrb[0].mxu0
    %v618 = vadd.f32 0.0, %v617
    %619 = vmatprep.mubr.bf16.mxu0 0
    %620 = vmatmul.mubr.bf16.gmra.mrb[0].mxu0 %v515
    %v621 = vpop.f32.mrb[0].mxu0
    %v622 = vadd.f32 0.0, %v621
    %v623 = vpop.f32.mrb[0].mxu0
    %v624 = vadd.f32 0.0, %v623
    %v625 = vpop.f32.mrb[0].mxu0
    %v626 = vadd.f32 0.0, %v625
    %v627 = vpop.f32.mrb[0].mxu0
    %v628 = vadd.f32 0.0, %v627
    %629 = vdwg.mxu0
    %630 = vmatprep.subr.bf16.mxu0 %v463
    %631 = vmatpush1.bf16.msra.mxu0 %v462
    %632 = vmatprep.subr.bf16.mxu0 %v471
    %633 = vmatpush1.bf16.msra.mxu0 %v470
    %634 = vmatprep.subr.bf16.mxu0 0
    %635 = vmatpush1.bf16.msra.mxu0 0
    %636 = vmatprep.subr.bf16.mxu0 0
    %637 = vmatpush1.bf16.msra.mxu0 0
    %638 = vmatprep.subr.bf16.mxu0 0
    %639 = vmatpush1.bf16.msra.mxu0 0
    %640 = vmatprep.subr.bf16.mxu0 0
    %641 = vmatpush1.bf16.msra.mxu0 0
    %642 = vmatprep.subr.bf16.mxu0 0
    %643 = vmatpush1.bf16.msra.mxu0 0
    %644 = vmatprep.subr.bf16.mxu0 0
    %645 = vmatpush1.bf16.msra.mxu0 0
    %646 = vmatprep.subr.bf16.mxu0 0
    %647 = vmatpush1.bf16.msra.mxu0 0
    %648 = vmatprep.subr.bf16.mxu0 0
    %649 = vmatpush1.bf16.msra.mxu0 0
    %650 = vmatprep.subr.bf16.mxu0 0
    %651 = vmatpush1.bf16.msra.mxu0 0
    %652 = vmatprep.subr.bf16.mxu0 0
    %653 = vmatpush1.bf16.msra.mxu0 0
    %654 = vmatprep.subr.bf16.mxu0 0
    %655 = vmatpush1.bf16.msra.mxu0 0
    %656 = vmatprep.subr.bf16.mxu0 0
    %657 = vmatpush1.bf16.msra.mxu0 0
    %658 = vmatprep.subr.bf16.mxu0 0
    %659 = vmatpush1.bf16.msra.mxu0 0
    %660 = vmatprep.subr.bf16.mxu0 0
    %661 = vmatpush1.bf16.msra.mxu0 0
    %662 = vmatprep.mubr.bf16.mxu0 0
    %663 = vmatmul.mubr.bf16.gmra.mrb[0].mxu0 %v494
    %v664 = vpop.f32.mrb[0].mxu0
    %v665 = vadd.f32 0.0, %v664
    %v666 = vpop.f32.mrb[0].mxu0
    %v667 = vadd.f32 0.0, %v666
    %v668 = vpop.f32.mrb[0].mxu0
    %v669 = vadd.f32 0.0, %v668
    %v670 = vpop.f32.mrb[0].mxu0
    %v671 = vadd.f32 0.0, %v670
    %672 = vmatprep.mubr.bf16.mxu0 0
    %673 = vmatmul.mubr.bf16.gmra.mrb[0].mxu0 %v497
    %v674 = vpop.f32.mrb[0].mxu0
    %v675 = vadd.f32 0.0, %v674
    %v676 = vpop.f32.mrb[0].mxu0
    %v677 = vadd.f32 0.0, %v676
    %v678 = vpop.f32.mrb[0].mxu0
    %v679 = vadd.f32 0.0, %v678
    %v680 = vpop.f32.mrb[0].mxu0
    %v681 = vadd.f32 0.0, %v680
    %682 = vmatprep.mubr.bf16.mxu0 0
    %683 = vmatmul.mubr.bf16.gmra.mrb[0].mxu0 %v500
    %v684 = vpop.f32.mrb[0].mxu0
    %v685 = vadd.f32 0.0, %v684
    %v686 = vpop.f32.mrb[0].mxu0
    %v687 = vadd.f32 0.0, %v686
    %v688 = vpop.f32.mrb[0].mxu0
    %v689 = vadd.f32 0.0, %v688
    %v690 = vpop.f32.mrb[0].mxu0
    %v691 = vadd.f32 0.0, %v690
    %692 = vmatprep.mubr.bf16.mxu0 0
    %693 = vmatmul.mubr.bf16.gmra.mrb[0].mxu0 %v503
    %v694 = vpop.f32.mrb[0].mxu0
    %v695 = vadd.f32 0.0, %v694
    %v696 = vpop.f32.mrb[0].mxu0
    %v697 = vadd.f32 0.0, %v696
    %v698 = vpop.f32.mrb[0].mxu0
    %v699 = vadd.f32 0.0, %v698
    %v700 = vpop.f32.mrb[0].mxu0
    %v701 = vadd.f32 0.0, %v700
    %702 = vmatprep.mubr.bf16.mxu0 0
    %703 = vmatmul.mubr.bf16.gmra.mrb[0].mxu0 %v506
    %v704 = vpop.f32.mrb[0].mxu0
    %v705 = vadd.f32 0.0, %v704
    %v706 = vpop.f32.mrb[0].mxu0
    %v707 = vadd.f32 0.0, %v706
    %v708 = vpop.f32.mrb[0].mxu0
    %v709 = vadd.f32 0.0, %v708
    %v710 = vpop.f32.mrb[0].mxu0
    %v711 = vadd.f32 0.0, %v710
    %712 = vmatprep.mubr.bf16.mxu0 0
    %713 = vmatmul.mubr.bf16.gmra.mrb[0].mxu0 %v509
    %v714 = vpop.f32.mrb[0].mxu0
    %v715 = vadd.f32 0.0, %v714
    %v716 = vpop.f32.mrb[0].mxu0
    %v717 = vadd.f32 0.0, %v716
    %v718 = vpop.f32.mrb[0].mxu0
    %v719 = vadd.f32 0.0, %v718
    %v720 = vpop.f32.mrb[0].mxu0
    %v721 = vadd.f32 0.0, %v720
    %722 = vmatprep.mubr.bf16.mxu0 0
    %723 = vmatmul.mubr.bf16.gmra.mrb[0].mxu0 %v512
    %v724 = vpop.f32.mrb[0].mxu0
    %v725 = vadd.f32 0.0, %v724
    %v726 = vpop.f32.mrb[0].mxu0
    %v727 = vadd.f32 0.0, %v726
    %v728 = vpop.f32.mrb[0].mxu0
    %v729 = vadd.f32 0.0, %v728
    %v730 = vpop.f32.mrb[0].mxu0
    %v731 = vadd.f32 0.0, %v730
    %732 = vmatprep.mubr.bf16.mxu0 0
    %733 = vmatmul.mubr.bf16.gmra.mrb[0].mxu0 %v515
    %v734 = vpop.f32.mrb[0].mxu0
    %v735 = vadd.f32 0.0, %v734
    %v736 = vpop.f32.mrb[0].mxu0
    %v737 = vadd.f32 0.0, %v736
    %v738 = vpop.f32.mrb[0].mxu0
    %v739 = vadd.f32 0.0, %v738
    %v740 = vpop.f32.mrb[0].mxu0
    %v741 = vadd.f32 0.0, %v740
    %742 = vdwg.mxu0
    %743 = vmatprep.subr.bf16.mxu0 %v465
    %744 = vmatpush1.bf16.msra.mxu0 %v464
    %745 = vmatprep.subr.bf16.mxu0 %v473
    %746 = vmatpush1.bf16.msra.mxu0 %v472
    %747 = vmatprep.subr.bf16.mxu0 0
    %748 = vmatpush1.bf16.msra.mxu0 0
    %749 = vmatprep.subr.bf16.mxu0 0
    %750 = vmatpush1.bf16.msra.mxu0 0
    %751 = vmatprep.subr.bf16.mxu0 0
    %752 = vmatpush1.bf16.msra.mxu0 0
    %753 = vmatprep.subr.bf16.mxu0 0
    %754 = vmatpush1.bf16.msra.mxu0 0
    %755 = vmatprep.subr.bf16.mxu0 0
    %756 = vmatpush1.bf16.msra.mxu0 0
    %757 = vmatprep.subr.bf16.mxu0 0
    %758 = vmatpush1.bf16.msra.mxu0 0
    %759 = vmatprep.subr.bf16.mxu0 0
    %760 = vmatpush1.bf16.msra.mxu0 0
    %761 = vmatprep.subr.bf16.mxu0 0
    %762 = vmatpush1.bf16.msra.mxu0 0
    %763 = vmatprep.subr.bf16.mxu0 0
    %764 = vmatpush1.bf16.msra.mxu0 0
    %765 = vmatprep.subr.bf16.mxu0 0
    %766 = vmatpush1.bf16.msra.mxu0 0
    %767 = vmatprep.subr.bf16.mxu0 0
    %768 = vmatpush1.bf16.msra.mxu0 0
    %769 = vmatprep.subr.bf16.mxu0 0
    %770 = vmatpush1.bf16.msra.mxu0 0
    %771 = vmatprep.subr.bf16.mxu0 0
    %772 = vmatpush1.bf16.msra.mxu0 0
    %773 = vmatprep.subr.bf16.mxu0 0
    %774 = vmatpush1.bf16.msra.mxu0 0
    %775 = vmatprep.mubr.bf16.mxu0 0
    %776 = vmatmul.mubr.bf16.gmra.mrb[0].mxu0 %v494
    %v777 = vpop.f32.mrb[0].mxu0
    %v778 = vadd.f32 0.0, %v777
    %v779 = vpop.f32.mrb[0].mxu0
    %v780 = vadd.f32 0.0, %v779
    %v781 = vpop.f32.mrb[0].mxu0
    %v782 = vadd.f32 0.0, %v781
    %v783 = vpop.f32.mrb[0].mxu0
    %v784 = vadd.f32 0.0, %v783
    %785 = vmatprep.mubr.bf16.mxu0 0
    %786 = vmatmul.mubr.bf16.gmra.mrb[0].mxu0 %v497
    %v787 = vpop.f32.mrb[0].mxu0
    %v788 = vadd.f32 0.0, %v787
    %v789 = vpop.f32.mrb[0].mxu0
    %v790 = vadd.f32 0.0, %v789
    %v791 = vpop.f32.mrb[0].mxu0
    %v792 = vadd.f32 0.0, %v791
    %v793 = vpop.f32.mrb[0].mxu0
    %v794 = vadd.f32 0.0, %v793
    %795 = vmatprep.mubr.bf16.mxu0 0
    %796 = vmatmul.mubr.bf16.gmra.mrb[0].mxu0 %v500
    %v797 = vpop.f32.mrb[0].mxu0
    %v798 = vadd.f32 0.0, %v797
    %v799 = vpop.f32.mrb[0].mxu0
    %v800 = vadd.f32 0.0, %v799
    %v801 = vpop.f32.mrb[0].mxu0
    %v802 = vadd.f32 0.0, %v801
    %v803 = vpop.f32.mrb[0].mxu0
    %v804 = vadd.f32 0.0, %v803
    %805 = vmatprep.mubr.bf16.mxu0 0
    %806 = vmatmul.mubr.bf16.gmra.mrb[0].mxu0 %v503
    %v807 = vpop.f32.mrb[0].mxu0
    %v808 = vadd.f32 0.0, %v807
    %v809 = vpop.f32.mrb[0].mxu0
    %v810 = vadd.f32 0.0, %v809
    %v811 = vpop.f32.mrb[0].mxu0
    %v812 = vadd.f32 0.0, %v811
    %v813 = vpop.f32.mrb[0].mxu0
    %v814 = vadd.f32 0.0, %v813
    %815 = vmatprep.mubr.bf16.mxu0 0
    %816 = vmatmul.mubr.bf16.gmra.mrb[0].mxu0 %v506
    %v817 = vpop.f32.mrb[0].mxu0
    %v818 = vadd.f32 0.0, %v817
    %v819 = vpop.f32.mrb[0].mxu0
    %v820 = vadd.f32 0.0, %v819
    %v821 = vpop.f32.mrb[0].mxu0
    %v822 = vadd.f32 0.0, %v821
    %v823 = vpop.f32.mrb[0].mxu0
    %v824 = vadd.f32 0.0, %v823
    %825 = vmatprep.mubr.bf16.mxu0 0
    %826 = vmatmul.mubr.bf16.gmra.mrb[0].mxu0 %v509
    %v827 = vpop.f32.mrb[0].mxu0
    %v828 = vadd.f32 0.0, %v827
    %v829 = vpop.f32.mrb[0].mxu0
    %v830 = vadd.f32 0.0, %v829
    %v831 = vpop.f32.mrb[0].mxu0
    %v832 = vadd.f32 0.0, %v831
    %v833 = vpop.f32.mrb[0].mxu0
    %v834 = vadd.f32 0.0, %v833
    %835 = vmatprep.mubr.bf16.mxu0 0
    %836 = vmatmul.mubr.bf16.gmra.mrb[0].mxu0 %v512
    %v837 = vpop.f32.mrb[0].mxu0
    %v838 = vadd.f32 0.0, %v837
    %v839 = vpop.f32.mrb[0].mxu0
    %v840 = vadd.f32 0.0, %v839
    %v841 = vpop.f32.mrb[0].mxu0
    %v842 = vadd.f32 0.0, %v841
    %v843 = vpop.f32.mrb[0].mxu0
    %v844 = vadd.f32 0.0, %v843
    %845 = vmatprep.mubr.bf16.mxu0 0
    %846 = vmatmul.mubr.bf16.gmra.mrb[0].mxu0 %v515
    %v847 = vpop.f32.mrb[0].mxu0
    %v848 = vadd.f32 0.0, %v847
    %v849 = vpop.f32.mrb[0].mxu0
    %v850 = vadd.f32 0.0, %v849
    %v851 = vpop.f32.mrb[0].mxu0
    %v852 = vadd.f32 0.0, %v851
    %v853 = vpop.f32.mrb[0].mxu0
    %v854 = vadd.f32 0.0, %v853
    %855 = vdwg.mxu0
    %856 = vmatprep.subr.bf16.mxu0 %v467
    %857 = vmatpush1.bf16.msra.mxu0 %v466
    %858 = vmatprep.subr.bf16.mxu0 %v475
    %859 = vmatpush1.bf16.msra.mxu0 %v474
    %860 = vmatprep.subr.bf16.mxu0 0
    %861 = vmatpush1.bf16.msra.mxu0 0
    %862 = vmatprep.subr.bf16.mxu0 0
    %863 = vmatpush1.bf16.msra.mxu0 0
    %864 = vmatprep.subr.bf16.mxu0 0
    %865 = vmatpush1.bf16.msra.mxu0 0
    %866 = vmatprep.subr.bf16.mxu0 0
    %867 = vmatpush1.bf16.msra.mxu0 0
    %868 = vmatprep.subr.bf16.mxu0 0
    %869 = vmatpush1.bf16.msra.mxu0 0
    %870 = vmatprep.subr.bf16.mxu0 0
    %871 = vmatpush1.bf16.msra.mxu0 0
    %872 = vmatprep.subr.bf16.mxu0 0
    %873 = vmatpush1.bf16.msra.mxu0 0
    %874 = vmatprep.subr.bf16.mxu0 0
    %875 = vmatpush1.bf16.msra.mxu0 0
    %876 = vmatprep.subr.bf16.mxu0 0
    %877 = vmatpush1.bf16.msra.mxu0 0
    %878 = vmatprep.subr.bf16.mxu0 0
    %879 = vmatpush1.bf16.msra.mxu0 0
    %880 = vmatprep.subr.bf16.mxu0 0
    %881 = vmatpush1.bf16.msra.mxu0 0
    %882 = vmatprep.subr.bf16.mxu0 0
    %883 = vmatpush1.bf16.msra.mxu0 0
    %884 = vmatprep.subr.bf16.mxu0 0
    %885 = vmatpush1.bf16.msra.mxu0 0
    %886 = vmatprep.subr.bf16.mxu0 0
    %887 = vmatpush1.bf16.msra.mxu0 0
    %888 = vmatprep.mubr.bf16.mxu0 0
    %889 = vmatmul.mubr.bf16.gmra.mrb[0].mxu0 %v494
    %v890 = vpop.f32.mrb[0].mxu0
    %v891 = vadd.f32 0.0, %v890
    %v892 = vpop.f32.mrb[0].mxu0
    %v893 = vadd.f32 0.0, %v892
    %v894 = vpop.f32.mrb[0].mxu0
    %v895 = vadd.f32 0.0, %v894
    %v896 = vpop.f32.mrb[0].mxu0
    %v897 = vadd.f32 0.0, %v896
    %898 = vmatprep.mubr.bf16.mxu0 0
    %899 = vmatmul.mubr.bf16.gmra.mrb[0].mxu0 %v497
    %v900 = vpop.f32.mrb[0].mxu0
    %v901 = vadd.f32 0.0, %v900
    %v902 = vpop.f32.mrb[0].mxu0
    %v903 = vadd.f32 0.0, %v902
    %v904 = vpop.f32.mrb[0].mxu0
    %v905 = vadd.f32 0.0, %v904
    %v906 = vpop.f32.mrb[0].mxu0
    %v907 = vadd.f32 0.0, %v906
    %908 = vmatprep.mubr.bf16.mxu0 0
    %909 = vmatmul.mubr.bf16.gmra.mrb[0].mxu0 %v500
    %v910 = vpop.f32.mrb[0].mxu0
    %v911 = vadd.f32 0.0, %v910
    %v912 = vpop.f32.mrb[0].mxu0
    %v913 = vadd.f32 0.0, %v912
    %v914 = vpop.f32.mrb[0].mxu0
    %v915 = vadd.f32 0.0, %v914
    %v916 = vpop.f32.mrb[0].mxu0
    %v917 = vadd.f32 0.0, %v916
    %918 = vmatprep.mubr.bf16.mxu0 0
    %919 = vmatmul.mubr.bf16.gmra.mrb[0].mxu0 %v503
    %v920 = vpop.f32.mrb[0].mxu0
    %v921 = vadd.f32 0.0, %v920
    %v922 = vpop.f32.mrb[0].mxu0
    %v923 = vadd.f32 0.0, %v922
    %v924 = vpop.f32.mrb[0].mxu0
    %v925 = vadd.f32 0.0, %v924
    %v926 = vpop.f32.mrb[0].mxu0
    %v927 = vadd.f32 0.0, %v926
    %928 = vmatprep.mubr.bf16.mxu0 0
    %929 = vmatmul.mubr.bf16.gmra.mrb[0].mxu0 %v506
    %v930 = vpop.f32.mrb[0].mxu0
    %v931 = vadd.f32 0.0, %v930
    %v932 = vpop.f32.mrb[0].mxu0
    %v933 = vadd.f32 0.0, %v932
    %v934 = vpop.f32.mrb[0].mxu0
    %v935 = vadd.f32 0.0, %v934
    %v936 = vpop.f32.mrb[0].mxu0
    %v937 = vadd.f32 0.0, %v936
    %938 = vmatprep.mubr.bf16.mxu0 0
    %939 = vmatmul.mubr.bf16.gmra.mrb[0].mxu0 %v509
    %v940 = vpop.f32.mrb[0].mxu0
    %v941 = vadd.f32 0.0, %v940
    %v942 = vpop.f32.mrb[0].mxu0
    %v943 = vadd.f32 0.0, %v942
    %v944 = vpop.f32.mrb[0].mxu0
    %v945 = vadd.f32 0.0, %v944
    %v946 = vpop.f32.mrb[0].mxu0
    %v947 = vadd.f32 0.0, %v946
    %948 = vmatprep.mubr.bf16.mxu0 0
    %949 = vmatmul.mubr.bf16.gmra.mrb[0].mxu0 %v512
    %v950 = vpop.f32.mrb[0].mxu0
    %v951 = vadd.f32 0.0, %v950
    %v952 = vpop.f32.mrb[0].mxu0
    %v953 = vadd.f32 0.0, %v952
    %v954 = vpop.f32.mrb[0].mxu0
    %v955 = vadd.f32 0.0, %v954
    %v956 = vpop.f32.mrb[0].mxu0
    %v957 = vadd.f32 0.0, %v956
    %958 = vmatprep.mubr.bf16.mxu0 0
    %959 = vmatmul.mubr.bf16.gmra.mrb[0].mxu0 %v515
    %v960 = vpop.f32.mrb[0].mxu0
    %v961 = vadd.f32 0.0, %v960
    %v962 = vpop.f32.mrb[0].mxu0
    %v963 = vadd.f32 0.0, %v962
    %v964 = vpop.f32.mrb[0].mxu0
    %v965 = vadd.f32 0.0, %v964
    %v966 = vpop.f32.mrb[0].mxu0
    %v967 = vadd.f32 0.0, %v966
    %968 = vdwg.mxu0
    %v969 = vpack.c.bf16 %v556, %v552
    %v970 = vpack.c.bf16 %v558, %v554
    %v971 = vpack.c.bf16 %v669, %v665
    %v972 = vpack.c.bf16 %v671, %v667
    %v973 = vpack.c.bf16 %v782, %v778
    %v974 = vpack.c.bf16 %v784, %v780
    %v975 = vpack.c.bf16 %v895, %v891
    %v976 = vpack.c.bf16 %v897, %v893
    %v977 = vpack.c.bf16 %v566, %v562
    %v978 = vpack.c.bf16 %v568, %v564
    %v979 = vpack.c.bf16 %v679, %v675
    %v980 = vpack.c.bf16 %v681, %v677
    %v981 = vpack.c.bf16 %v792, %v788
    %v982 = vpack.c.bf16 %v794, %v790
    %v983 = vpack.c.bf16 %v905, %v901
    %v984 = vpack.c.bf16 %v907, %v903
    %v985 = vpack.c.bf16 %v576, %v572
    %v986 = vpack.c.bf16 %v578, %v574
    %v987 = vpack.c.bf16 %v689, %v685
    %v988 = vpack.c.bf16 %v691, %v687
    %v989 = vpack.c.bf16 %v802, %v798
    %v990 = vpack.c.bf16 %v804, %v800
    %v991 = vpack.c.bf16 %v915, %v911
    %v992 = vpack.c.bf16 %v917, %v913
    %v993 = vpack.c.bf16 %v586, %v582
    %v994 = vpack.c.bf16 %v588, %v584
    %v995 = vpack.c.bf16 %v699, %v695
    %v996 = vpack.c.bf16 %v701, %v697
    %v997 = vpack.c.bf16 %v812, %v808
    %v998 = vpack.c.bf16 %v814, %v810
    %v999 = vpack.c.bf16 %v925, %v921
    %v1000 = vpack.c.bf16 %v927, %v923
    %v1001 = vpack.c.bf16 %v596, %v592
    %v1002 = vpack.c.bf16 %v598, %v594
    %v1003 = vpack.c.bf16 %v709, %v705
    %v1004 = vpack.c.bf16 %v711, %v707
    %v1005 = vpack.c.bf16 %v822, %v818
    %v1006 = vpack.c.bf16 %v824, %v820
    %v1007 = vpack.c.bf16 %v935, %v931
    %v1008 = vpack.c.bf16 %v937, %v933
    %v1009 = vpack.c.bf16 %v606, %v602
    %v1010 = vpack.c.bf16 %v608, %v604
    %v1011 = vpack.c.bf16 %v719, %v715
    %v1012 = vpack.c.bf16 %v721, %v717
    %v1013 = vpack.c.bf16 %v832, %v828
    %v1014 = vpack.c.bf16 %v834, %v830
    %v1015 = vpack.c.bf16 %v945, %v941
    %v1016 = vpack.c.bf16 %v947, %v943
    %v1017 = vpack.c.bf16 %v616, %v612
    %v1018 = vpack.c.bf16 %v618, %v614
    %v1019 = vpack.c.bf16 %v729, %v725
    %v1020 = vpack.c.bf16 %v731, %v727
    %v1021 = vpack.c.bf16 %v842, %v838
    %v1022 = vpack.c.bf16 %v844, %v840
    %v1023 = vpack.c.bf16 %v955, %v951
    %v1024 = vpack.c.bf16 %v957, %v953
    %v1025 = vpack.c.bf16 %v626, %v622
    %v1026 = vpack.c.bf16 %v628, %v624
    %v1027 = vpack.c.bf16 %v739, %v735
    %v1028 = vpack.c.bf16 %v741, %v737
    %v1029 = vpack.c.bf16 %v852, %v848
    %v1030 = vpack.c.bf16 %v854, %v850
    %v1031 = vpack.c.bf16 %v965, %v961
    %v1032 = vpack.c.bf16 %v967, %v963
    %v1033 = vld [vmem:[%s3] sm:$0xf]
    %v1034 = vld [vmem:[%s3 + $0x4] sm:$0xf]
    %v1035 = vld [vmem:[%s3 + $0x8] sm:$0x1]
    %s1036 = scalar_lea.vmem %s3, 12
    %v1037 = vld [vmem:[%s1036] sm:$0xf]
    %v1038 = vld [vmem:[%s1036 + $0x4] sm:$0xf]
    %v1039 = vld [vmem:[%s1036 + $0x8] sm:$0x1]
    %s1040 = scalar_lea.vmem %s3, 24
    %v1041 = vld [vmem:[%s1040] sm:$0xf]
    %v1042 = vld [vmem:[%s1040 + $0x4] sm:$0xf]
    %v1043 = vld [vmem:[%s1040 + $0x8] sm:$0x1]
    %s1044 = scalar_lea.vmem %s3, 36
    %v1045 = vld [vmem:[%s1044] sm:$0xf]
    %v1046 = vld [vmem:[%s1044 + $0x4] sm:$0xf]
    %v1047 = vld [vmem:[%s1044 + $0x8] sm:$0x1]
    %s1048 = scalar_lea.vmem %s3, 48
    %v1049 = vld [vmem:[%s1048] sm:$0xf]
    %v1050 = vld [vmem:[%s1048 + $0x4] sm:$0xf]
    %v1051 = vld [vmem:[%s1048 + $0x8] sm:$0x1]
    %v1055 = vunpack.c.l.b16 %v1049
    %v1056 = vunpack.c.l.b16 %v1050
    %v1057 = vunpack.c.l.b16 %v1051
    %v1058 = vpack.c.b16 %v1056, %v1055
    %v1059 = vpack.c.b16 %v1057, %v1057
    %1062 = vmatprep.subr.bf16.mxu0 0
    %1063 = vmatpush1.bf16.msra.mxu0 %v971
    %1064 = vmatprep.subr.bf16.mxu0 0
    %1065 = vmatpush1.bf16.msra.mxu0 %v979
    %1066 = vmatprep.subr.bf16.mxu0 0
    %1067 = vmatpush1.bf16.msra.mxu0 %v987
    %1068 = vmatprep.subr.bf16.mxu0 0
    %1069 = vmatpush1.bf16.msra.mxu0 %v995
    %1070 = vmatprep.subr.bf16.mxu0 0
    %1071 = vmatpush1.bf16.msra.mxu0 %v1003
    %1072 = vmatprep.subr.bf16.mxu0 0
    %1073 = vmatpush1.bf16.msra.mxu0 %v1011
    %1074 = vmatprep.subr.bf16.mxu0 0
    %1075 = vmatpush1.bf16.msra.mxu0 %v1019
    %1076 = vmatprep.subr.bf16.mxu0 0
    %1077 = vmatpush1.bf16.msra.mxu0 %v1027
    %1078 = vmatprep.subr.bf16.mxu0 0
    %1079 = vmatpush1.bf16.msra.mxu0 0
    %1080 = vmatprep.subr.bf16.mxu0 0
    %1081 = vmatpush1.bf16.msra.mxu0 0
    %1082 = vmatprep.subr.bf16.mxu0 0
    %1083 = vmatpush1.bf16.msra.mxu0 0
    %1084 = vmatprep.subr.bf16.mxu0 0
    %1085 = vmatpush1.bf16.msra.mxu0 0
    %1086 = vmatprep.subr.bf16.mxu0 0
    %1087 = vmatpush1.bf16.msra.mxu0 0
    %1088 = vmatprep.subr.bf16.mxu0 0
    %1089 = vmatpush1.bf16.msra.mxu0 0
    %1090 = vmatprep.subr.bf16.mxu0 0
    %1091 = vmatpush1.bf16.msra.mxu0 0
    %1092 = vmatprep.subr.bf16.mxu0 0
    %1093 = vmatpush1.bf16.msra.mxu0 0
    %1094 = vmatprep.mubr.bf16.mxu0 0
    %1095 = vmatmul.mubr.bf16.gmra.mrb[0].mxu0 %v1058
    %v1096 = vpop.f32.mrb[0].mxu0
    %v1097 = vadd.f32 0.0, %v1096
    %v1098 = vpop.f32.mrb[0].mxu0
    %v1099 = vpop.f32.mrb[0].mxu0
    %v1100 = vadd.f32 0.0, %v1099
    %v1101 = vpop.f32.mrb[0].mxu0
    %1102 = vmatprep.mubr.bf16.mxu0 0
    %1103 = vmatmul.mubr.bf16.gmra.mrb[0].mxu0 %v1059
    %v1104 = vpop.f32.mrb[0].mxu0
    %v1105 = vadd.f32 0.0, %v1104
    %v1106 = vpop.f32.mrb[0].mxu0
    %v1107 = vpop.f32.mrb[0].mxu0
    %v1108 = vpop.f32.mrb[0].mxu0
    %1109 = vdwg.mxu0
    %v1113 = vunpack.c.l.b16 %v1033
    %v1114 = vunpack.c.l.b16 %v1034
    %v1115 = vunpack.c.l.b16 %v1035
    %v1116 = vpack.c.b16 %v1114, %v1113
    %v1117 = vpack.c.b16 %v1115, %v1115
    %1120 = vmatprep.subr.bf16.mxu0 0
    %1121 = vmatpush1.bf16.msra.mxu0 %v969
    %1122 = vmatprep.subr.bf16.mxu0 0
    %1123 = vmatpush1.bf16.msra.mxu0 %v977
    %1124 = vmatprep.subr.bf16.mxu0 0
    %1125 = vmatpush1.bf16.msra.mxu0 %v985
    %1126 = vmatprep.subr.bf16.mxu0 0
    %1127 = vmatpush1.bf16.msra.mxu0 %v993
    %1128 = vmatprep.subr.bf16.mxu0 0
    %1129 = vmatpush1.bf16.msra.mxu0 %v1001
    %1130 = vmatprep.subr.bf16.mxu0 0
    %1131 = vmatpush1.bf16.msra.mxu0 %v1009
    %1132 = vmatprep.subr.bf16.mxu0 0
    %1133 = vmatpush1.bf16.msra.mxu0 %v1017
    %1134 = vmatprep.subr.bf16.mxu0 0
    %1135 = vmatpush1.bf16.msra.mxu0 %v1025
    %1136 = vmatprep.subr.bf16.mxu0 0
    %1137 = vmatpush1.bf16.msra.mxu0 0
    %1138 = vmatprep.subr.bf16.mxu0 0
    %1139 = vmatpush1.bf16.msra.mxu0 0
    %1140 = vmatprep.subr.bf16.mxu0 0
    %1141 = vmatpush1.bf16.msra.mxu0 0
    %1142 = vmatprep.subr.bf16.mxu0 0
    %1143 = vmatpush1.bf16.msra.mxu0 0
    %1144 = vmatprep.subr.bf16.mxu0 0
    %1145 = vmatpush1.bf16.msra.mxu0 0
    %1146 = vmatprep.subr.bf16.mxu0 0
    %1147 = vmatpush1.bf16.msra.mxu0 0
    %1148 = vmatprep.subr.bf16.mxu0 0
    %1149 = vmatpush1.bf16.msra.mxu0 0
    %1150 = vmatprep.subr.bf16.mxu0 0
    %1151 = vmatpush1.bf16.msra.mxu0 0
    %1152 = vmatprep.mubr.bf16.mxu0 0
    %1153 = vmatmul.mubr.bf16.gmra.mrb[0].mxu0 %v1116
    %v1154 = vpop.f32.mrb[0].mxu0
    %v1155 = vadd.f32 %v1097, %v1154
    %v1156 = vpop.f32.mrb[0].mxu0
    %v1157 = vpop.f32.mrb[0].mxu0
    %v1158 = vadd.f32 %v1100, %v1157
    %v1159 = vpop.f32.mrb[0].mxu0
    %1160 = vmatprep.mubr.bf16.mxu0 0
    %1161 = vmatmul.mubr.bf16.gmra.mrb[0].mxu0 %v1117
    %v1162 = vpop.f32.mrb[0].mxu0
    %v1163 = vadd.f32 %v1105, %v1162
    %v1164 = vpop.f32.mrb[0].mxu0
    %v1165 = vpop.f32.mrb[0].mxu0
    %v1166 = vpop.f32.mrb[0].mxu0
    %1167 = vdwg.mxu0
    %s1168 = scalar_lea.vmem %s3, 60
    %v1169 = vld [vmem:[%s1168] sm:$0xf]
    %v1170 = vld [vmem:[%s1168 + $0x4] sm:$0xf]
    %v1171 = vld [vmem:[%s1168 + $0x8] sm:$0x1]
    %v1175 = vunpack.c.l.b16 %v1169
    %v1176 = vunpack.c.l.b16 %v1170
    %v1177 = vunpack.c.l.b16 %v1171
    %v1178 = vpack.c.b16 %v1176, %v1175
    %v1179 = vpack.c.b16 %v1177, %v1177
    %1190 = vrot.lane.b32.xlu0 %v971, 64
    %v1191 = vpop.permute.xlu0 %1190
    %1192 = vrot.lane.b32.xlu0 %v979, 64
    %v1193 = vpop.permute.xlu0 %1192
    %1194 = vrot.lane.b32.xlu0 %v987, 64
    %v1195 = vpop.permute.xlu0 %1194
    %1196 = vrot.lane.b32.xlu0 %v995, 64
    %v1197 = vpop.permute.xlu0 %1196
    %1198 = vrot.lane.b32.xlu0 %v1003, 64
    %v1199 = vpop.permute.xlu0 %1198
    %1200 = vrot.lane.b32.xlu0 %v1011, 64
    %v1201 = vpop.permute.xlu0 %1200
    %1202 = vrot.lane.b32.xlu0 %v1019, 64
    %v1203 = vpop.permute.xlu0 %1202
    %1204 = vrot.lane.b32.xlu0 %v1027, 64
    %v1205 = vpop.permute.xlu0 %1204
    %1214 = vmatprep.subr.bf16.mxu0 0
    %1215 = vmatpush1.bf16.msra.mxu0 %v1191
    %1216 = vmatprep.subr.bf16.mxu0 0
    %1217 = vmatpush1.bf16.msra.mxu0 %v1193
    %1218 = vmatprep.subr.bf16.mxu0 0
    %1219 = vmatpush1.bf16.msra.mxu0 %v1195
    %1220 = vmatprep.subr.bf16.mxu0 0
    %1221 = vmatpush1.bf16.msra.mxu0 %v1197
    %1222 = vmatprep.subr.bf16.mxu0 0
    %1223 = vmatpush1.bf16.msra.mxu0 %v1199
    %1224 = vmatprep.subr.bf16.mxu0 0
    %1225 = vmatpush1.bf16.msra.mxu0 %v1201
    %1226 = vmatprep.subr.bf16.mxu0 0
    %1227 = vmatpush1.bf16.msra.mxu0 %v1203
    %1228 = vmatprep.subr.bf16.mxu0 0
    %1229 = vmatpush1.bf16.msra.mxu0 %v1205
    %1230 = vmatprep.subr.bf16.mxu0 0
    %1231 = vmatpush1.bf16.msra.mxu0 0
    %1232 = vmatprep.subr.bf16.mxu0 0
    %1233 = vmatpush1.bf16.msra.mxu0 0
    %1234 = vmatprep.subr.bf16.mxu0 0
    %1235 = vmatpush1.bf16.msra.mxu0 0
    %1236 = vmatprep.subr.bf16.mxu0 0
    %1237 = vmatpush1.bf16.msra.mxu0 0
    %1238 = vmatprep.subr.bf16.mxu0 0
    %1239 = vmatpush1.bf16.msra.mxu0 0
    %1240 = vmatprep.subr.bf16.mxu0 0
    %1241 = vmatpush1.bf16.msra.mxu0 0
    %1242 = vmatprep.subr.bf16.mxu0 0
    %1243 = vmatpush1.bf16.msra.mxu0 0
    %1244 = vmatprep.subr.bf16.mxu0 0
    %1245 = vmatpush1.bf16.msra.mxu0 0
    %1246 = vmatprep.mubr.bf16.mxu0 0
    %1247 = vmatmul.mubr.bf16.gmra.mrb[0].mxu0 %v1178
    %v1248 = vpop.f32.mrb[0].mxu0
    %v1249 = vadd.f32 0.0, %v1248
    %v1250 = vpop.f32.mrb[0].mxu0
    %v1251 = vpop.f32.mrb[0].mxu0
    %v1252 = vadd.f32 0.0, %v1251
    %v1253 = vpop.f32.mrb[0].mxu0
    %1254 = vmatprep.mubr.bf16.mxu0 0
    %1255 = vmatmul.mubr.bf16.gmra.mrb[0].mxu0 %v1179
    %v1256 = vpop.f32.mrb[0].mxu0
    %v1257 = vadd.f32 0.0, %v1256
    %v1258 = vpop.f32.mrb[0].mxu0
    %v1259 = vpop.f32.mrb[0].mxu0
    %v1260 = vpop.f32.mrb[0].mxu0
    %1261 = vdwg.mxu0
    %v1265 = vunpack.c.l.b16 %v1037
    %v1266 = vunpack.c.l.b16 %v1038
    %v1267 = vunpack.c.l.b16 %v1039
    %v1268 = vpack.c.b16 %v1266, %v1265
    %v1269 = vpack.c.b16 %v1267, %v1267
    %1280 = vrot.lane.b32.xlu0 %v969, 64
    %v1281 = vpop.permute.xlu0 %1280
    %1282 = vrot.lane.b32.xlu0 %v977, 64
    %v1283 = vpop.permute.xlu0 %1282
    %1284 = vrot.lane.b32.xlu0 %v985, 64
    %v1285 = vpop.permute.xlu0 %1284
    %1286 = vrot.lane.b32.xlu0 %v993, 64
    %v1287 = vpop.permute.xlu0 %1286
    %1288 = vrot.lane.b32.xlu0 %v1001, 64
    %v1289 = vpop.permute.xlu0 %1288
    %1290 = vrot.lane.b32.xlu0 %v1009, 64
    %v1291 = vpop.permute.xlu0 %1290
    %1292 = vrot.lane.b32.xlu0 %v1017, 64
    %v1293 = vpop.permute.xlu0 %1292
    %1294 = vrot.lane.b32.xlu0 %v1025, 64
    %v1295 = vpop.permute.xlu0 %1294
    %1304 = vmatprep.subr.bf16.mxu0 0
    %1305 = vmatpush1.bf16.msra.mxu0 %v1281
    %1306 = vmatprep.subr.bf16.mxu0 0
    %1307 = vmatpush1.bf16.msra.mxu0 %v1283
    %1308 = vmatprep.subr.bf16.mxu0 0
    %1309 = vmatpush1.bf16.msra.mxu0 %v1285
    %1310 = vmatprep.subr.bf16.mxu0 0
    %1311 = vmatpush1.bf16.msra.mxu0 %v1287
    %1312 = vmatprep.subr.bf16.mxu0 0
    %1313 = vmatpush1.bf16.msra.mxu0 %v1289
    %1314 = vmatprep.subr.bf16.mxu0 0
    %1315 = vmatpush1.bf16.msra.mxu0 %v1291
    %1316 = vmatprep.subr.bf16.mxu0 0
    %1317 = vmatpush1.bf16.msra.mxu0 %v1293
    %1318 = vmatprep.subr.bf16.mxu0 0
    %1319 = vmatpush1.bf16.msra.mxu0 %v1295
    %1320 = vmatprep.subr.bf16.mxu0 0
    %1321 = vmatpush1.bf16.msra.mxu0 0
    %1322 = vmatprep.subr.bf16.mxu0 0
    %1323 = vmatpush1.bf16.msra.mxu0 0
    %1324 = vmatprep.subr.bf16.mxu0 0
    %1325 = vmatpush1.bf16.msra.mxu0 0
    %1326 = vmatprep.subr.bf16.mxu0 0
    %1327 = vmatpush1.bf16.msra.mxu0 0
    %1328 = vmatprep.subr.bf16.mxu0 0
    %1329 = vmatpush1.bf16.msra.mxu0 0
    %1330 = vmatprep.subr.bf16.mxu0 0
    %1331 = vmatpush1.bf16.msra.mxu0 0
    %1332 = vmatprep.subr.bf16.mxu0 0
    %1333 = vmatpush1.bf16.msra.mxu0 0
    %1334 = vmatprep.subr.bf16.mxu0 0
    %1335 = vmatpush1.bf16.msra.mxu0 0
    %1336 = vmatprep.mubr.bf16.mxu0 0
    %1337 = vmatmul.mubr.bf16.gmra.mrb[0].mxu0 %v1268
    %v1338 = vpop.f32.mrb[0].mxu0
    %v1339 = vadd.f32 %v1249, %v1338
    %v1340 = vpop.f32.mrb[0].mxu0
    %v1341 = vpop.f32.mrb[0].mxu0
    %v1342 = vadd.f32 %v1252, %v1341
    %v1343 = vpop.f32.mrb[0].mxu0
    %1344 = vmatprep.mubr.bf16.mxu0 0
    %1345 = vmatmul.mubr.bf16.gmra.mrb[0].mxu0 %v1269
    %v1346 = vpop.f32.mrb[0].mxu0
    %v1347 = vadd.f32 %v1257, %v1346
    %v1348 = vpop.f32.mrb[0].mxu0
    %v1349 = vpop.f32.mrb[0].mxu0
    %v1350 = vpop.f32.mrb[0].mxu0
    %1351 = vdwg.mxu0
    %s1352 = scalar_lea.vmem %s3, 72
    %v1353 = vld [vmem:[%s1352] sm:$0xf]
    %v1354 = vld [vmem:[%s1352 + $0x4] sm:$0xf]
    %v1355 = vld [vmem:[%s1352 + $0x8] sm:$0x1]
    %v1359 = vunpack.c.l.b16 %v1353
    %v1360 = vunpack.c.l.b16 %v1354
    %v1361 = vunpack.c.l.b16 %v1355
    %v1362 = vpack.c.b16 %v1360, %v1359
    %v1363 = vpack.c.b16 %v1361, %v1361
    %1366 = vmatprep.subr.bf16.mxu0 0
    %1367 = vmatpush1.bf16.msra.mxu0 %v972
    %1368 = vmatprep.subr.bf16.mxu0 0
    %1369 = vmatpush1.bf16.msra.mxu0 %v980
    %1370 = vmatprep.subr.bf16.mxu0 0
    %1371 = vmatpush1.bf16.msra.mxu0 %v988
    %1372 = vmatprep.subr.bf16.mxu0 0
    %1373 = vmatpush1.bf16.msra.mxu0 %v996
    %1374 = vmatprep.subr.bf16.mxu0 0
    %1375 = vmatpush1.bf16.msra.mxu0 %v1004
    %1376 = vmatprep.subr.bf16.mxu0 0
    %1377 = vmatpush1.bf16.msra.mxu0 %v1012
    %1378 = vmatprep.subr.bf16.mxu0 0
    %1379 = vmatpush1.bf16.msra.mxu0 %v1020
    %1380 = vmatprep.subr.bf16.mxu0 0
    %1381 = vmatpush1.bf16.msra.mxu0 %v1028
    %1382 = vmatprep.subr.bf16.mxu0 0
    %1383 = vmatpush1.bf16.msra.mxu0 0
    %1384 = vmatprep.subr.bf16.mxu0 0
    %1385 = vmatpush1.bf16.msra.mxu0 0
    %1386 = vmatprep.subr.bf16.mxu0 0
    %1387 = vmatpush1.bf16.msra.mxu0 0
    %1388 = vmatprep.subr.bf16.mxu0 0
    %1389 = vmatpush1.bf16.msra.mxu0 0
    %1390 = vmatprep.subr.bf16.mxu0 0
    %1391 = vmatpush1.bf16.msra.mxu0 0
    %1392 = vmatprep.subr.bf16.mxu0 0
    %1393 = vmatpush1.bf16.msra.mxu0 0
    %1394 = vmatprep.subr.bf16.mxu0 0
    %1395 = vmatpush1.bf16.msra.mxu0 0
    %1396 = vmatprep.subr.bf16.mxu0 0
    %1397 = vmatpush1.bf16.msra.mxu0 0
    %1398 = vmatprep.mubr.bf16.mxu0 0
    %1399 = vmatmul.mubr.bf16.gmra.mrb[0].mxu0 %v1362
    %v1400 = vpop.f32.mrb[0].mxu0
    %v1401 = vadd.f32 0.0, %v1400
    %v1402 = vpop.f32.mrb[0].mxu0
    %v1403 = vpop.f32.mrb[0].mxu0
    %v1404 = vadd.f32 0.0, %v1403
    %v1405 = vpop.f32.mrb[0].mxu0
    %1406 = vmatprep.mubr.bf16.mxu0 0
    %1407 = vmatmul.mubr.bf16.gmra.mrb[0].mxu0 %v1363
    %v1408 = vpop.f32.mrb[0].mxu0
    %v1409 = vadd.f32 0.0, %v1408
    %v1410 = vpop.f32.mrb[0].mxu0
    %v1411 = vpop.f32.mrb[0].mxu0
    %v1412 = vpop.f32.mrb[0].mxu0
    %1413 = vdwg.mxu0
    %v1417 = vunpack.c.l.b16 %v1041
    %v1418 = vunpack.c.l.b16 %v1042
    %v1419 = vunpack.c.l.b16 %v1043
    %v1420 = vpack.c.b16 %v1418, %v1417
    %v1421 = vpack.c.b16 %v1419, %v1419
    %1424 = vmatprep.subr.bf16.mxu0 0
    %1425 = vmatpush1.bf16.msra.mxu0 %v970
    %1426 = vmatprep.subr.bf16.mxu0 0
    %1427 = vmatpush1.bf16.msra.mxu0 %v978
    %1428 = vmatprep.subr.bf16.mxu0 0
    %1429 = vmatpush1.bf16.msra.mxu0 %v986
    %1430 = vmatprep.subr.bf16.mxu0 0
    %1431 = vmatpush1.bf16.msra.mxu0 %v994
    %1432 = vmatprep.subr.bf16.mxu0 0
    %1433 = vmatpush1.bf16.msra.mxu0 %v1002
    %1434 = vmatprep.subr.bf16.mxu0 0
    %1435 = vmatpush1.bf16.msra.mxu0 %v1010
    %1436 = vmatprep.subr.bf16.mxu0 0
    %1437 = vmatpush1.bf16.msra.mxu0 %v1018
    %1438 = vmatprep.subr.bf16.mxu0 0
    %1439 = vmatpush1.bf16.msra.mxu0 %v1026
    %1440 = vmatprep.subr.bf16.mxu0 0
    %1441 = vmatpush1.bf16.msra.mxu0 0
    %1442 = vmatprep.subr.bf16.mxu0 0
    %1443 = vmatpush1.bf16.msra.mxu0 0
    %1444 = vmatprep.subr.bf16.mxu0 0
    %1445 = vmatpush1.bf16.msra.mxu0 0
    %1446 = vmatprep.subr.bf16.mxu0 0
    %1447 = vmatpush1.bf16.msra.mxu0 0
    %1448 = vmatprep.subr.bf16.mxu0 0
    %1449 = vmatpush1.bf16.msra.mxu0 0
    %1450 = vmatprep.subr.bf16.mxu0 0
    %1451 = vmatpush1.bf16.msra.mxu0 0
    %1452 = vmatprep.subr.bf16.mxu0 0
    %1453 = vmatpush1.bf16.msra.mxu0 0
    %1454 = vmatprep.subr.bf16.mxu0 0
    %1455 = vmatpush1.bf16.msra.mxu0 0
    %1456 = vmatprep.mubr.bf16.mxu0 0
    %1457 = vmatmul.mubr.bf16.gmra.mrb[0].mxu0 %v1420
    %v1458 = vpop.f32.mrb[0].mxu0
    %v1459 = vadd.f32 %v1401, %v1458
    %v1460 = vpop.f32.mrb[0].mxu0
    %v1461 = vpop.f32.mrb[0].mxu0
    %v1462 = vadd.f32 %v1404, %v1461
    %v1463 = vpop.f32.mrb[0].mxu0
    %1464 = vmatprep.mubr.bf16.mxu0 0
    %1465 = vmatmul.mubr.bf16.gmra.mrb[0].mxu0 %v1421
    %v1466 = vpop.f32.mrb[0].mxu0
    %v1467 = vadd.f32 %v1409, %v1466
    %v1468 = vpop.f32.mrb[0].mxu0
    %v1469 = vpop.f32.mrb[0].mxu0
    %v1470 = vpop.f32.mrb[0].mxu0
    %1471 = vdwg.mxu0
    %s1472 = scalar_lea.vmem %s3, 84
    %v1473 = vld [vmem:[%s1472] sm:$0xf]
    %v1474 = vld [vmem:[%s1472 + $0x4] sm:$0xf]
    %v1475 = vld [vmem:[%s1472 + $0x8] sm:$0x1]
    %v1479 = vunpack.c.l.b16 %v1473
    %v1480 = vunpack.c.l.b16 %v1474
    %v1481 = vunpack.c.l.b16 %v1475
    %v1482 = vpack.c.b16 %v1480, %v1479
    %v1483 = vpack.c.b16 %v1481, %v1481
    %1494 = vrot.lane.b32.xlu0 %v972, 64
    %v1495 = vpop.permute.xlu0 %1494
    %1496 = vrot.lane.b32.xlu0 %v980, 64
    %v1497 = vpop.permute.xlu0 %1496
    %1498 = vrot.lane.b32.xlu0 %v988, 64
    %v1499 = vpop.permute.xlu0 %1498
    %1500 = vrot.lane.b32.xlu0 %v996, 64
    %v1501 = vpop.permute.xlu0 %1500
    %1502 = vrot.lane.b32.xlu0 %v1004, 64
    %v1503 = vpop.permute.xlu0 %1502
    %1504 = vrot.lane.b32.xlu0 %v1012, 64
    %v1505 = vpop.permute.xlu0 %1504
    %1506 = vrot.lane.b32.xlu0 %v1020, 64
    %v1507 = vpop.permute.xlu0 %1506
    %1508 = vrot.lane.b32.xlu0 %v1028, 64
    %v1509 = vpop.permute.xlu0 %1508
    %1518 = vmatprep.subr.bf16.mxu0 0
    %1519 = vmatpush1.bf16.msra.mxu0 %v1495
    %1520 = vmatprep.subr.bf16.mxu0 0
    %1521 = vmatpush1.bf16.msra.mxu0 %v1497
    %1522 = vmatprep.subr.bf16.mxu0 0
    %1523 = vmatpush1.bf16.msra.mxu0 %v1499
    %1524 = vmatprep.subr.bf16.mxu0 0
    %1525 = vmatpush1.bf16.msra.mxu0 %v1501
    %1526 = vmatprep.subr.bf16.mxu0 0
    %1527 = vmatpush1.bf16.msra.mxu0 %v1503
    %1528 = vmatprep.subr.bf16.mxu0 0
    %1529 = vmatpush1.bf16.msra.mxu0 %v1505
    %1530 = vmatprep.subr.bf16.mxu0 0
    %1531 = vmatpush1.bf16.msra.mxu0 %v1507
    %1532 = vmatprep.subr.bf16.mxu0 0
    %1533 = vmatpush1.bf16.msra.mxu0 %v1509
    %1534 = vmatprep.subr.bf16.mxu0 0
    %1535 = vmatpush1.bf16.msra.mxu0 0
    %1536 = vmatprep.subr.bf16.mxu0 0
    %1537 = vmatpush1.bf16.msra.mxu0 0
    %1538 = vmatprep.subr.bf16.mxu0 0
    %1539 = vmatpush1.bf16.msra.mxu0 0
    %1540 = vmatprep.subr.bf16.mxu0 0
    %1541 = vmatpush1.bf16.msra.mxu0 0
    %1542 = vmatprep.subr.bf16.mxu0 0
    %1543 = vmatpush1.bf16.msra.mxu0 0
    %1544 = vmatprep.subr.bf16.mxu0 0
    %1545 = vmatpush1.bf16.msra.mxu0 0
    %1546 = vmatprep.subr.bf16.mxu0 0
    %1547 = vmatpush1.bf16.msra.mxu0 0
    %1548 = vmatprep.subr.bf16.mxu0 0
    %1549 = vmatpush1.bf16.msra.mxu0 0
    %1550 = vmatprep.mubr.bf16.mxu0 0
    %1551 = vmatmul.mubr.bf16.gmra.mrb[0].mxu0 %v1482
    %v1552 = vpop.f32.mrb[0].mxu0
    %v1553 = vadd.f32 0.0, %v1552
    %v1554 = vpop.f32.mrb[0].mxu0
    %v1555 = vpop.f32.mrb[0].mxu0
    %v1556 = vadd.f32 0.0, %v1555
    %v1557 = vpop.f32.mrb[0].mxu0
    %1558 = vmatprep.mubr.bf16.mxu0 0
    %1559 = vmatmul.mubr.bf16.gmra.mrb[0].mxu0 %v1483
    %v1560 = vpop.f32.mrb[0].mxu0
    %v1561 = vadd.f32 0.0, %v1560
    %v1562 = vpop.f32.mrb[0].mxu0
    %v1563 = vpop.f32.mrb[0].mxu0
    %v1564 = vpop.f32.mrb[0].mxu0
    %1565 = vdwg.mxu0
    %v1569 = vunpack.c.l.b16 %v1045
    %v1570 = vunpack.c.l.b16 %v1046
    %v1571 = vunpack.c.l.b16 %v1047
    %v1572 = vpack.c.b16 %v1570, %v1569
    %v1573 = vpack.c.b16 %v1571, %v1571
    %1584 = vrot.lane.b32.xlu0 %v970, 64
    %v1585 = vpop.permute.xlu0 %1584
    %1586 = vrot.lane.b32.xlu0 %v978, 64
    %v1587 = vpop.permute.xlu0 %1586
    %1588 = vrot.lane.b32.xlu0 %v986, 64
    %v1589 = vpop.permute.xlu0 %1588
    %1590 = vrot.lane.b32.xlu0 %v994, 64
    %v1591 = vpop.permute.xlu0 %1590
    %1592 = vrot.lane.b32.xlu0 %v1002, 64
    %v1593 = vpop.permute.xlu0 %1592
    %1594 = vrot.lane.b32.xlu0 %v1010, 64
    %v1595 = vpop.permute.xlu0 %1594
    %1596 = vrot.lane.b32.xlu0 %v1018, 64
    %v1597 = vpop.permute.xlu0 %1596
    %1598 = vrot.lane.b32.xlu0 %v1026, 64
    %v1599 = vpop.permute.xlu0 %1598
    %1608 = vmatprep.subr.bf16.mxu0 0
    %1609 = vmatpush1.bf16.msra.mxu0 %v1585
    %1610 = vmatprep.subr.bf16.mxu0 0
    %1611 = vmatpush1.bf16.msra.mxu0 %v1587
    %1612 = vmatprep.subr.bf16.mxu0 0
    %1613 = vmatpush1.bf16.msra.mxu0 %v1589
    %1614 = vmatprep.subr.bf16.mxu0 0
    %1615 = vmatpush1.bf16.msra.mxu0 %v1591
    %1616 = vmatprep.subr.bf16.mxu0 0
    %1617 = vmatpush1.bf16.msra.mxu0 %v1593
    %1618 = vmatprep.subr.bf16.mxu0 0
    %1619 = vmatpush1.bf16.msra.mxu0 %v1595
    %1620 = vmatprep.subr.bf16.mxu0 0
    %1621 = vmatpush1.bf16.msra.mxu0 %v1597
    %1622 = vmatprep.subr.bf16.mxu0 0
    %1623 = vmatpush1.bf16.msra.mxu0 %v1599
    %1624 = vmatprep.subr.bf16.mxu0 0
    %1625 = vmatpush1.bf16.msra.mxu0 0
    %1626 = vmatprep.subr.bf16.mxu0 0
    %1627 = vmatpush1.bf16.msra.mxu0 0
    %1628 = vmatprep.subr.bf16.mxu0 0
    %1629 = vmatpush1.bf16.msra.mxu0 0
    %1630 = vmatprep.subr.bf16.mxu0 0
    %1631 = vmatpush1.bf16.msra.mxu0 0
    %1632 = vmatprep.subr.bf16.mxu0 0
    %1633 = vmatpush1.bf16.msra.mxu0 0
    %1634 = vmatprep.subr.bf16.mxu0 0
    %1635 = vmatpush1.bf16.msra.mxu0 0
    %1636 = vmatprep.subr.bf16.mxu0 0
    %1637 = vmatpush1.bf16.msra.mxu0 0
    %1638 = vmatprep.subr.bf16.mxu0 0
    %1639 = vmatpush1.bf16.msra.mxu0 0
    %1640 = vmatprep.mubr.bf16.mxu0 0
    %1641 = vmatmul.mubr.bf16.gmra.mrb[0].mxu0 %v1572
    %v1642 = vpop.f32.mrb[0].mxu0
    %v1643 = vadd.f32 %v1553, %v1642
    %v1644 = vpop.f32.mrb[0].mxu0
    %v1645 = vpop.f32.mrb[0].mxu0
    %v1646 = vadd.f32 %v1556, %v1645
    %v1647 = vpop.f32.mrb[0].mxu0
    %1648 = vmatprep.mubr.bf16.mxu0 0
    %1649 = vmatmul.mubr.bf16.gmra.mrb[0].mxu0 %v1573
    %v1650 = vpop.f32.mrb[0].mxu0
    %v1651 = vadd.f32 %v1561, %v1650
    %v1652 = vpop.f32.mrb[0].mxu0
    %v1653 = vpop.f32.mrb[0].mxu0
    %v1654 = vpop.f32.mrb[0].mxu0
    %1655 = vdwg.mxu0
    %s1656 = scalar_lea.vmem %s3, 96
    %v1657 = vld [vmem:[%s1656] sm:$0xf]
    %v1658 = vld [vmem:[%s1656 + $0x4] sm:$0xf]
    %v1659 = vld [vmem:[%s1656 + $0x8] sm:$0x1]
    %v1663 = vunpack.c.l.b16 %v1657
    %v1664 = vunpack.c.l.b16 %v1658
    %v1665 = vunpack.c.l.b16 %v1659
    %v1666 = vpack.c.b16 %v1664, %v1663
    %v1667 = vpack.c.b16 %v1665, %v1665
    %1670 = vmatprep.subr.bf16.mxu0 0
    %1671 = vmatpush1.bf16.msra.mxu0 %v973
    %1672 = vmatprep.subr.bf16.mxu0 0
    %1673 = vmatpush1.bf16.msra.mxu0 %v981
    %1674 = vmatprep.subr.bf16.mxu0 0
    %1675 = vmatpush1.bf16.msra.mxu0 %v989
    %1676 = vmatprep.subr.bf16.mxu0 0
    %1677 = vmatpush1.bf16.msra.mxu0 %v997
    %1678 = vmatprep.subr.bf16.mxu0 0
    %1679 = vmatpush1.bf16.msra.mxu0 %v1005
    %1680 = vmatprep.subr.bf16.mxu0 0
    %1681 = vmatpush1.bf16.msra.mxu0 %v1013
    %1682 = vmatprep.subr.bf16.mxu0 0
    %1683 = vmatpush1.bf16.msra.mxu0 %v1021
    %1684 = vmatprep.subr.bf16.mxu0 0
    %1685 = vmatpush1.bf16.msra.mxu0 %v1029
    %1686 = vmatprep.subr.bf16.mxu0 0
    %1687 = vmatpush1.bf16.msra.mxu0 0
    %1688 = vmatprep.subr.bf16.mxu0 0
    %1689 = vmatpush1.bf16.msra.mxu0 0
    %1690 = vmatprep.subr.bf16.mxu0 0
    %1691 = vmatpush1.bf16.msra.mxu0 0
    %1692 = vmatprep.subr.bf16.mxu0 0
    %1693 = vmatpush1.bf16.msra.mxu0 0
    %1694 = vmatprep.subr.bf16.mxu0 0
    %1695 = vmatpush1.bf16.msra.mxu0 0
    %1696 = vmatprep.subr.bf16.mxu0 0
    %1697 = vmatpush1.bf16.msra.mxu0 0
    %1698 = vmatprep.subr.bf16.mxu0 0
    %1699 = vmatpush1.bf16.msra.mxu0 0
    %1700 = vmatprep.subr.bf16.mxu0 0
    %1701 = vmatpush1.bf16.msra.mxu0 0
    %1702 = vmatprep.mubr.bf16.mxu0 0
    %1703 = vmatmul.mubr.bf16.gmra.mrb[0].mxu0 %v1666
    %v1704 = vpop.f32.mrb[0].mxu0
    %v1705 = vadd.f32 0.0, %v1704
    %v1706 = vpop.f32.mrb[0].mxu0
    %v1707 = vpop.f32.mrb[0].mxu0
    %v1708 = vadd.f32 0.0, %v1707
    %v1709 = vpop.f32.mrb[0].mxu0
    %1710 = vmatprep.mubr.bf16.mxu0 0
    %1711 = vmatmul.mubr.bf16.gmra.mrb[0].mxu0 %v1667
    %v1712 = vpop.f32.mrb[0].mxu0
    %v1713 = vadd.f32 0.0, %v1712
    %v1714 = vpop.f32.mrb[0].mxu0
    %v1715 = vpop.f32.mrb[0].mxu0
    %v1716 = vpop.f32.mrb[0].mxu0
    %1717 = vdwg.mxu0
    %v1718 = vadd.f32 %v1155, %v1705
    %v1719 = vadd.f32 %v1158, %v1708
    %v1720 = vadd.f32 %v1163, %v1713
    %s1721 = scalar_lea.vmem %s3, 108
    %v1722 = vld [vmem:[%s1721] sm:$0xf]
    %v1723 = vld [vmem:[%s1721 + $0x4] sm:$0xf]
    %v1724 = vld [vmem:[%s1721 + $0x8] sm:$0x1]
    %v1728 = vunpack.c.l.b16 %v1722
    %v1729 = vunpack.c.l.b16 %v1723
    %v1730 = vunpack.c.l.b16 %v1724
    %v1731 = vpack.c.b16 %v1729, %v1728
    %v1732 = vpack.c.b16 %v1730, %v1730
    %1743 = vrot.lane.b32.xlu0 %v973, 64
    %v1744 = vpop.permute.xlu0 %1743
    %1745 = vrot.lane.b32.xlu0 %v981, 64
    %v1746 = vpop.permute.xlu0 %1745
    %1747 = vrot.lane.b32.xlu0 %v989, 64
    %v1748 = vpop.permute.xlu0 %1747
    %1749 = vrot.lane.b32.xlu0 %v997, 64
    %v1750 = vpop.permute.xlu0 %1749
    %1751 = vrot.lane.b32.xlu0 %v1005, 64
    %v1752 = vpop.permute.xlu0 %1751
    %1753 = vrot.lane.b32.xlu0 %v1013, 64
    %v1754 = vpop.permute.xlu0 %1753
    %1755 = vrot.lane.b32.xlu0 %v1021, 64
    %v1756 = vpop.permute.xlu0 %1755
    %1757 = vrot.lane.b32.xlu0 %v1029, 64
    %v1758 = vpop.permute.xlu0 %1757
    %1767 = vmatprep.subr.bf16.mxu0 0
    %1768 = vmatpush1.bf16.msra.mxu0 %v1744
    %1769 = vmatprep.subr.bf16.mxu0 0
    %1770 = vmatpush1.bf16.msra.mxu0 %v1746
    %1771 = vmatprep.subr.bf16.mxu0 0
    %1772 = vmatpush1.bf16.msra.mxu0 %v1748
    %1773 = vmatprep.subr.bf16.mxu0 0
    %1774 = vmatpush1.bf16.msra.mxu0 %v1750
    %1775 = vmatprep.subr.bf16.mxu0 0
    %1776 = vmatpush1.bf16.msra.mxu0 %v1752
    %1777 = vmatprep.subr.bf16.mxu0 0
    %1778 = vmatpush1.bf16.msra.mxu0 %v1754
    %1779 = vmatprep.subr.bf16.mxu0 0
    %1780 = vmatpush1.bf16.msra.mxu0 %v1756
    %1781 = vmatprep.subr.bf16.mxu0 0
    %1782 = vmatpush1.bf16.msra.mxu0 %v1758
    %1783 = vmatprep.subr.bf16.mxu0 0
    %1784 = vmatpush1.bf16.msra.mxu0 0
    %1785 = vmatprep.subr.bf16.mxu0 0
    %1786 = vmatpush1.bf16.msra.mxu0 0
    %1787 = vmatprep.subr.bf16.mxu0 0
    %1788 = vmatpush1.bf16.msra.mxu0 0
    %1789 = vmatprep.subr.bf16.mxu0 0
    %1790 = vmatpush1.bf16.msra.mxu0 0
    %1791 = vmatprep.subr.bf16.mxu0 0
    %1792 = vmatpush1.bf16.msra.mxu0 0
    %1793 = vmatprep.subr.bf16.mxu0 0
    %1794 = vmatpush1.bf16.msra.mxu0 0
    %1795 = vmatprep.subr.bf16.mxu0 0
    %1796 = vmatpush1.bf16.msra.mxu0 0
    %1797 = vmatprep.subr.bf16.mxu0 0
    %1798 = vmatpush1.bf16.msra.mxu0 0
    %1799 = vmatprep.mubr.bf16.mxu0 0
    %1800 = vmatmul.mubr.bf16.gmra.mrb[0].mxu0 %v1731
    %v1801 = vpop.f32.mrb[0].mxu0
    %v1802 = vadd.f32 0.0, %v1801
    %v1803 = vpop.f32.mrb[0].mxu0
    %v1804 = vpop.f32.mrb[0].mxu0
    %v1805 = vadd.f32 0.0, %v1804
    %v1806 = vpop.f32.mrb[0].mxu0
    %1807 = vmatprep.mubr.bf16.mxu0 0
    %1808 = vmatmul.mubr.bf16.gmra.mrb[0].mxu0 %v1732
    %v1809 = vpop.f32.mrb[0].mxu0
    %v1810 = vadd.f32 0.0, %v1809
    %v1811 = vpop.f32.mrb[0].mxu0
    %v1812 = vpop.f32.mrb[0].mxu0
    %v1813 = vpop.f32.mrb[0].mxu0
    %1814 = vdwg.mxu0
    %v1815 = vadd.f32 %v1339, %v1802
    %v1816 = vadd.f32 %v1342, %v1805
    %v1817 = vadd.f32 %v1347, %v1810
    %s1818 = scalar_lea.vmem %s3, 120
    %v1819 = vld [vmem:[%s1818] sm:$0xf]
    %v1820 = vld [vmem:[%s1818 + $0x4] sm:$0xf]
    %v1821 = vld [vmem:[%s1818 + $0x8] sm:$0x1]
    %v1825 = vunpack.c.l.b16 %v1819
    %v1826 = vunpack.c.l.b16 %v1820
    %v1827 = vunpack.c.l.b16 %v1821
    %v1828 = vpack.c.b16 %v1826, %v1825
    %v1829 = vpack.c.b16 %v1827, %v1827
    %1832 = vmatprep.subr.bf16.mxu0 0
    %1833 = vmatpush1.bf16.msra.mxu0 %v974
    %1834 = vmatprep.subr.bf16.mxu0 0
    %1835 = vmatpush1.bf16.msra.mxu0 %v982
    %1836 = vmatprep.subr.bf16.mxu0 0
    %1837 = vmatpush1.bf16.msra.mxu0 %v990
    %1838 = vmatprep.subr.bf16.mxu0 0
    %1839 = vmatpush1.bf16.msra.mxu0 %v998
    %1840 = vmatprep.subr.bf16.mxu0 0
    %1841 = vmatpush1.bf16.msra.mxu0 %v1006
    %1842 = vmatprep.subr.bf16.mxu0 0
    %1843 = vmatpush1.bf16.msra.mxu0 %v1014
    %1844 = vmatprep.subr.bf16.mxu0 0
    %1845 = vmatpush1.bf16.msra.mxu0 %v1022
    %1846 = vmatprep.subr.bf16.mxu0 0
    %1847 = vmatpush1.bf16.msra.mxu0 %v1030
    %1848 = vmatprep.subr.bf16.mxu0 0
    %1849 = vmatpush1.bf16.msra.mxu0 0
    %1850 = vmatprep.subr.bf16.mxu0 0
    %1851 = vmatpush1.bf16.msra.mxu0 0
    %1852 = vmatprep.subr.bf16.mxu0 0
    %1853 = vmatpush1.bf16.msra.mxu0 0
    %1854 = vmatprep.subr.bf16.mxu0 0
    %1855 = vmatpush1.bf16.msra.mxu0 0
    %1856 = vmatprep.subr.bf16.mxu0 0
    %1857 = vmatpush1.bf16.msra.mxu0 0
    %1858 = vmatprep.subr.bf16.mxu0 0
    %1859 = vmatpush1.bf16.msra.mxu0 0
    %1860 = vmatprep.subr.bf16.mxu0 0
    %1861 = vmatpush1.bf16.msra.mxu0 0
    %1862 = vmatprep.subr.bf16.mxu0 0
    %1863 = vmatpush1.bf16.msra.mxu0 0
    %1864 = vmatprep.mubr.bf16.mxu0 0
    %1865 = vmatmul.mubr.bf16.gmra.mrb[0].mxu0 %v1828
    %v1866 = vpop.f32.mrb[0].mxu0
    %v1867 = vadd.f32 0.0, %v1866
    %v1868 = vpop.f32.mrb[0].mxu0
    %v1869 = vpop.f32.mrb[0].mxu0
    %v1870 = vadd.f32 0.0, %v1869
    %v1871 = vpop.f32.mrb[0].mxu0
    %1872 = vmatprep.mubr.bf16.mxu0 0
    %1873 = vmatmul.mubr.bf16.gmra.mrb[0].mxu0 %v1829
    %v1874 = vpop.f32.mrb[0].mxu0
    %v1875 = vadd.f32 0.0, %v1874
    %v1876 = vpop.f32.mrb[0].mxu0
    %v1877 = vpop.f32.mrb[0].mxu0
    %v1878 = vpop.f32.mrb[0].mxu0
    %1879 = vdwg.mxu0
    %v1880 = vadd.f32 %v1459, %v1867
    %v1881 = vadd.f32 %v1462, %v1870
    %v1882 = vadd.f32 %v1467, %v1875
    %s1883 = scalar_lea.vmem %s3, 132
    %v1884 = vld [vmem:[%s1883] sm:$0xf]
    %v1885 = vld [vmem:[%s1883 + $0x4] sm:$0xf]
    %v1886 = vld [vmem:[%s1883 + $0x8] sm:$0x1]
    %v1890 = vunpack.c.l.b16 %v1884
    %v1891 = vunpack.c.l.b16 %v1885
    %v1892 = vunpack.c.l.b16 %v1886
    %v1893 = vpack.c.b16 %v1891, %v1890
    %v1894 = vpack.c.b16 %v1892, %v1892
    %1905 = vrot.lane.b32.xlu0 %v974, 64
    %v1906 = vpop.permute.xlu0 %1905
    %1907 = vrot.lane.b32.xlu0 %v982, 64
    %v1908 = vpop.permute.xlu0 %1907
    %1909 = vrot.lane.b32.xlu0 %v990, 64
    %v1910 = vpop.permute.xlu0 %1909
    %1911 = vrot.lane.b32.xlu0 %v998, 64
    %v1912 = vpop.permute.xlu0 %1911
    %1913 = vrot.lane.b32.xlu0 %v1006, 64
    %v1914 = vpop.permute.xlu0 %1913
    %1915 = vrot.lane.b32.xlu0 %v1014, 64
    %v1916 = vpop.permute.xlu0 %1915
    %1917 = vrot.lane.b32.xlu0 %v1022, 64
    %v1918 = vpop.permute.xlu0 %1917
    %1919 = vrot.lane.b32.xlu0 %v1030, 64
    %v1920 = vpop.permute.xlu0 %1919
    %1929 = vmatprep.subr.bf16.mxu0 0
    %1930 = vmatpush1.bf16.msra.mxu0 %v1906
    %1931 = vmatprep.subr.bf16.mxu0 0
    %1932 = vmatpush1.bf16.msra.mxu0 %v1908
    %1933 = vmatprep.subr.bf16.mxu0 0
    %1934 = vmatpush1.bf16.msra.mxu0 %v1910
    %1935 = vmatprep.subr.bf16.mxu0 0
    %1936 = vmatpush1.bf16.msra.mxu0 %v1912
    %1937 = vmatprep.subr.bf16.mxu0 0
    %1938 = vmatpush1.bf16.msra.mxu0 %v1914
    %1939 = vmatprep.subr.bf16.mxu0 0
    %1940 = vmatpush1.bf16.msra.mxu0 %v1916
    %1941 = vmatprep.subr.bf16.mxu0 0
    %1942 = vmatpush1.bf16.msra.mxu0 %v1918
    %1943 = vmatprep.subr.bf16.mxu0 0
    %1944 = vmatpush1.bf16.msra.mxu0 %v1920
    %1945 = vmatprep.subr.bf16.mxu0 0
    %1946 = vmatpush1.bf16.msra.mxu0 0
    %1947 = vmatprep.subr.bf16.mxu0 0
    %1948 = vmatpush1.bf16.msra.mxu0 0
    %1949 = vmatprep.subr.bf16.mxu0 0
    %1950 = vmatpush1.bf16.msra.mxu0 0
    %1951 = vmatprep.subr.bf16.mxu0 0
    %1952 = vmatpush1.bf16.msra.mxu0 0
    %1953 = vmatprep.subr.bf16.mxu0 0
    %1954 = vmatpush1.bf16.msra.mxu0 0
    %1955 = vmatprep.subr.bf16.mxu0 0
    %1956 = vmatpush1.bf16.msra.mxu0 0
    %1957 = vmatprep.subr.bf16.mxu0 0
    %1958 = vmatpush1.bf16.msra.mxu0 0
    %1959 = vmatprep.subr.bf16.mxu0 0
    %1960 = vmatpush1.bf16.msra.mxu0 0
    %1961 = vmatprep.mubr.bf16.mxu0 0
    %1962 = vmatmul.mubr.bf16.gmra.mrb[0].mxu0 %v1893
    %v1963 = vpop.f32.mrb[0].mxu0
    %v1964 = vadd.f32 0.0, %v1963
    %v1965 = vpop.f32.mrb[0].mxu0
    %v1966 = vpop.f32.mrb[0].mxu0
    %v1967 = vadd.f32 0.0, %v1966
    %v1968 = vpop.f32.mrb[0].mxu0
    %1969 = vmatprep.mubr.bf16.mxu0 0
    %1970 = vmatmul.mubr.bf16.gmra.mrb[0].mxu0 %v1894
    %v1971 = vpop.f32.mrb[0].mxu0
    %v1972 = vadd.f32 0.0, %v1971
    %v1973 = vpop.f32.mrb[0].mxu0
    %v1974 = vpop.f32.mrb[0].mxu0
    %v1975 = vpop.f32.mrb[0].mxu0
    %1976 = vdwg.mxu0
    %v1977 = vadd.f32 %v1643, %v1964
    %v1978 = vadd.f32 %v1646, %v1967
    %v1979 = vadd.f32 %v1651, %v1972
    %s1980 = scalar_lea.vmem %s3, 144
    %v1981 = vld [vmem:[%s1980] sm:$0xf]
    %v1982 = vld [vmem:[%s1980 + $0x4] sm:$0xf]
    %v1983 = vld [vmem:[%s1980 + $0x8] sm:$0x1]
    %v1987 = vunpack.c.l.b16 %v1981
    %v1988 = vunpack.c.l.b16 %v1982
    %v1989 = vunpack.c.l.b16 %v1983
    %v1990 = vpack.c.b16 %v1988, %v1987
    %v1991 = vpack.c.b16 %v1989, %v1989
    %1994 = vmatprep.subr.bf16.mxu0 0
    %1995 = vmatpush1.bf16.msra.mxu0 %v975
    %1996 = vmatprep.subr.bf16.mxu0 0
    %1997 = vmatpush1.bf16.msra.mxu0 %v983
    %1998 = vmatprep.subr.bf16.mxu0 0
    %1999 = vmatpush1.bf16.msra.mxu0 %v991
    %2000 = vmatprep.subr.bf16.mxu0 0
    %2001 = vmatpush1.bf16.msra.mxu0 %v999
    %2002 = vmatprep.subr.bf16.mxu0 0
    %2003 = vmatpush1.bf16.msra.mxu0 %v1007
    %2004 = vmatprep.subr.bf16.mxu0 0
    %2005 = vmatpush1.bf16.msra.mxu0 %v1015
    %2006 = vmatprep.subr.bf16.mxu0 0
    %2007 = vmatpush1.bf16.msra.mxu0 %v1023
    %2008 = vmatprep.subr.bf16.mxu0 0
    %2009 = vmatpush1.bf16.msra.mxu0 %v1031
    %2010 = vmatprep.subr.bf16.mxu0 0
    %2011 = vmatpush1.bf16.msra.mxu0 0
    %2012 = vmatprep.subr.bf16.mxu0 0
    %2013 = vmatpush1.bf16.msra.mxu0 0
    %2014 = vmatprep.subr.bf16.mxu0 0
    %2015 = vmatpush1.bf16.msra.mxu0 0
    %2016 = vmatprep.subr.bf16.mxu0 0
    %2017 = vmatpush1.bf16.msra.mxu0 0
    %2018 = vmatprep.subr.bf16.mxu0 0
    %2019 = vmatpush1.bf16.msra.mxu0 0
    %2020 = vmatprep.subr.bf16.mxu0 0
    %2021 = vmatpush1.bf16.msra.mxu0 0
    %2022 = vmatprep.subr.bf16.mxu0 0
    %2023 = vmatpush1.bf16.msra.mxu0 0
    %2024 = vmatprep.subr.bf16.mxu0 0
    %2025 = vmatpush1.bf16.msra.mxu0 0
    %2026 = vmatprep.mubr.bf16.mxu0 0
    %2027 = vmatmul.mubr.bf16.gmra.mrb[0].mxu0 %v1990
    %v2028 = vpop.f32.mrb[0].mxu0
    %v2029 = vadd.f32 0.0, %v2028
    %v2030 = vpop.f32.mrb[0].mxu0
    %v2031 = vpop.f32.mrb[0].mxu0
    %v2032 = vadd.f32 0.0, %v2031
    %v2033 = vpop.f32.mrb[0].mxu0
    %2034 = vmatprep.mubr.bf16.mxu0 0
    %2035 = vmatmul.mubr.bf16.gmra.mrb[0].mxu0 %v1991
    %v2036 = vpop.f32.mrb[0].mxu0
    %v2037 = vadd.f32 0.0, %v2036
    %v2038 = vpop.f32.mrb[0].mxu0
    %v2039 = vpop.f32.mrb[0].mxu0
    %v2040 = vpop.f32.mrb[0].mxu0
    %2041 = vdwg.mxu0
    %v2042 = vadd.f32 %v1718, %v2029
    %v2043 = vadd.f32 %v1719, %v2032
    %v2044 = vadd.f32 %v1720, %v2037
    %s2045 = scalar_lea.vmem %s3, 156
    %v2046 = vld [vmem:[%s2045] sm:$0xf]
    %v2047 = vld [vmem:[%s2045 + $0x4] sm:$0xf]
    %v2048 = vld [vmem:[%s2045 + $0x8] sm:$0x1]
    %v2052 = vunpack.c.l.b16 %v2046
    %v2053 = vunpack.c.l.b16 %v2047
    %v2054 = vunpack.c.l.b16 %v2048
    %v2055 = vpack.c.b16 %v2053, %v2052
    %v2056 = vpack.c.b16 %v2054, %v2054
    %2067 = vrot.lane.b32.xlu0 %v975, 64
    %v2068 = vpop.permute.xlu0 %2067
    %2069 = vrot.lane.b32.xlu0 %v983, 64
    %v2070 = vpop.permute.xlu0 %2069
    %2071 = vrot.lane.b32.xlu0 %v991, 64
    %v2072 = vpop.permute.xlu0 %2071
    %2073 = vrot.lane.b32.xlu0 %v999, 64
    %v2074 = vpop.permute.xlu0 %2073
    %2075 = vrot.lane.b32.xlu0 %v1007, 64
    %v2076 = vpop.permute.xlu0 %2075
    %2077 = vrot.lane.b32.xlu0 %v1015, 64
    %v2078 = vpop.permute.xlu0 %2077
    %2079 = vrot.lane.b32.xlu0 %v1023, 64
    %v2080 = vpop.permute.xlu0 %2079
    %2081 = vrot.lane.b32.xlu0 %v1031, 64
    %v2082 = vpop.permute.xlu0 %2081
    %2091 = vmatprep.subr.bf16.mxu0 0
    %2092 = vmatpush1.bf16.msra.mxu0 %v2068
    %2093 = vmatprep.subr.bf16.mxu0 0
    %2094 = vmatpush1.bf16.msra.mxu0 %v2070
    %2095 = vmatprep.subr.bf16.mxu0 0
    %2096 = vmatpush1.bf16.msra.mxu0 %v2072
    %2097 = vmatprep.subr.bf16.mxu0 0
    %2098 = vmatpush1.bf16.msra.mxu0 %v2074
    %2099 = vmatprep.subr.bf16.mxu0 0
    %2100 = vmatpush1.bf16.msra.mxu0 %v2076
    %2101 = vmatprep.subr.bf16.mxu0 0
    %2102 = vmatpush1.bf16.msra.mxu0 %v2078
    %2103 = vmatprep.subr.bf16.mxu0 0
    %2104 = vmatpush1.bf16.msra.mxu0 %v2080
    %2105 = vmatprep.subr.bf16.mxu0 0
    %2106 = vmatpush1.bf16.msra.mxu0 %v2082
    %2107 = vmatprep.subr.bf16.mxu0 0
    %2108 = vmatpush1.bf16.msra.mxu0 0
    %2109 = vmatprep.subr.bf16.mxu0 0
    %2110 = vmatpush1.bf16.msra.mxu0 0
    %2111 = vmatprep.subr.bf16.mxu0 0
    %2112 = vmatpush1.bf16.msra.mxu0 0
    %2113 = vmatprep.subr.bf16.mxu0 0
    %2114 = vmatpush1.bf16.msra.mxu0 0
    %2115 = vmatprep.subr.bf16.mxu0 0
    %2116 = vmatpush1.bf16.msra.mxu0 0
    %2117 = vmatprep.subr.bf16.mxu0 0
    %2118 = vmatpush1.bf16.msra.mxu0 0
    %2119 = vmatprep.subr.bf16.mxu0 0
    %2120 = vmatpush1.bf16.msra.mxu0 0
    %2121 = vmatprep.subr.bf16.mxu0 0
    %2122 = vmatpush1.bf16.msra.mxu0 0
    %2123 = vmatprep.mubr.bf16.mxu0 0
    %2124 = vmatmul.mubr.bf16.gmra.mrb[0].mxu0 %v2055
    %v2125 = vpop.f32.mrb[0].mxu0
    %v2126 = vadd.f32 0.0, %v2125
    %v2127 = vpop.f32.mrb[0].mxu0
    %v2128 = vpop.f32.mrb[0].mxu0
    %v2129 = vadd.f32 0.0, %v2128
    %v2130 = vpop.f32.mrb[0].mxu0
    %2131 = vmatprep.mubr.bf16.mxu0 0
    %2132 = vmatmul.mubr.bf16.gmra.mrb[0].mxu0 %v2056
    %v2133 = vpop.f32.mrb[0].mxu0
    %v2134 = vadd.f32 0.0, %v2133
    %v2135 = vpop.f32.mrb[0].mxu0
    %v2136 = vpop.f32.mrb[0].mxu0
    %v2137 = vpop.f32.mrb[0].mxu0
    %2138 = vdwg.mxu0
    %v2139 = vadd.f32 %v1815, %v2126
    %v2140 = vadd.f32 %v1816, %v2129
    %v2141 = vadd.f32 %v1817, %v2134
    %s2142 = scalar_lea.vmem %s3, 168
    %v2143 = vld [vmem:[%s2142] sm:$0xf]
    %v2144 = vld [vmem:[%s2142 + $0x4] sm:$0xf]
    %v2145 = vld [vmem:[%s2142 + $0x8] sm:$0x1]
    %v2149 = vunpack.c.l.b16 %v2143
    %v2150 = vunpack.c.l.b16 %v2144
    %v2151 = vunpack.c.l.b16 %v2145
    %v2152 = vpack.c.b16 %v2150, %v2149
    %v2153 = vpack.c.b16 %v2151, %v2151
    %2156 = vmatprep.subr.bf16.mxu0 0
    %2157 = vmatpush1.bf16.msra.mxu0 %v976
    %2158 = vmatprep.subr.bf16.mxu0 0
    %2159 = vmatpush1.bf16.msra.mxu0 %v984
    %2160 = vmatprep.subr.bf16.mxu0 0
    %2161 = vmatpush1.bf16.msra.mxu0 %v992
    %2162 = vmatprep.subr.bf16.mxu0 0
    %2163 = vmatpush1.bf16.msra.mxu0 %v1000
    %2164 = vmatprep.subr.bf16.mxu0 0
    %2165 = vmatpush1.bf16.msra.mxu0 %v1008
    %2166 = vmatprep.subr.bf16.mxu0 0
    %2167 = vmatpush1.bf16.msra.mxu0 %v1016
    %2168 = vmatprep.subr.bf16.mxu0 0
    %2169 = vmatpush1.bf16.msra.mxu0 %v1024
    %2170 = vmatprep.subr.bf16.mxu0 0
    %2171 = vmatpush1.bf16.msra.mxu0 %v1032
    %2172 = vmatprep.subr.bf16.mxu0 0
    %2173 = vmatpush1.bf16.msra.mxu0 0
    %2174 = vmatprep.subr.bf16.mxu0 0
    %2175 = vmatpush1.bf16.msra.mxu0 0
    %2176 = vmatprep.subr.bf16.mxu0 0
    %2177 = vmatpush1.bf16.msra.mxu0 0
    %2178 = vmatprep.subr.bf16.mxu0 0
    %2179 = vmatpush1.bf16.msra.mxu0 0
    %2180 = vmatprep.subr.bf16.mxu0 0
    %2181 = vmatpush1.bf16.msra.mxu0 0
    %2182 = vmatprep.subr.bf16.mxu0 0
    %2183 = vmatpush1.bf16.msra.mxu0 0
    %2184 = vmatprep.subr.bf16.mxu0 0
    %2185 = vmatpush1.bf16.msra.mxu0 0
    %2186 = vmatprep.subr.bf16.mxu0 0
    %2187 = vmatpush1.bf16.msra.mxu0 0
    %2188 = vmatprep.mubr.bf16.mxu0 0
    %2189 = vmatmul.mubr.bf16.gmra.mrb[0].mxu0 %v2152
    %v2190 = vpop.f32.mrb[0].mxu0
    %v2191 = vadd.f32 0.0, %v2190
    %v2192 = vpop.f32.mrb[0].mxu0
    %v2193 = vpop.f32.mrb[0].mxu0
    %v2194 = vadd.f32 0.0, %v2193
    %v2195 = vpop.f32.mrb[0].mxu0
    %2196 = vmatprep.mubr.bf16.mxu0 0
    %2197 = vmatmul.mubr.bf16.gmra.mrb[0].mxu0 %v2153
    %v2198 = vpop.f32.mrb[0].mxu0
    %v2199 = vadd.f32 0.0, %v2198
    %v2200 = vpop.f32.mrb[0].mxu0
    %v2201 = vpop.f32.mrb[0].mxu0
    %v2202 = vpop.f32.mrb[0].mxu0
    %2203 = vdwg.mxu0
    %v2204 = vadd.f32 %v1880, %v2191
    %v2205 = vadd.f32 %v1881, %v2194
    %v2206 = vadd.f32 %v1882, %v2199
    %s2207 = scalar_lea.vmem %s3, 180
    %v2208 = vld [vmem:[%s2207] sm:$0xf]
    %v2209 = vld [vmem:[%s2207 + $0x4] sm:$0xf]
    %v2210 = vld [vmem:[%s2207 + $0x8] sm:$0x1]
    %v2214 = vunpack.c.l.b16 %v2208
    %v2215 = vunpack.c.l.b16 %v2209
    %v2216 = vunpack.c.l.b16 %v2210
    %v2217 = vpack.c.b16 %v2215, %v2214
    %v2218 = vpack.c.b16 %v2216, %v2216
    %2229 = vrot.lane.b32.xlu0 %v976, 64
    %v2230 = vpop.permute.xlu0 %2229
    %2231 = vrot.lane.b32.xlu0 %v984, 64
    %v2232 = vpop.permute.xlu0 %2231
    %2233 = vrot.lane.b32.xlu0 %v992, 64
    %v2234 = vpop.permute.xlu0 %2233
    %2235 = vrot.lane.b32.xlu0 %v1000, 64
    %v2236 = vpop.permute.xlu0 %2235
    %2237 = vrot.lane.b32.xlu0 %v1008, 64
    %v2238 = vpop.permute.xlu0 %2237
    %2239 = vrot.lane.b32.xlu0 %v1016, 64
    %v2240 = vpop.permute.xlu0 %2239
    %2241 = vrot.lane.b32.xlu0 %v1024, 64
    %v2242 = vpop.permute.xlu0 %2241
    %2243 = vrot.lane.b32.xlu0 %v1032, 64
    %v2244 = vpop.permute.xlu0 %2243
    %2253 = vmatprep.subr.bf16.mxu0 0
    %2254 = vmatpush1.bf16.msra.mxu0 %v2230
    %2255 = vmatprep.subr.bf16.mxu0 0
    %2256 = vmatpush1.bf16.msra.mxu0 %v2232
    %2257 = vmatprep.subr.bf16.mxu0 0
    %2258 = vmatpush1.bf16.msra.mxu0 %v2234
    %2259 = vmatprep.subr.bf16.mxu0 0
    %2260 = vmatpush1.bf16.msra.mxu0 %v2236
    %2261 = vmatprep.subr.bf16.mxu0 0
    %2262 = vmatpush1.bf16.msra.mxu0 %v2238
    %2263 = vmatprep.subr.bf16.mxu0 0
    %2264 = vmatpush1.bf16.msra.mxu0 %v2240
    %2265 = vmatprep.subr.bf16.mxu0 0
    %2266 = vmatpush1.bf16.msra.mxu0 %v2242
    %2267 = vmatprep.subr.bf16.mxu0 0
    %2268 = vmatpush1.bf16.msra.mxu0 %v2244
    %2269 = vmatprep.subr.bf16.mxu0 0
    %2270 = vmatpush1.bf16.msra.mxu0 0
    %2271 = vmatprep.subr.bf16.mxu0 0
    %2272 = vmatpush1.bf16.msra.mxu0 0
    %2273 = vmatprep.subr.bf16.mxu0 0
    %2274 = vmatpush1.bf16.msra.mxu0 0
    %2275 = vmatprep.subr.bf16.mxu0 0
    %2276 = vmatpush1.bf16.msra.mxu0 0
    %2277 = vmatprep.subr.bf16.mxu0 0
    %2278 = vmatpush1.bf16.msra.mxu0 0
    %2279 = vmatprep.subr.bf16.mxu0 0
    %2280 = vmatpush1.bf16.msra.mxu0 0
    %2281 = vmatprep.subr.bf16.mxu0 0
    %2282 = vmatpush1.bf16.msra.mxu0 0
    %2283 = vmatprep.subr.bf16.mxu0 0
    %2284 = vmatpush1.bf16.msra.mxu0 0
    %2285 = vmatprep.mubr.bf16.mxu0 0
    %2286 = vmatmul.mubr.bf16.gmra.mrb[0].mxu0 %v2217
    %v2287 = vpop.f32.mrb[0].mxu0
    %v2288 = vadd.f32 0.0, %v2287
    %v2289 = vpop.f32.mrb[0].mxu0
    %v2290 = vpop.f32.mrb[0].mxu0
    %v2291 = vadd.f32 0.0, %v2290
    %v2292 = vpop.f32.mrb[0].mxu0
    %2293 = vmatprep.mubr.bf16.mxu0 0
    %2294 = vmatmul.mubr.bf16.gmra.mrb[0].mxu0 %v2218
    %v2295 = vpop.f32.mrb[0].mxu0
    %v2296 = vadd.f32 0.0, %v2295
    %v2297 = vpop.f32.mrb[0].mxu0
    %v2298 = vpop.f32.mrb[0].mxu0
    %v2299 = vpop.f32.mrb[0].mxu0
    %2300 = vdwg.mxu0
    %v2301 = vadd.f32 %v1977, %v2288
    %v2302 = vadd.f32 %v1978, %v2291
    %v2303 = vadd.f32 %v1979, %v2296
    %v2304 = vadd.f32 %v2042, %v2139
    %v2305 = vadd.f32 %v2043, %v2140
    %v2306 = vadd.f32 %v2044, %v2141
    %v2307 = vadd.f32 %v2204, %v2301
    %v2308 = vadd.f32 %v2205, %v2302
    %v2309 = vadd.f32 %v2206, %v2303
    %v2310 = vadd.f32 %v2304, %v2307
    %v2311 = vadd.f32 %v2305, %v2308
    %v2312 = vadd.f32 %v2306, %v2309
    %v2313 = vadd.f32 %v2310, %v38
    %v2314 = vadd.f32 %v2311, %v38
    %v2315 = vadd.f32 %v2312, %v38
    %v2316 = vmax.f32 %v2313, 0.0
    %v2317 = vmax.f32 %v2314, 0.0
    %v2318 = vmax.f32 %v2315, 0.0
    %v2319 = vld [vmem:[%s4] sm:$0xf]
    %v2320 = vld [vmem:[%s4 + $0x4] sm:$0xf]
    %v2321 = vld [vmem:[%s4 + $0x8] sm:$0xf]
    %v2322 = vld [vmem:[%s4 + $0xc] sm:$0xf]
    %v2323 = vld [vmem:[%s4 + $0x10] sm:$0xf]
    %v2324 = vld [vmem:[%s4 + $0x14] sm:$0xf]
    %v2325 = vld [vmem:[%s4 + $0x18] sm:$0xf]
    %v2326 = vld [vmem:[%s4 + $0x1c] sm:$0xf]
    %v2327 = vpack.c.bf16 %v2316, %v2316
    %s2328 = scalar_lea.vmem %s4, 32
    %v2329 = vld [vmem:[%s2328] sm:$0xf]
    %v2330 = vld [vmem:[%s2328 + $0x4] sm:$0xf]
    %v2331 = vld [vmem:[%s2328 + $0x8] sm:$0xf]
    %v2332 = vld [vmem:[%s2328 + $0xc] sm:$0xf]
    %v2333 = vld [vmem:[%s2328 + $0x10] sm:$0xf]
    %v2334 = vld [vmem:[%s2328 + $0x14] sm:$0xf]
    %v2335 = vld [vmem:[%s2328 + $0x18] sm:$0xf]
    %v2336 = vld [vmem:[%s2328 + $0x1c] sm:$0xf]
    %s2337 = scalar_lea.vmem %s4, 64
    %v2338 = vld [vmem:[%s2337] sm:$0xf]
    %v2339 = vld [vmem:[%s2337 + $0x4] sm:$0xf]
    %v2340 = vld [vmem:[%s2337 + $0x8] sm:$0xf]
    %v2341 = vld [vmem:[%s2337 + $0xc] sm:$0xf]
    %v2342 = vld [vmem:[%s2337 + $0x10] sm:$0xf]
    %v2343 = vld [vmem:[%s2337 + $0x14] sm:$0xf]
    %v2344 = vld [vmem:[%s2337 + $0x18] sm:$0xf]
    %v2345 = vld [vmem:[%s2337 + $0x1c] sm:$0xf]
    %s2346 = scalar_lea.vmem %s4, 96
    %v2347 = vld [vmem:[%s2346] sm:$0xf]
    %v2348 = vld [vmem:[%s2346 + $0x4] sm:$0xf]
    %v2349 = vld [vmem:[%s2346 + $0x8] sm:$0xf]
    %v2350 = vld [vmem:[%s2346 + $0xc] sm:$0xf]
    %v2351 = vld [vmem:[%s2346 + $0x10] sm:$0xf]
    %v2352 = vld [vmem:[%s2346 + $0x14] sm:$0xf]
    %v2353 = vld [vmem:[%s2346 + $0x18] sm:$0xf]
    %v2354 = vld [vmem:[%s2346 + $0x1c] sm:$0xf]
    %v2356 = vrot.slane %v2327, 3
    %v2365 = vunpack.c.l.b16 %v2347
    %v2366 = vunpack.c.l.b16 %v2348
    %v2367 = vunpack.c.l.b16 %v2349
    %v2368 = vunpack.c.l.b16 %v2350
    %v2369 = vunpack.c.l.b16 %v2351
    %v2370 = vunpack.c.l.b16 %v2352
    %v2371 = vunpack.c.l.b16 %v2353
    %v2372 = vunpack.c.l.b16 %v2354
    %v2373 = vpack.c.b16 %v2366, %v2365
    %v2374 = vpack.c.b16 %v2368, %v2367
    %v2375 = vpack.c.b16 %v2370, %v2369
    %v2376 = vpack.c.b16 %v2372, %v2371
    %vm2381 = vcmask 523264
    %v2383 = vsel %vm2381, %v2356, 0
    %2385 = vmatprep.subr.bf16.mxu0 0
    %2386 = vmatpush1.bf16.msra.mxu0 %v2373
    %2387 = vmatprep.subr.bf16.mxu0 0
    %2388 = vmatpush1.bf16.msra.mxu0 %v2374
    %2389 = vmatprep.subr.bf16.mxu0 0
    %2390 = vmatpush1.bf16.msra.mxu0 %v2375
    %2391 = vmatprep.subr.bf16.mxu0 0
    %2392 = vmatpush1.bf16.msra.mxu0 %v2376
    %2393 = vmatprep.subr.bf16.mxu0 0
    %2394 = vmatpush1.bf16.msra.mxu0 0
    %2395 = vmatprep.subr.bf16.mxu0 0
    %2396 = vmatpush1.bf16.msra.mxu0 0
    %2397 = vmatprep.subr.bf16.mxu0 0
    %2398 = vmatpush1.bf16.msra.mxu0 0
    %2399 = vmatprep.subr.bf16.mxu0 0
    %2400 = vmatpush1.bf16.msra.mxu0 0
    %2401 = vmatprep.subr.bf16.mxu0 0
    %2402 = vmatpush1.bf16.msra.mxu0 0
    %2403 = vmatprep.subr.bf16.mxu0 0
    %2404 = vmatpush1.bf16.msra.mxu0 0
    %2405 = vmatprep.subr.bf16.mxu0 0
    %2406 = vmatpush1.bf16.msra.mxu0 0
    %2407 = vmatprep.subr.bf16.mxu0 0
    %2408 = vmatpush1.bf16.msra.mxu0 0
    %2409 = vmatprep.subr.bf16.mxu0 0
    %2410 = vmatpush1.bf16.msra.mxu0 0
    %2411 = vmatprep.subr.bf16.mxu0 0
    %2412 = vmatpush1.bf16.msra.mxu0 0
    %2413 = vmatprep.subr.bf16.mxu0 0
    %2414 = vmatpush1.bf16.msra.mxu0 0
    %2415 = vmatprep.subr.bf16.mxu0 0
    %2416 = vmatpush1.bf16.msra.mxu0 0
    %2417 = vmatprep.mubr.bf16.mxu0 0
    %2418 = vmatmul.mubr.bf16.gmra.mrb[0].mxu0 %v2383
    %v2419 = vpop.f32.mrb[0].mxu0
    %v2420 = vadd.f32 0.0, %v2419
    %v2421 = vpop.f32.mrb[0].mxu0
    %v2422 = vpop.f32.mrb[0].mxu0
    %v2423 = vpop.f32.mrb[0].mxu0
    %2424 = vdwg.mxu0
    %v2433 = vunpack.c.l.b16 %v2319
    %v2434 = vunpack.c.l.b16 %v2320
    %v2435 = vunpack.c.l.b16 %v2321
    %v2436 = vunpack.c.l.b16 %v2322
    %v2437 = vunpack.c.l.b16 %v2323
    %v2438 = vunpack.c.l.b16 %v2324
    %v2439 = vunpack.c.l.b16 %v2325
    %v2440 = vunpack.c.l.b16 %v2326
    %v2441 = vpack.c.b16 %v2434, %v2433
    %v2442 = vpack.c.b16 %v2436, %v2435
    %v2443 = vpack.c.b16 %v2438, %v2437
    %v2444 = vpack.c.b16 %v2440, %v2439
    %v2450 = vsel %vm2381, %v2327, 0
    %2452 = vmatprep.subr.bf16.mxu0 0
    %2453 = vmatpush1.bf16.msra.mxu0 %v2441
    %2454 = vmatprep.subr.bf16.mxu0 0
    %2455 = vmatpush1.bf16.msra.mxu0 %v2442
    %2456 = vmatprep.subr.bf16.mxu0 0
    %2457 = vmatpush1.bf16.msra.mxu0 %v2443
    %2458 = vmatprep.subr.bf16.mxu0 0
    %2459 = vmatpush1.bf16.msra.mxu0 %v2444
    %2460 = vmatprep.subr.bf16.mxu0 0
    %2461 = vmatpush1.bf16.msra.mxu0 0
    %2462 = vmatprep.subr.bf16.mxu0 0
    %2463 = vmatpush1.bf16.msra.mxu0 0
    %2464 = vmatprep.subr.bf16.mxu0 0
    %2465 = vmatpush1.bf16.msra.mxu0 0
    %2466 = vmatprep.subr.bf16.mxu0 0
    %2467 = vmatpush1.bf16.msra.mxu0 0
    %2468 = vmatprep.subr.bf16.mxu0 0
    %2469 = vmatpush1.bf16.msra.mxu0 0
    %2470 = vmatprep.subr.bf16.mxu0 0
    %2471 = vmatpush1.bf16.msra.mxu0 0
    %2472 = vmatprep.subr.bf16.mxu0 0
    %2473 = vmatpush1.bf16.msra.mxu0 0
    %2474 = vmatprep.subr.bf16.mxu0 0
    %2475 = vmatpush1.bf16.msra.mxu0 0
    %2476 = vmatprep.subr.bf16.mxu0 0
    %2477 = vmatpush1.bf16.msra.mxu0 0
    %2478 = vmatprep.subr.bf16.mxu0 0
    %2479 = vmatpush1.bf16.msra.mxu0 0
    %2480 = vmatprep.subr.bf16.mxu0 0
    %2481 = vmatpush1.bf16.msra.mxu0 0
    %2482 = vmatprep.subr.bf16.mxu0 0
    %2483 = vmatpush1.bf16.msra.mxu0 0
    %2484 = vmatprep.mubr.bf16.mxu0 0
    %2485 = vmatmul.mubr.bf16.gmra.mrb[0].mxu0 %v2450
    %v2486 = vpop.f32.mrb[0].mxu0
    %v2487 = vadd.f32 %v2420, %v2486
    %v2488 = vpop.f32.mrb[0].mxu0
    %v2489 = vpop.f32.mrb[0].mxu0
    %v2490 = vpop.f32.mrb[0].mxu0
    %2491 = vdwg.mxu0
    %s2492 = scalar_lea.vmem %s4, 128
    %v2493 = vld [vmem:[%s2492] sm:$0xf]
    %v2494 = vld [vmem:[%s2492 + $0x4] sm:$0xf]
    %v2495 = vld [vmem:[%s2492 + $0x8] sm:$0xf]
    %v2496 = vld [vmem:[%s2492 + $0xc] sm:$0xf]
    %v2497 = vld [vmem:[%s2492 + $0x10] sm:$0xf]
    %v2498 = vld [vmem:[%s2492 + $0x14] sm:$0xf]
    %v2499 = vld [vmem:[%s2492 + $0x18] sm:$0xf]
    %v2500 = vld [vmem:[%s2492 + $0x1c] sm:$0xf]
    %v2501 = vpack.c.bf16 %v2317, %v2317
    %v2510 = vunpack.c.l.b16 %v2493
    %v2511 = vunpack.c.l.b16 %v2494
    %v2512 = vunpack.c.l.b16 %v2495
    %v2513 = vunpack.c.l.b16 %v2496
    %v2514 = vunpack.c.l.b16 %v2497
    %v2515 = vunpack.c.l.b16 %v2498
    %v2516 = vunpack.c.l.b16 %v2499
    %v2517 = vunpack.c.l.b16 %v2500
    %v2518 = vpack.c.b16 %v2511, %v2510
    %v2519 = vpack.c.b16 %v2513, %v2512
    %v2520 = vpack.c.b16 %v2515, %v2514
    %v2521 = vpack.c.b16 %v2517, %v2516
    %v2527 = vsel %vm2381, %v2501, 0
    %2529 = vmatprep.subr.bf16.mxu0 0
    %2530 = vmatpush1.bf16.msra.mxu0 %v2518
    %2531 = vmatprep.subr.bf16.mxu0 0
    %2532 = vmatpush1.bf16.msra.mxu0 %v2519
    %2533 = vmatprep.subr.bf16.mxu0 0
    %2534 = vmatpush1.bf16.msra.mxu0 %v2520
    %2535 = vmatprep.subr.bf16.mxu0 0
    %2536 = vmatpush1.bf16.msra.mxu0 %v2521
    %2537 = vmatprep.subr.bf16.mxu0 0
    %2538 = vmatpush1.bf16.msra.mxu0 0
    %2539 = vmatprep.subr.bf16.mxu0 0
    %2540 = vmatpush1.bf16.msra.mxu0 0
    %2541 = vmatprep.subr.bf16.mxu0 0
    %2542 = vmatpush1.bf16.msra.mxu0 0
    %2543 = vmatprep.subr.bf16.mxu0 0
    %2544 = vmatpush1.bf16.msra.mxu0 0
    %2545 = vmatprep.subr.bf16.mxu0 0
    %2546 = vmatpush1.bf16.msra.mxu0 0
    %2547 = vmatprep.subr.bf16.mxu0 0
    %2548 = vmatpush1.bf16.msra.mxu0 0
    %2549 = vmatprep.subr.bf16.mxu0 0
    %2550 = vmatpush1.bf16.msra.mxu0 0
    %2551 = vmatprep.subr.bf16.mxu0 0
    %2552 = vmatpush1.bf16.msra.mxu0 0
    %2553 = vmatprep.subr.bf16.mxu0 0
    %2554 = vmatpush1.bf16.msra.mxu0 0
    %2555 = vmatprep.subr.bf16.mxu0 0
    %2556 = vmatpush1.bf16.msra.mxu0 0
    %2557 = vmatprep.subr.bf16.mxu0 0
    %2558 = vmatpush1.bf16.msra.mxu0 0
    %2559 = vmatprep.subr.bf16.mxu0 0
    %2560 = vmatpush1.bf16.msra.mxu0 0
    %2561 = vmatprep.mubr.bf16.mxu0 0
    %2562 = vmatmul.mubr.bf16.gmra.mrb[0].mxu0 %v2527
    %v2563 = vpop.f32.mrb[0].mxu0
    %v2564 = vadd.f32 0.0, %v2563
    %v2565 = vpop.f32.mrb[0].mxu0
    %v2566 = vpop.f32.mrb[0].mxu0
    %v2567 = vpop.f32.mrb[0].mxu0
    %2568 = vdwg.mxu0
    %v2569 = vrot.slane %v2327, 1
    %v2578 = vunpack.c.l.b16 %v2329
    %v2579 = vunpack.c.l.b16 %v2330
    %v2580 = vunpack.c.l.b16 %v2331
    %v2581 = vunpack.c.l.b16 %v2332
    %v2582 = vunpack.c.l.b16 %v2333
    %v2583 = vunpack.c.l.b16 %v2334
    %v2584 = vunpack.c.l.b16 %v2335
    %v2585 = vunpack.c.l.b16 %v2336
    %v2586 = vpack.c.b16 %v2579, %v2578
    %v2587 = vpack.c.b16 %v2581, %v2580
    %v2588 = vpack.c.b16 %v2583, %v2582
    %v2589 = vpack.c.b16 %v2585, %v2584
    %v2595 = vsel %vm2381, %v2569, 0
    %2597 = vmatprep.subr.bf16.mxu0 0
    %2598 = vmatpush1.bf16.msra.mxu0 %v2586
    %2599 = vmatprep.subr.bf16.mxu0 0
    %2600 = vmatpush1.bf16.msra.mxu0 %v2587
    %2601 = vmatprep.subr.bf16.mxu0 0
    %2602 = vmatpush1.bf16.msra.mxu0 %v2588
    %2603 = vmatprep.subr.bf16.mxu0 0
    %2604 = vmatpush1.bf16.msra.mxu0 %v2589
    %2605 = vmatprep.subr.bf16.mxu0 0
    %2606 = vmatpush1.bf16.msra.mxu0 0
    %2607 = vmatprep.subr.bf16.mxu0 0
    %2608 = vmatpush1.bf16.msra.mxu0 0
    %2609 = vmatprep.subr.bf16.mxu0 0
    %2610 = vmatpush1.bf16.msra.mxu0 0
    %2611 = vmatprep.subr.bf16.mxu0 0
    %2612 = vmatpush1.bf16.msra.mxu0 0
    %2613 = vmatprep.subr.bf16.mxu0 0
    %2614 = vmatpush1.bf16.msra.mxu0 0
    %2615 = vmatprep.subr.bf16.mxu0 0
    %2616 = vmatpush1.bf16.msra.mxu0 0
    %2617 = vmatprep.subr.bf16.mxu0 0
    %2618 = vmatpush1.bf16.msra.mxu0 0
    %2619 = vmatprep.subr.bf16.mxu0 0
    %2620 = vmatpush1.bf16.msra.mxu0 0
    %2621 = vmatprep.subr.bf16.mxu0 0
    %2622 = vmatpush1.bf16.msra.mxu0 0
    %2623 = vmatprep.subr.bf16.mxu0 0
    %2624 = vmatpush1.bf16.msra.mxu0 0
    %2625 = vmatprep.subr.bf16.mxu0 0
    %2626 = vmatpush1.bf16.msra.mxu0 0
    %2627 = vmatprep.subr.bf16.mxu0 0
    %2628 = vmatpush1.bf16.msra.mxu0 0
    %2629 = vmatprep.mubr.bf16.mxu0 0
    %2630 = vmatmul.mubr.bf16.gmra.mrb[0].mxu0 %v2595
    %v2631 = vpop.f32.mrb[0].mxu0
    %v2632 = vadd.f32 %v2564, %v2631
    %v2633 = vpop.f32.mrb[0].mxu0
    %v2634 = vpop.f32.mrb[0].mxu0
    %v2635 = vpop.f32.mrb[0].mxu0
    %2636 = vdwg.mxu0
    %s2637 = scalar_lea.vmem %s4, 160
    %v2638 = vld [vmem:[%s2637] sm:$0xf]
    %v2639 = vld [vmem:[%s2637 + $0x4] sm:$0xf]
    %v2640 = vld [vmem:[%s2637 + $0x8] sm:$0xf]
    %v2641 = vld [vmem:[%s2637 + $0xc] sm:$0xf]
    %v2642 = vld [vmem:[%s2637 + $0x10] sm:$0xf]
    %v2643 = vld [vmem:[%s2637 + $0x14] sm:$0xf]
    %v2644 = vld [vmem:[%s2637 + $0x18] sm:$0xf]
    %v2645 = vld [vmem:[%s2637 + $0x1c] sm:$0xf]
    %v2647 = vrot.slane %v2501, 1
    %v2656 = vunpack.c.l.b16 %v2638
    %v2657 = vunpack.c.l.b16 %v2639
    %v2658 = vunpack.c.l.b16 %v2640
    %v2659 = vunpack.c.l.b16 %v2641
    %v2660 = vunpack.c.l.b16 %v2642
    %v2661 = vunpack.c.l.b16 %v2643
    %v2662 = vunpack.c.l.b16 %v2644
    %v2663 = vunpack.c.l.b16 %v2645
    %v2664 = vpack.c.b16 %v2657, %v2656
    %v2665 = vpack.c.b16 %v2659, %v2658
    %v2666 = vpack.c.b16 %v2661, %v2660
    %v2667 = vpack.c.b16 %v2663, %v2662
    %v2673 = vsel %vm2381, %v2647, 0
    %2675 = vmatprep.subr.bf16.mxu0 0
    %2676 = vmatpush1.bf16.msra.mxu0 %v2664
    %2677 = vmatprep.subr.bf16.mxu0 0
    %2678 = vmatpush1.bf16.msra.mxu0 %v2665
    %2679 = vmatprep.subr.bf16.mxu0 0
    %2680 = vmatpush1.bf16.msra.mxu0 %v2666
    %2681 = vmatprep.subr.bf16.mxu0 0
    %2682 = vmatpush1.bf16.msra.mxu0 %v2667
    %2683 = vmatprep.subr.bf16.mxu0 0
    %2684 = vmatpush1.bf16.msra.mxu0 0
    %2685 = vmatprep.subr.bf16.mxu0 0
    %2686 = vmatpush1.bf16.msra.mxu0 0
    %2687 = vmatprep.subr.bf16.mxu0 0
    %2688 = vmatpush1.bf16.msra.mxu0 0
    %2689 = vmatprep.subr.bf16.mxu0 0
    %2690 = vmatpush1.bf16.msra.mxu0 0
    %2691 = vmatprep.subr.bf16.mxu0 0
    %2692 = vmatpush1.bf16.msra.mxu0 0
    %2693 = vmatprep.subr.bf16.mxu0 0
    %2694 = vmatpush1.bf16.msra.mxu0 0
    %2695 = vmatprep.subr.bf16.mxu0 0
    %2696 = vmatpush1.bf16.msra.mxu0 0
    %2697 = vmatprep.subr.bf16.mxu0 0
    %2698 = vmatpush1.bf16.msra.mxu0 0
    %2699 = vmatprep.subr.bf16.mxu0 0
    %2700 = vmatpush1.bf16.msra.mxu0 0
    %2701 = vmatprep.subr.bf16.mxu0 0
    %2702 = vmatpush1.bf16.msra.mxu0 0
    %2703 = vmatprep.subr.bf16.mxu0 0
    %2704 = vmatpush1.bf16.msra.mxu0 0
    %2705 = vmatprep.subr.bf16.mxu0 0
    %2706 = vmatpush1.bf16.msra.mxu0 0
    %2707 = vmatprep.mubr.bf16.mxu0 0
    %2708 = vmatmul.mubr.bf16.gmra.mrb[0].mxu0 %v2673
    %v2709 = vpop.f32.mrb[0].mxu0
    %v2710 = vadd.f32 0.0, %v2709
    %v2711 = vpop.f32.mrb[0].mxu0
    %v2712 = vpop.f32.mrb[0].mxu0
    %v2713 = vpop.f32.mrb[0].mxu0
    %2714 = vdwg.mxu0
    %v2715 = vrot.slane %v2327, 2
    %v2724 = vunpack.c.l.b16 %v2338
    %v2725 = vunpack.c.l.b16 %v2339
    %v2726 = vunpack.c.l.b16 %v2340
    %v2727 = vunpack.c.l.b16 %v2341
    %v2728 = vunpack.c.l.b16 %v2342
    %v2729 = vunpack.c.l.b16 %v2343
    %v2730 = vunpack.c.l.b16 %v2344
    %v2731 = vunpack.c.l.b16 %v2345
    %v2732 = vpack.c.b16 %v2725, %v2724
    %v2733 = vpack.c.b16 %v2727, %v2726
    %v2734 = vpack.c.b16 %v2729, %v2728
    %v2735 = vpack.c.b16 %v2731, %v2730
    %v2741 = vsel %vm2381, %v2715, 0
    %2743 = vmatprep.subr.bf16.mxu0 0
    %2744 = vmatpush1.bf16.msra.mxu0 %v2732
    %2745 = vmatprep.subr.bf16.mxu0 0
    %2746 = vmatpush1.bf16.msra.mxu0 %v2733
    %2747 = vmatprep.subr.bf16.mxu0 0
    %2748 = vmatpush1.bf16.msra.mxu0 %v2734
    %2749 = vmatprep.subr.bf16.mxu0 0
    %2750 = vmatpush1.bf16.msra.mxu0 %v2735
    %2751 = vmatprep.subr.bf16.mxu0 0
    %2752 = vmatpush1.bf16.msra.mxu0 0
    %2753 = vmatprep.subr.bf16.mxu0 0
    %2754 = vmatpush1.bf16.msra.mxu0 0
    %2755 = vmatprep.subr.bf16.mxu0 0
    %2756 = vmatpush1.bf16.msra.mxu0 0
    %2757 = vmatprep.subr.bf16.mxu0 0
    %2758 = vmatpush1.bf16.msra.mxu0 0
    %2759 = vmatprep.subr.bf16.mxu0 0
    %2760 = vmatpush1.bf16.msra.mxu0 0
    %2761 = vmatprep.subr.bf16.mxu0 0
    %2762 = vmatpush1.bf16.msra.mxu0 0
    %2763 = vmatprep.subr.bf16.mxu0 0
    %2764 = vmatpush1.bf16.msra.mxu0 0
    %2765 = vmatprep.subr.bf16.mxu0 0
    %2766 = vmatpush1.bf16.msra.mxu0 0
    %2767 = vmatprep.subr.bf16.mxu0 0
    %2768 = vmatpush1.bf16.msra.mxu0 0
    %2769 = vmatprep.subr.bf16.mxu0 0
    %2770 = vmatpush1.bf16.msra.mxu0 0
    %2771 = vmatprep.subr.bf16.mxu0 0
    %2772 = vmatpush1.bf16.msra.mxu0 0
    %2773 = vmatprep.subr.bf16.mxu0 0
    %2774 = vmatpush1.bf16.msra.mxu0 0
    %2775 = vmatprep.mubr.bf16.mxu0 0
    %2776 = vmatmul.mubr.bf16.gmra.mrb[0].mxu0 %v2741
    %v2777 = vpop.f32.mrb[0].mxu0
    %v2778 = vadd.f32 %v2710, %v2777
    %v2779 = vpop.f32.mrb[0].mxu0
    %v2780 = vpop.f32.mrb[0].mxu0
    %v2781 = vpop.f32.mrb[0].mxu0
    %2782 = vdwg.mxu0
    %s2783 = scalar_lea.vmem %s4, 192
    %v2784 = vld [vmem:[%s2783] sm:$0xf]
    %v2785 = vld [vmem:[%s2783 + $0x4] sm:$0xf]
    %v2786 = vld [vmem:[%s2783 + $0x8] sm:$0xf]
    %v2787 = vld [vmem:[%s2783 + $0xc] sm:$0xf]
    %v2788 = vld [vmem:[%s2783 + $0x10] sm:$0xf]
    %v2789 = vld [vmem:[%s2783 + $0x14] sm:$0xf]
    %v2790 = vld [vmem:[%s2783 + $0x18] sm:$0xf]
    %v2791 = vld [vmem:[%s2783 + $0x1c] sm:$0xf]
    %v2792 = vrot.slane %v2501, 2
    %v2801 = vunpack.c.l.b16 %v2784
    %v2802 = vunpack.c.l.b16 %v2785
    %v2803 = vunpack.c.l.b16 %v2786
    %v2804 = vunpack.c.l.b16 %v2787
    %v2805 = vunpack.c.l.b16 %v2788
    %v2806 = vunpack.c.l.b16 %v2789
    %v2807 = vunpack.c.l.b16 %v2790
    %v2808 = vunpack.c.l.b16 %v2791
    %v2809 = vpack.c.b16 %v2802, %v2801
    %v2810 = vpack.c.b16 %v2804, %v2803
    %v2811 = vpack.c.b16 %v2806, %v2805
    %v2812 = vpack.c.b16 %v2808, %v2807
    %v2818 = vsel %vm2381, %v2792, 0
    %2820 = vmatprep.subr.bf16.mxu0 0
    %2821 = vmatpush1.bf16.msra.mxu0 %v2809
    %2822 = vmatprep.subr.bf16.mxu0 0
    %2823 = vmatpush1.bf16.msra.mxu0 %v2810
    %2824 = vmatprep.subr.bf16.mxu0 0
    %2825 = vmatpush1.bf16.msra.mxu0 %v2811
    %2826 = vmatprep.subr.bf16.mxu0 0
    %2827 = vmatpush1.bf16.msra.mxu0 %v2812
    %2828 = vmatprep.subr.bf16.mxu0 0
    %2829 = vmatpush1.bf16.msra.mxu0 0
    %2830 = vmatprep.subr.bf16.mxu0 0
    %2831 = vmatpush1.bf16.msra.mxu0 0
    %2832 = vmatprep.subr.bf16.mxu0 0
    %2833 = vmatpush1.bf16.msra.mxu0 0
    %2834 = vmatprep.subr.bf16.mxu0 0
    %2835 = vmatpush1.bf16.msra.mxu0 0
    %2836 = vmatprep.subr.bf16.mxu0 0
    %2837 = vmatpush1.bf16.msra.mxu0 0
    %2838 = vmatprep.subr.bf16.mxu0 0
    %2839 = vmatpush1.bf16.msra.mxu0 0
    %2840 = vmatprep.subr.bf16.mxu0 0
    %2841 = vmatpush1.bf16.msra.mxu0 0
    %2842 = vmatprep.subr.bf16.mxu0 0
    %2843 = vmatpush1.bf16.msra.mxu0 0
    %2844 = vmatprep.subr.bf16.mxu0 0
    %2845 = vmatpush1.bf16.msra.mxu0 0
    %2846 = vmatprep.subr.bf16.mxu0 0
    %2847 = vmatpush1.bf16.msra.mxu0 0
    %2848 = vmatprep.subr.bf16.mxu0 0
    %2849 = vmatpush1.bf16.msra.mxu0 0
    %2850 = vmatprep.subr.bf16.mxu0 0
    %2851 = vmatpush1.bf16.msra.mxu0 0
    %2852 = vmatprep.mubr.bf16.mxu0 0
    %2853 = vmatmul.mubr.bf16.gmra.mrb[0].mxu0 %v2818
    %v2854 = vpop.f32.mrb[0].mxu0
    %v2855 = vadd.f32 0.0, %v2854
    %v2856 = vpop.f32.mrb[0].mxu0
    %v2857 = vpop.f32.mrb[0].mxu0
    %v2858 = vpop.f32.mrb[0].mxu0
    %2859 = vdwg.mxu0
    %v2860 = vadd.f32 %v2487, %v2855
    %s2861 = scalar_lea.vmem %s4, 224
    %v2862 = vld [vmem:[%s2861] sm:$0xf]
    %v2863 = vld [vmem:[%s2861 + $0x4] sm:$0xf]
    %v2864 = vld [vmem:[%s2861 + $0x8] sm:$0xf]
    %v2865 = vld [vmem:[%s2861 + $0xc] sm:$0xf]
    %v2866 = vld [vmem:[%s2861 + $0x10] sm:$0xf]
    %v2867 = vld [vmem:[%s2861 + $0x14] sm:$0xf]
    %v2868 = vld [vmem:[%s2861 + $0x18] sm:$0xf]
    %v2869 = vld [vmem:[%s2861 + $0x1c] sm:$0xf]
    %v2870 = vrot.slane %v2501, 3
    %v2879 = vunpack.c.l.b16 %v2862
    %v2880 = vunpack.c.l.b16 %v2863
    %v2881 = vunpack.c.l.b16 %v2864
    %v2882 = vunpack.c.l.b16 %v2865
    %v2883 = vunpack.c.l.b16 %v2866
    %v2884 = vunpack.c.l.b16 %v2867
    %v2885 = vunpack.c.l.b16 %v2868
    %v2886 = vunpack.c.l.b16 %v2869
    %v2887 = vpack.c.b16 %v2880, %v2879
    %v2888 = vpack.c.b16 %v2882, %v2881
    %v2889 = vpack.c.b16 %v2884, %v2883
    %v2890 = vpack.c.b16 %v2886, %v2885
    %v2896 = vsel %vm2381, %v2870, 0
    %2898 = vmatprep.subr.bf16.mxu0 0
    %2899 = vmatpush1.bf16.msra.mxu0 %v2887
    %2900 = vmatprep.subr.bf16.mxu0 0
    %2901 = vmatpush1.bf16.msra.mxu0 %v2888
    %2902 = vmatprep.subr.bf16.mxu0 0
    %2903 = vmatpush1.bf16.msra.mxu0 %v2889
    %2904 = vmatprep.subr.bf16.mxu0 0
    %2905 = vmatpush1.bf16.msra.mxu0 %v2890
    %2906 = vmatprep.subr.bf16.mxu0 0
    %2907 = vmatpush1.bf16.msra.mxu0 0
    %2908 = vmatprep.subr.bf16.mxu0 0
    %2909 = vmatpush1.bf16.msra.mxu0 0
    %2910 = vmatprep.subr.bf16.mxu0 0
    %2911 = vmatpush1.bf16.msra.mxu0 0
    %2912 = vmatprep.subr.bf16.mxu0 0
    %2913 = vmatpush1.bf16.msra.mxu0 0
    %2914 = vmatprep.subr.bf16.mxu0 0
    %2915 = vmatpush1.bf16.msra.mxu0 0
    %2916 = vmatprep.subr.bf16.mxu0 0
    %2917 = vmatpush1.bf16.msra.mxu0 0
    %2918 = vmatprep.subr.bf16.mxu0 0
    %2919 = vmatpush1.bf16.msra.mxu0 0
    %2920 = vmatprep.subr.bf16.mxu0 0
    %2921 = vmatpush1.bf16.msra.mxu0 0
    %2922 = vmatprep.subr.bf16.mxu0 0
    %2923 = vmatpush1.bf16.msra.mxu0 0
    %2924 = vmatprep.subr.bf16.mxu0 0
    %2925 = vmatpush1.bf16.msra.mxu0 0
    %2926 = vmatprep.subr.bf16.mxu0 0
    %2927 = vmatpush1.bf16.msra.mxu0 0
    %2928 = vmatprep.subr.bf16.mxu0 0
    %2929 = vmatpush1.bf16.msra.mxu0 0
    %2930 = vmatprep.mubr.bf16.mxu0 0
    %2931 = vmatmul.mubr.bf16.gmra.mrb[0].mxu0 %v2896
    %v2932 = vpop.f32.mrb[0].mxu0
    %v2933 = vadd.f32 0.0, %v2932
    %v2934 = vpop.f32.mrb[0].mxu0
    %v2935 = vpop.f32.mrb[0].mxu0
    %v2936 = vpop.f32.mrb[0].mxu0
    %2937 = vdwg.mxu0
    %v2938 = vadd.f32 %v2632, %v2933
    %s2939 = scalar_lea.vmem %s4, 256
    %v2940 = vld [vmem:[%s2939] sm:$0xf]
    %v2941 = vld [vmem:[%s2939 + $0x4] sm:$0xf]
    %v2942 = vld [vmem:[%s2939 + $0x8] sm:$0xf]
    %v2943 = vld [vmem:[%s2939 + $0xc] sm:$0xf]
    %v2944 = vld [vmem:[%s2939 + $0x10] sm:$0xf]
    %v2945 = vld [vmem:[%s2939 + $0x14] sm:$0xf]
    %v2946 = vld [vmem:[%s2939 + $0x18] sm:$0xf]
    %v2947 = vld [vmem:[%s2939 + $0x1c] sm:$0xf]
    %v2948 = vpack.c.bf16 %v2318, %v2318
    %v2957 = vunpack.c.l.b16 %v2940
    %v2958 = vunpack.c.l.b16 %v2941
    %v2959 = vunpack.c.l.b16 %v2942
    %v2960 = vunpack.c.l.b16 %v2943
    %v2961 = vunpack.c.l.b16 %v2944
    %v2962 = vunpack.c.l.b16 %v2945
    %v2963 = vunpack.c.l.b16 %v2946
    %v2964 = vunpack.c.l.b16 %v2947
    %v2965 = vpack.c.b16 %v2958, %v2957
    %v2966 = vpack.c.b16 %v2960, %v2959
    %v2967 = vpack.c.b16 %v2962, %v2961
    %v2968 = vpack.c.b16 %v2964, %v2963
    %v2974 = vsel %vm2381, %v2948, 0
    %2976 = vmatprep.subr.bf16.mxu0 0
    %2977 = vmatpush1.bf16.msra.mxu0 %v2965
    %2978 = vmatprep.subr.bf16.mxu0 0
    %2979 = vmatpush1.bf16.msra.mxu0 %v2966
    %2980 = vmatprep.subr.bf16.mxu0 0
    %2981 = vmatpush1.bf16.msra.mxu0 %v2967
    %2982 = vmatprep.subr.bf16.mxu0 0
    %2983 = vmatpush1.bf16.msra.mxu0 %v2968
    %2984 = vmatprep.subr.bf16.mxu0 0
    %2985 = vmatpush1.bf16.msra.mxu0 0
    %2986 = vmatprep.subr.bf16.mxu0 0
    %2987 = vmatpush1.bf16.msra.mxu0 0
    %2988 = vmatprep.subr.bf16.mxu0 0
    %2989 = vmatpush1.bf16.msra.mxu0 0
    %2990 = vmatprep.subr.bf16.mxu0 0
    %2991 = vmatpush1.bf16.msra.mxu0 0
    %2992 = vmatprep.subr.bf16.mxu0 0
    %2993 = vmatpush1.bf16.msra.mxu0 0
    %2994 = vmatprep.subr.bf16.mxu0 0
    %2995 = vmatpush1.bf16.msra.mxu0 0
    %2996 = vmatprep.subr.bf16.mxu0 0
    %2997 = vmatpush1.bf16.msra.mxu0 0
    %2998 = vmatprep.subr.bf16.mxu0 0
    %2999 = vmatpush1.bf16.msra.mxu0 0
    %3000 = vmatprep.subr.bf16.mxu0 0
    %3001 = vmatpush1.bf16.msra.mxu0 0
    %3002 = vmatprep.subr.bf16.mxu0 0
    %3003 = vmatpush1.bf16.msra.mxu0 0
    %3004 = vmatprep.subr.bf16.mxu0 0
    %3005 = vmatpush1.bf16.msra.mxu0 0
    %3006 = vmatprep.subr.bf16.mxu0 0
    %3007 = vmatpush1.bf16.msra.mxu0 0
    %3008 = vmatprep.mubr.bf16.mxu0 0
    %3009 = vmatmul.mubr.bf16.gmra.mrb[0].mxu0 %v2974
    %v3010 = vpop.f32.mrb[0].mxu0
    %v3011 = vadd.f32 0.0, %v3010
    %v3012 = vpop.f32.mrb[0].mxu0
    %v3013 = vpop.f32.mrb[0].mxu0
    %v3014 = vpop.f32.mrb[0].mxu0
    %3015 = vdwg.mxu0
    %v3016 = vadd.f32 %v2778, %v3011
    %v3017 = vadd.f32 %v2860, %v2938
    %v3018 = vadd.f32 %v3017, %v3016
    %v3019 = vadd.f32 %v3018, %v39
    %v3020 = vmax.f32 %v3019, 0.0
    %v3021 = vld [vmem:[%s5] sm:$0xff]
    %v3022 = vld [vmem:[%s5 + $0x8] sm:$0xff]
    %v3023 = vld [vmem:[%s5 + $0x10] sm:$0xff]
    %v3024 = vld [vmem:[%s5 + $0x18] sm:$0xff]
    %v3025 = vld [vmem:[%s5 + $0x20] sm:$0xff]
    %v3026 = vld [vmem:[%s5 + $0x28] sm:$0xff]
    %v3027 = vld [vmem:[%s5 + $0x30] sm:$0xff]
    %v3028 = vld [vmem:[%s5 + $0x38] sm:$0xff]
    %v3029 = vpack.c.bf16 %v3020, %v3020
    %v3031 = vlaneseq
    %v3032 = vshrl.u32 %v3031, 7
    %v3033 = vsub.s32 0, %v3032
    %v3034 = vrot.slane %v41, %v3033
    %v3035 = vlaneseq
    %v3036 = vshrl.u32 %v3035, 7
    %v3037 = vsub.s32 1, %v3036
    %v3038 = vrot.slane %v41, %v3037
    %v3049 = vunpack.c.l.b16 %v3021
    %v3050 = vunpack.c.h.b16 %v3021
    %v3051 = vunpack.c.l.b16 %v3022
    %v3052 = vunpack.c.h.b16 %v3022
    %v3053 = vunpack.c.l.b16 %v3023
    %v3054 = vunpack.c.h.b16 %v3023
    %v3055 = vunpack.c.l.b16 %v3024
    %v3056 = vunpack.c.h.b16 %v3024
    %v3057 = vunpack.c.l.b16 %v3025
    %v3058 = vunpack.c.h.b16 %v3025
    %v3059 = vunpack.c.l.b16 %v3026
    %v3060 = vunpack.c.h.b16 %v3026
    %v3061 = vunpack.c.l.b16 %v3027
    %v3062 = vunpack.c.h.b16 %v3027
    %v3063 = vunpack.c.l.b16 %v3028
    %v3064 = vunpack.c.h.b16 %v3028
    %v3065 = vpack.c.b16 %v3051, %v3049
    %v3066 = vpack.c.b16 %v3052, %v3050
    %v3067 = vpack.c.b16 %v3055, %v3053
    %v3068 = vpack.c.b16 %v3056, %v3054
    %v3069 = vpack.c.b16 %v3059, %v3057
    %v3070 = vpack.c.b16 %v3060, %v3058
    %v3071 = vpack.c.b16 %v3063, %v3061
    %v3072 = vpack.c.b16 %v3064, %v3062
    %v3082 = vsel %vm2381, %v3029, 0
    %3084 = vmatprep.subr.bf16.mxu0 %v3066
    %3085 = vmatpush1.bf16.msra.mxu0 %v3065
    %3086 = vmatprep.subr.bf16.mxu0 %v3068
    %3087 = vmatpush1.bf16.msra.mxu0 %v3067
    %3088 = vmatprep.subr.bf16.mxu0 %v3070
    %3089 = vmatpush1.bf16.msra.mxu0 %v3069
    %3090 = vmatprep.subr.bf16.mxu0 %v3072
    %3091 = vmatpush1.bf16.msra.mxu0 %v3071
    %3092 = vmatprep.subr.bf16.mxu0 0
    %3093 = vmatpush1.bf16.msra.mxu0 0
    %3094 = vmatprep.subr.bf16.mxu0 0
    %3095 = vmatpush1.bf16.msra.mxu0 0
    %3096 = vmatprep.subr.bf16.mxu0 0
    %3097 = vmatpush1.bf16.msra.mxu0 0
    %3098 = vmatprep.subr.bf16.mxu0 0
    %3099 = vmatpush1.bf16.msra.mxu0 0
    %3100 = vmatprep.subr.bf16.mxu0 0
    %3101 = vmatpush1.bf16.msra.mxu0 0
    %3102 = vmatprep.subr.bf16.mxu0 0
    %3103 = vmatpush1.bf16.msra.mxu0 0
    %3104 = vmatprep.subr.bf16.mxu0 0
    %3105 = vmatpush1.bf16.msra.mxu0 0
    %3106 = vmatprep.subr.bf16.mxu0 0
    %3107 = vmatpush1.bf16.msra.mxu0 0
    %3108 = vmatprep.subr.bf16.mxu0 0
    %3109 = vmatpush1.bf16.msra.mxu0 0
    %3110 = vmatprep.subr.bf16.mxu0 0
    %3111 = vmatpush1.bf16.msra.mxu0 0
    %3112 = vmatprep.subr.bf16.mxu0 0
    %3113 = vmatpush1.bf16.msra.mxu0 0
    %3114 = vmatprep.subr.bf16.mxu0 0
    %3115 = vmatpush1.bf16.msra.mxu0 0
    %3116 = vmatprep.mubr.bf16.mxu0 0
    %3117 = vmatmul.mubr.bf16.gmra.mrb[0].mxu0 %v3082
    %v3118 = vpop.f32.mrb[0].mxu0
    %v3119 = vadd.f32 %v3034, %v3118
    %v3120 = vpop.f32.mrb[0].mxu0
    %v3121 = vadd.f32 %v3038, %v3120
    %v3122 = vpop.f32.mrb[0].mxu0
    %v3123 = vpop.f32.mrb[0].mxu0
    %3124 = vdwg.mxu0
    %v3125 = vmax.f32 %v3119, 0.0
    %v3126 = vmax.f32 %v3121, 0.0
    %v3127 = vld [vmem:[%s6] sm:$0xff]
    %v3128 = vld [vmem:[%s6 + $0x8] sm:$0xff]
    %v3129 = vld [vmem:[%s6 + $0x10] sm:$0xff]
    %v3130 = vld [vmem:[%s6 + $0x18] sm:$0xff]
    %v3131 = vld [vmem:[%s6 + $0x20] sm:$0xff]
    %v3132 = vld [vmem:[%s6 + $0x28] sm:$0xff]
    %v3133 = vld [vmem:[%s6 + $0x30] sm:$0xff]
    %v3134 = vld [vmem:[%s6 + $0x38] sm:$0xff]
    %v3135 = vld [vmem:[%s6 + $0x40] sm:$0xff]
    %v3136 = vld [vmem:[%s6 + $0x48] sm:$0xff]
    %v3137 = vld [vmem:[%s6 + $0x50] sm:$0xff]
    %v3138 = vld [vmem:[%s6 + $0x58] sm:$0xff]
    %v3139 = vld [vmem:[%s6 + $0x60] sm:$0xff]
    %v3140 = vld [vmem:[%s6 + $0x68] sm:$0xff]
    %v3141 = vld [vmem:[%s6 + $0x70] sm:$0xff]
    %v3142 = vld [vmem:[%s6 + $0x78] sm:$0xff]
    %v3143 = vld [vmem:[%s6 + $0x80] sm:$0xff]
    %v3144 = vld [vmem:[%s6 + $0x88] sm:$0xff]
    %v3145 = vld [vmem:[%s6 + $0x90] sm:$0xff]
    %v3146 = vld [vmem:[%s6 + $0x98] sm:$0xff]
    %v3147 = vld [vmem:[%s6 + $0xa0] sm:$0xff]
    %v3148 = vld [vmem:[%s6 + $0xa8] sm:$0xff]
    %v3149 = vld [vmem:[%s6 + $0xb0] sm:$0xff]
    %v3150 = vld [vmem:[%s6 + $0xb8] sm:$0xff]
    %v3151 = vld [vmem:[%s6 + $0xc0] sm:$0xff]
    %v3152 = vld [vmem:[%s6 + $0xc8] sm:$0xff]
    %v3153 = vld [vmem:[%s6 + $0xd0] sm:$0xff]
    %v3154 = vld [vmem:[%s6 + $0xd8] sm:$0xff]
    %v3155 = vld [vmem:[%s6 + $0xe0] sm:$0xff]
    %v3156 = vld [vmem:[%s6 + $0xe8] sm:$0xff]
    %v3157 = vld [vmem:[%s6 + $0xf0] sm:$0xff]
    %v3158 = vld [vmem:[%s6 + $0xf8] sm:$0xff]
    %v3159 = vld [vmem:[%s6 + $0x100] sm:$0xff]
    %v3160 = vld [vmem:[%s6 + $0x108] sm:$0xff]
    %v3161 = vld [vmem:[%s6 + $0x110] sm:$0xff]
    %v3162 = vld [vmem:[%s6 + $0x118] sm:$0xff]
    %v3163 = vld [vmem:[%s6 + $0x120] sm:$0xff]
    %v3164 = vld [vmem:[%s6 + $0x128] sm:$0xff]
    %v3165 = vld [vmem:[%s6 + $0x130] sm:$0xff]
    %v3166 = vld [vmem:[%s6 + $0x138] sm:$0xff]
    %v3167 = vld [vmem:[%s6 + $0x140] sm:$0xff]
    %v3168 = vld [vmem:[%s6 + $0x148] sm:$0xff]
    %v3169 = vld [vmem:[%s6 + $0x150] sm:$0xff]
    %v3170 = vld [vmem:[%s6 + $0x158] sm:$0xff]
    %v3171 = vld [vmem:[%s6 + $0x160] sm:$0xff]
    %v3172 = vld [vmem:[%s6 + $0x168] sm:$0xff]
    %v3173 = vld [vmem:[%s6 + $0x170] sm:$0xff]
    %v3174 = vld [vmem:[%s6 + $0x178] sm:$0xff]
    %v3175 = vld [vmem:[%s6 + $0x180] sm:$0xff]
    %v3176 = vld [vmem:[%s6 + $0x188] sm:$0xff]
    %v3177 = vld [vmem:[%s6 + $0x190] sm:$0xff]
    %v3178 = vld [vmem:[%s6 + $0x198] sm:$0xff]
    %v3179 = vld [vmem:[%s6 + $0x1a0] sm:$0xff]
    %v3180 = vld [vmem:[%s6 + $0x1a8] sm:$0xff]
    %v3181 = vld [vmem:[%s6 + $0x1b0] sm:$0xff]
    %v3182 = vld [vmem:[%s6 + $0x1b8] sm:$0xff]
    %v3183 = vld [vmem:[%s6 + $0x1c0] sm:$0xff]
    %v3184 = vld [vmem:[%s6 + $0x1c8] sm:$0xff]
    %v3185 = vld [vmem:[%s6 + $0x1d0] sm:$0xff]
    %v3186 = vld [vmem:[%s6 + $0x1d8] sm:$0xff]
    %v3187 = vld [vmem:[%s6 + $0x1e0] sm:$0xff]
    %v3188 = vld [vmem:[%s6 + $0x1e8] sm:$0xff]
    %v3189 = vld [vmem:[%s6 + $0x1f0] sm:$0xff]
    %v3190 = vld [vmem:[%s6 + $0x1f8] sm:$0xff]
    %v3191 = vpack.c.bf16 %v3125, %v3125
    %v3192 = vpack.c.bf16 %v3126, %v3126
    %v3194 = vlaneseq
    %v3195 = vshrl.u32 %v3194, 7
    %v3196 = vsub.s32 0, %v3195
    %v3197 = vrot.slane %v43, %v3196
    %v3198 = vlaneseq
    %v3199 = vshrl.u32 %v3198, 7
    %v3200 = vsub.s32 1, %v3199
    %v3201 = vrot.slane %v43, %v3200
    %v3202 = vlaneseq
    %v3203 = vshrl.u32 %v3202, 7
    %v3204 = vsub.s32 2, %v3203
    %v3205 = vrot.slane %v43, %v3204
    %v3206 = vlaneseq
    %v3207 = vshrl.u32 %v3206, 7
    %v3208 = vsub.s32 3, %v3207
    %v3209 = vrot.slane %v43, %v3208
    %v3278 = vunpack.c.l.b16 %v3127
    %v3279 = vunpack.c.h.b16 %v3127
    %v3280 = vunpack.c.l.b16 %v3128
    %v3281 = vunpack.c.h.b16 %v3128
    %v3282 = vunpack.c.l.b16 %v3129
    %v3283 = vunpack.c.h.b16 %v3129
    %v3284 = vunpack.c.l.b16 %v3130
    %v3285 = vunpack.c.h.b16 %v3130
    %v3286 = vunpack.c.l.b16 %v3131
    %v3287 = vunpack.c.h.b16 %v3131
    %v3288 = vunpack.c.l.b16 %v3132
    %v3289 = vunpack.c.h.b16 %v3132
    %v3290 = vunpack.c.l.b16 %v3133
    %v3291 = vunpack.c.h.b16 %v3133
    %v3292 = vunpack.c.l.b16 %v3134
    %v3293 = vunpack.c.h.b16 %v3134
    %v3294 = vunpack.c.l.b16 %v3135
    %v3295 = vunpack.c.h.b16 %v3135
    %v3296 = vunpack.c.l.b16 %v3136
    %v3297 = vunpack.c.h.b16 %v3136
    %v3298 = vunpack.c.l.b16 %v3137
    %v3299 = vunpack.c.h.b16 %v3137
    %v3300 = vunpack.c.l.b16 %v3138
    %v3301 = vunpack.c.h.b16 %v3138
    %v3302 = vunpack.c.l.b16 %v3139
    %v3303 = vunpack.c.h.b16 %v3139
    %v3304 = vunpack.c.l.b16 %v3140
    %v3305 = vunpack.c.h.b16 %v3140
    %v3306 = vunpack.c.l.b16 %v3141
    %v3307 = vunpack.c.h.b16 %v3141
    %v3308 = vunpack.c.l.b16 %v3142
    %v3309 = vunpack.c.h.b16 %v3142
    %v3310 = vunpack.c.l.b16 %v3143
    %v3311 = vunpack.c.h.b16 %v3143
    %v3312 = vunpack.c.l.b16 %v3144
    %v3313 = vunpack.c.h.b16 %v3144
    %v3314 = vunpack.c.l.b16 %v3145
    %v3315 = vunpack.c.h.b16 %v3145
    %v3316 = vunpack.c.l.b16 %v3146
    %v3317 = vunpack.c.h.b16 %v3146
    %v3318 = vunpack.c.l.b16 %v3147
    %v3319 = vunpack.c.h.b16 %v3147
    %v3320 = vunpack.c.l.b16 %v3148
    %v3321 = vunpack.c.h.b16 %v3148
    %v3322 = vunpack.c.l.b16 %v3149
    %v3323 = vunpack.c.h.b16 %v3149
    %v3324 = vunpack.c.l.b16 %v3150
    %v3325 = vunpack.c.h.b16 %v3150
    %v3326 = vunpack.c.l.b16 %v3151
    %v3327 = vunpack.c.h.b16 %v3151
    %v3328 = vunpack.c.l.b16 %v3152
    %v3329 = vunpack.c.h.b16 %v3152
    %v3330 = vunpack.c.l.b16 %v3153
    %v3331 = vunpack.c.h.b16 %v3153
    %v3332 = vunpack.c.l.b16 %v3154
    %v3333 = vunpack.c.h.b16 %v3154
    %v3334 = vunpack.c.l.b16 %v3155
    %v3335 = vunpack.c.h.b16 %v3155
    %v3336 = vunpack.c.l.b16 %v3156
    %v3337 = vunpack.c.h.b16 %v3156
    %v3338 = vunpack.c.l.b16 %v3157
    %v3339 = vunpack.c.h.b16 %v3157
    %v3340 = vunpack.c.l.b16 %v3158
    %v3341 = vunpack.c.h.b16 %v3158
    %v3342 = vunpack.c.l.b16 %v3159
    %v3343 = vunpack.c.h.b16 %v3159
    %v3344 = vunpack.c.l.b16 %v3160
    %v3345 = vunpack.c.h.b16 %v3160
    %v3346 = vunpack.c.l.b16 %v3161
    %v3347 = vunpack.c.h.b16 %v3161
    %v3348 = vunpack.c.l.b16 %v3162
    %v3349 = vunpack.c.h.b16 %v3162
    %v3350 = vunpack.c.l.b16 %v3163
    %v3351 = vunpack.c.h.b16 %v3163
    %v3352 = vunpack.c.l.b16 %v3164
    %v3353 = vunpack.c.h.b16 %v3164
    %v3354 = vunpack.c.l.b16 %v3165
    %v3355 = vunpack.c.h.b16 %v3165
    %v3356 = vunpack.c.l.b16 %v3166
    %v3357 = vunpack.c.h.b16 %v3166
    %v3358 = vunpack.c.l.b16 %v3167
    %v3359 = vunpack.c.h.b16 %v3167
    %v3360 = vunpack.c.l.b16 %v3168
    %v3361 = vunpack.c.h.b16 %v3168
    %v3362 = vunpack.c.l.b16 %v3169
    %v3363 = vunpack.c.h.b16 %v3169
    %v3364 = vunpack.c.l.b16 %v3170
    %v3365 = vunpack.c.h.b16 %v3170
    %v3366 = vunpack.c.l.b16 %v3171
    %v3367 = vunpack.c.h.b16 %v3171
    %v3368 = vunpack.c.l.b16 %v3172
    %v3369 = vunpack.c.h.b16 %v3172
    %v3370 = vunpack.c.l.b16 %v3173
    %v3371 = vunpack.c.h.b16 %v3173
    %v3372 = vunpack.c.l.b16 %v3174
    %v3373 = vunpack.c.h.b16 %v3174
    %v3374 = vunpack.c.l.b16 %v3175
    %v3375 = vunpack.c.h.b16 %v3175
    %v3376 = vunpack.c.l.b16 %v3176
    %v3377 = vunpack.c.h.b16 %v3176
    %v3378 = vunpack.c.l.b16 %v3177
    %v3379 = vunpack.c.h.b16 %v3177
    %v3380 = vunpack.c.l.b16 %v3178
    %v3381 = vunpack.c.h.b16 %v3178
    %v3382 = vunpack.c.l.b16 %v3179
    %v3383 = vunpack.c.h.b16 %v3179
    %v3384 = vunpack.c.l.b16 %v3180
    %v3385 = vunpack.c.h.b16 %v3180
    %v3386 = vunpack.c.l.b16 %v3181
    %v3387 = vunpack.c.h.b16 %v3181
    %v3388 = vunpack.c.l.b16 %v3182
    %v3389 = vunpack.c.h.b16 %v3182
    %v3390 = vunpack.c.l.b16 %v3183
    %v3391 = vunpack.c.h.b16 %v3183
    %v3392 = vunpack.c.l.b16 %v3184
    %v3393 = vunpack.c.h.b16 %v3184
    %v3394 = vunpack.c.l.b16 %v3185
    %v3395 = vunpack.c.h.b16 %v3185
    %v3396 = vunpack.c.l.b16 %v3186
    %v3397 = vunpack.c.h.b16 %v3186
    %v3398 = vunpack.c.l.b16 %v3187
    %v3399 = vunpack.c.h.b16 %v3187
    %v3400 = vunpack.c.l.b16 %v3188
    %v3401 = vunpack.c.h.b16 %v3188
    %v3402 = vunpack.c.l.b16 %v3189
    %v3403 = vunpack.c.h.b16 %v3189
    %v3404 = vunpack.c.l.b16 %v3190
    %v3405 = vunpack.c.h.b16 %v3190
    %v3406 = vpack.c.b16 %v3282, %v3278
    %v3407 = vpack.c.b16 %v3283, %v3279
    %v3408 = vpack.c.b16 %v3284, %v3280
    %v3409 = vpack.c.b16 %v3285, %v3281
    %v3410 = vpack.c.b16 %v3290, %v3286
    %v3411 = vpack.c.b16 %v3291, %v3287
    %v3412 = vpack.c.b16 %v3292, %v3288
    %v3413 = vpack.c.b16 %v3293, %v3289
    %v3414 = vpack.c.b16 %v3298, %v3294
    %v3415 = vpack.c.b16 %v3299, %v3295
    %v3416 = vpack.c.b16 %v3300, %v3296
    %v3417 = vpack.c.b16 %v3301, %v3297
    %v3418 = vpack.c.b16 %v3306, %v3302
    %v3419 = vpack.c.b16 %v3307, %v3303
    %v3420 = vpack.c.b16 %v3308, %v3304
    %v3421 = vpack.c.b16 %v3309, %v3305
    %v3422 = vpack.c.b16 %v3314, %v3310
    %v3423 = vpack.c.b16 %v3315, %v3311
    %v3424 = vpack.c.b16 %v3316, %v3312
    %v3425 = vpack.c.b16 %v3317, %v3313
    %v3426 = vpack.c.b16 %v3322, %v3318
    %v3427 = vpack.c.b16 %v3323, %v3319
    %v3428 = vpack.c.b16 %v3324, %v3320
    %v3429 = vpack.c.b16 %v3325, %v3321
    %v3430 = vpack.c.b16 %v3330, %v3326
    %v3431 = vpack.c.b16 %v3331, %v3327
    %v3432 = vpack.c.b16 %v3332, %v3328
    %v3433 = vpack.c.b16 %v3333, %v3329
    %v3434 = vpack.c.b16 %v3338, %v3334
    %v3435 = vpack.c.b16 %v3339, %v3335
    %v3436 = vpack.c.b16 %v3340, %v3336
    %v3437 = vpack.c.b16 %v3341, %v3337
    %v3438 = vpack.c.b16 %v3346, %v3342
    %v3439 = vpack.c.b16 %v3347, %v3343
    %v3440 = vpack.c.b16 %v3348, %v3344
    %v3441 = vpack.c.b16 %v3349, %v3345
    %v3442 = vpack.c.b16 %v3354, %v3350
    %v3443 = vpack.c.b16 %v3355, %v3351
    %v3444 = vpack.c.b16 %v3356, %v3352
    %v3445 = vpack.c.b16 %v3357, %v3353
    %v3446 = vpack.c.b16 %v3362, %v3358
    %v3447 = vpack.c.b16 %v3363, %v3359
    %v3448 = vpack.c.b16 %v3364, %v3360
    %v3449 = vpack.c.b16 %v3365, %v3361
    %v3450 = vpack.c.b16 %v3370, %v3366
    %v3451 = vpack.c.b16 %v3371, %v3367
    %v3452 = vpack.c.b16 %v3372, %v3368
    %v3453 = vpack.c.b16 %v3373, %v3369
    %v3454 = vpack.c.b16 %v3378, %v3374
    %v3455 = vpack.c.b16 %v3379, %v3375
    %v3456 = vpack.c.b16 %v3380, %v3376
    %v3457 = vpack.c.b16 %v3381, %v3377
    %v3458 = vpack.c.b16 %v3386, %v3382
    %v3459 = vpack.c.b16 %v3387, %v3383
    %v3460 = vpack.c.b16 %v3388, %v3384
    %v3461 = vpack.c.b16 %v3389, %v3385
    %v3462 = vpack.c.b16 %v3394, %v3390
    %v3463 = vpack.c.b16 %v3395, %v3391
    %v3464 = vpack.c.b16 %v3396, %v3392
    %v3465 = vpack.c.b16 %v3397, %v3393
    %v3466 = vpack.c.b16 %v3402, %v3398
    %v3467 = vpack.c.b16 %v3403, %v3399
    %v3468 = vpack.c.b16 %v3404, %v3400
    %v3469 = vpack.c.b16 %v3405, %v3401
    %3534 = vmatprep.subr.bf16.mxu0 %v3407
    %3535 = vmatpush1.bf16.msra.mxu0 %v3406
    %3536 = vmatprep.subr.bf16.mxu0 %v3411
    %3537 = vmatpush1.bf16.msra.mxu0 %v3410
    %3538 = vmatprep.subr.bf16.mxu0 %v3415
    %3539 = vmatpush1.bf16.msra.mxu0 %v3414
    %3540 = vmatprep.subr.bf16.mxu0 %v3419
    %3541 = vmatpush1.bf16.msra.mxu0 %v3418
    %3542 = vmatprep.subr.bf16.mxu0 %v3423
    %3543 = vmatpush1.bf16.msra.mxu0 %v3422
    %3544 = vmatprep.subr.bf16.mxu0 %v3427
    %3545 = vmatpush1.bf16.msra.mxu0 %v3426
    %3546 = vmatprep.subr.bf16.mxu0 %v3431
    %3547 = vmatpush1.bf16.msra.mxu0 %v3430
    %3548 = vmatprep.subr.bf16.mxu0 %v3435
    %3549 = vmatpush1.bf16.msra.mxu0 %v3434
    %3550 = vmatprep.subr.bf16.mxu0 %v3439
    %3551 = vmatpush1.bf16.msra.mxu0 %v3438
    %3552 = vmatprep.subr.bf16.mxu0 %v3443
    %3553 = vmatpush1.bf16.msra.mxu0 %v3442
    %3554 = vmatprep.subr.bf16.mxu0 %v3447
    %3555 = vmatpush1.bf16.msra.mxu0 %v3446
    %3556 = vmatprep.subr.bf16.mxu0 %v3451
    %3557 = vmatpush1.bf16.msra.mxu0 %v3450
    %3558 = vmatprep.subr.bf16.mxu0 %v3455
    %3559 = vmatpush1.bf16.msra.mxu0 %v3454
    %3560 = vmatprep.subr.bf16.mxu0 %v3459
    %3561 = vmatpush1.bf16.msra.mxu0 %v3458
    %3562 = vmatprep.subr.bf16.mxu0 %v3463
    %3563 = vmatpush1.bf16.msra.mxu0 %v3462
    %3564 = vmatprep.subr.bf16.mxu0 %v3467
    %3565 = vmatpush1.bf16.msra.mxu0 %v3466
    %3566 = vmatprep.mubr.bf16.mxu0 %v3192
    %3567 = vmatmul.mubr.bf16.gmra.mrb[0].mxu0 %v3191
    %v3568 = vpop.f32.mrb[0].mxu0
    %v3569 = vadd.f32 %v3197, %v3568
    %v3570 = vpop.f32.mrb[0].mxu0
    %v3571 = vadd.f32 %v3201, %v3570
    %v3572 = vpop.f32.mrb[0].mxu0
    %v3573 = vpop.f32.mrb[0].mxu0
    %3574 = vdwg.mxu0
    %3575 = vmatprep.subr.bf16.mxu0 %v3409
    %3576 = vmatpush1.bf16.msra.mxu0 %v3408
    %3577 = vmatprep.subr.bf16.mxu0 %v3413
    %3578 = vmatpush1.bf16.msra.mxu0 %v3412
    %3579 = vmatprep.subr.bf16.mxu0 %v3417
    %3580 = vmatpush1.bf16.msra.mxu0 %v3416
    %3581 = vmatprep.subr.bf16.mxu0 %v3421
    %3582 = vmatpush1.bf16.msra.mxu0 %v3420
    %3583 = vmatprep.subr.bf16.mxu0 %v3425
    %3584 = vmatpush1.bf16.msra.mxu0 %v3424
    %3585 = vmatprep.subr.bf16.mxu0 %v3429
    %3586 = vmatpush1.bf16.msra.mxu0 %v3428
    %3587 = vmatprep.subr.bf16.mxu0 %v3433
    %3588 = vmatpush1.bf16.msra.mxu0 %v3432
    %3589 = vmatprep.subr.bf16.mxu0 %v3437
    %3590 = vmatpush1.bf16.msra.mxu0 %v3436
    %3591 = vmatprep.subr.bf16.mxu0 %v3441
    %3592 = vmatpush1.bf16.msra.mxu0 %v3440
    %3593 = vmatprep.subr.bf16.mxu0 %v3445
    %3594 = vmatpush1.bf16.msra.mxu0 %v3444
    %3595 = vmatprep.subr.bf16.mxu0 %v3449
    %3596 = vmatpush1.bf16.msra.mxu0 %v3448
    %3597 = vmatprep.subr.bf16.mxu0 %v3453
    %3598 = vmatpush1.bf16.msra.mxu0 %v3452
    %3599 = vmatprep.subr.bf16.mxu0 %v3457
    %3600 = vmatpush1.bf16.msra.mxu0 %v3456
    %3601 = vmatprep.subr.bf16.mxu0 %v3461
    %3602 = vmatpush1.bf16.msra.mxu0 %v3460
    %3603 = vmatprep.subr.bf16.mxu0 %v3465
    %3604 = vmatpush1.bf16.msra.mxu0 %v3464
    %3605 = vmatprep.subr.bf16.mxu0 %v3469
    %3606 = vmatpush1.bf16.msra.mxu0 %v3468
    %3607 = vmatprep.mubr.bf16.mxu0 %v3192
    %3608 = vmatmul.mubr.bf16.gmra.mrb[0].mxu0 %v3191
    %v3609 = vpop.f32.mrb[0].mxu0
    %v3610 = vadd.f32 %v3205, %v3609
    %v3611 = vpop.f32.mrb[0].mxu0
    %v3612 = vadd.f32 %v3209, %v3611
    %v3613 = vpop.f32.mrb[0].mxu0
    %v3614 = vpop.f32.mrb[0].mxu0
    %3615 = vdwg.mxu0
    %v3616 = vmax.f32 %v3569, 0.0
    %v3617 = vmax.f32 %v3571, 0.0
    %v3618 = vmax.f32 %v3610, 0.0
    %v3619 = vmax.f32 %v3612, 0.0
    %v3620 = vld [vmem:[%s7] sm:$0xff]
    %v3621 = vld [vmem:[%s7 + $0x8] sm:$0xff]
    %v3622 = vld [vmem:[%s7 + $0x10] sm:$0xff]
    %v3623 = vld [vmem:[%s7 + $0x18] sm:$0xf]
    %v3624 = vld [vmem:[%s7 + $0x1c] sm:$0xff]
    %v3625 = vld [vmem:[%s7 + $0x24] sm:$0xff]
    %v3626 = vld [vmem:[%s7 + $0x2c] sm:$0xff]
    %v3627 = vld [vmem:[%s7 + $0x34] sm:$0xf]
    %v3628 = vld [vmem:[%s7 + $0x38] sm:$0xff]
    %v3629 = vld [vmem:[%s7 + $0x40] sm:$0xff]
    %v3630 = vld [vmem:[%s7 + $0x48] sm:$0xff]
    %v3631 = vld [vmem:[%s7 + $0x50] sm:$0xf]
    %v3632 = vld [vmem:[%s7 + $0x54] sm:$0xff]
    %v3633 = vld [vmem:[%s7 + $0x5c] sm:$0xff]
    %v3634 = vld [vmem:[%s7 + $0x64] sm:$0xff]
    %v3635 = vld [vmem:[%s7 + $0x6c] sm:$0xf]
    %v3636 = vld [vmem:[%s7 + $0x70] sm:$0xff]
    %v3637 = vld [vmem:[%s7 + $0x78] sm:$0xff]
    %v3638 = vld [vmem:[%s7 + $0x80] sm:$0xff]
    %v3639 = vld [vmem:[%s7 + $0x88] sm:$0xf]
    %v3640 = vld [vmem:[%s7 + $0x8c] sm:$0xff]
    %v3641 = vld [vmem:[%s7 + $0x94] sm:$0xff]
    %v3642 = vld [vmem:[%s7 + $0x9c] sm:$0xff]
    %v3643 = vld [vmem:[%s7 + $0xa4] sm:$0xf]
    %v3644 = vld [vmem:[%s7 + $0xa8] sm:$0xff]
    %v3645 = vld [vmem:[%s7 + $0xb0] sm:$0xff]
    %v3646 = vld [vmem:[%s7 + $0xb8] sm:$0xff]
    %v3647 = vld [vmem:[%s7 + $0xc0] sm:$0xf]
    %v3648 = vld [vmem:[%s7 + $0xc4] sm:$0xff]
    %v3649 = vld [vmem:[%s7 + $0xcc] sm:$0xff]
    %v3650 = vld [vmem:[%s7 + $0xd4] sm:$0xff]
    %v3651 = vld [vmem:[%s7 + $0xdc] sm:$0xf]
    %v3652 = vld [vmem:[%s7 + $0xe0] sm:$0xff]
    %v3653 = vld [vmem:[%s7 + $0xe8] sm:$0xff]
    %v3654 = vld [vmem:[%s7 + $0xf0] sm:$0xff]
    %v3655 = vld [vmem:[%s7 + $0xf8] sm:$0xf]
    %v3656 = vld [vmem:[%s7 + $0xfc] sm:$0xff]
    %v3657 = vld [vmem:[%s7 + $0x104] sm:$0xff]
    %v3658 = vld [vmem:[%s7 + $0x10c] sm:$0xff]
    %v3659 = vld [vmem:[%s7 + $0x114] sm:$0xf]
    %v3660 = vld [vmem:[%s7 + $0x118] sm:$0xff]
    %v3661 = vld [vmem:[%s7 + $0x120] sm:$0xff]
    %v3662 = vld [vmem:[%s7 + $0x128] sm:$0xff]
    %v3663 = vld [vmem:[%s7 + $0x130] sm:$0xf]
    %v3664 = vld [vmem:[%s7 + $0x134] sm:$0xff]
    %v3665 = vld [vmem:[%s7 + $0x13c] sm:$0xff]
    %v3666 = vld [vmem:[%s7 + $0x144] sm:$0xff]
    %v3667 = vld [vmem:[%s7 + $0x14c] sm:$0xf]
    %v3668 = vld [vmem:[%s7 + $0x150] sm:$0xff]
    %v3669 = vld [vmem:[%s7 + $0x158] sm:$0xff]
    %v3670 = vld [vmem:[%s7 + $0x160] sm:$0xff]
    %v3671 = vld [vmem:[%s7 + $0x168] sm:$0xf]
    %v3672 = vld [vmem:[%s7 + $0x16c] sm:$0xff]
    %v3673 = vld [vmem:[%s7 + $0x174] sm:$0xff]
    %v3674 = vld [vmem:[%s7 + $0x17c] sm:$0xff]
    %v3675 = vld [vmem:[%s7 + $0x184] sm:$0xf]
    %v3676 = vld [vmem:[%s7 + $0x188] sm:$0xff]
    %v3677 = vld [vmem:[%s7 + $0x190] sm:$0xff]
    %v3678 = vld [vmem:[%s7 + $0x198] sm:$0xff]
    %v3679 = vld [vmem:[%s7 + $0x1a0] sm:$0xf]
    %v3680 = vld [vmem:[%s7 + $0x1a4] sm:$0xff]
    %v3681 = vld [vmem:[%s7 + $0x1ac] sm:$0xff]
    %v3682 = vld [vmem:[%s7 + $0x1b4] sm:$0xff]
    %v3683 = vld [vmem:[%s7 + $0x1bc] sm:$0xf]
    %v3684 = vld [vmem:[%s7 + $0x1c0] sm:$0xff]
    %v3685 = vld [vmem:[%s7 + $0x1c8] sm:$0xff]
    %v3686 = vld [vmem:[%s7 + $0x1d0] sm:$0xff]
    %v3687 = vld [vmem:[%s7 + $0x1d8] sm:$0xf]
    %v3688 = vld [vmem:[%s7 + $0x1dc] sm:$0xff]
    %v3689 = vld [vmem:[%s7 + $0x1e4] sm:$0xff]
    %v3690 = vld [vmem:[%s7 + $0x1ec] sm:$0xff]
    %v3691 = vld [vmem:[%s7 + $0x1f4] sm:$0xf]
    %v3692 = vld [vmem:[%s7 + $0x1f8] sm:$0xff]
    %v3693 = vld [vmem:[%s7 + $0x200] sm:$0xff]
    %v3694 = vld [vmem:[%s7 + $0x208] sm:$0xff]
    %v3695 = vld [vmem:[%s7 + $0x210] sm:$0xf]
    %v3696 = vld [vmem:[%s7 + $0x214] sm:$0xff]
    %v3697 = vld [vmem:[%s7 + $0x21c] sm:$0xff]
    %v3698 = vld [vmem:[%s7 + $0x224] sm:$0xff]
    %v3699 = vld [vmem:[%s7 + $0x22c] sm:$0xf]
    %v3700 = vld [vmem:[%s7 + $0x230] sm:$0xff]
    %v3701 = vld [vmem:[%s7 + $0x238] sm:$0xff]
    %v3702 = vld [vmem:[%s7 + $0x240] sm:$0xff]
    %v3703 = vld [vmem:[%s7 + $0x248] sm:$0xf]
    %v3704 = vld [vmem:[%s7 + $0x24c] sm:$0xff]
    %v3705 = vld [vmem:[%s7 + $0x254] sm:$0xff]
    %v3706 = vld [vmem:[%s7 + $0x25c] sm:$0xff]
    %v3707 = vld [vmem:[%s7 + $0x264] sm:$0xf]
    %v3708 = vld [vmem:[%s7 + $0x268] sm:$0xff]
    %v3709 = vld [vmem:[%s7 + $0x270] sm:$0xff]
    %v3710 = vld [vmem:[%s7 + $0x278] sm:$0xff]
    %v3711 = vld [vmem:[%s7 + $0x280] sm:$0xf]
    %v3712 = vld [vmem:[%s7 + $0x284] sm:$0xff]
    %v3713 = vld [vmem:[%s7 + $0x28c] sm:$0xff]
    %v3714 = vld [vmem:[%s7 + $0x294] sm:$0xff]
    %v3715 = vld [vmem:[%s7 + $0x29c] sm:$0xf]
    %v3716 = vld [vmem:[%s7 + $0x2a0] sm:$0xff]
    %v3717 = vld [vmem:[%s7 + $0x2a8] sm:$0xff]
    %v3718 = vld [vmem:[%s7 + $0x2b0] sm:$0xff]
    %v3719 = vld [vmem:[%s7 + $0x2b8] sm:$0xf]
    %v3720 = vld [vmem:[%s7 + $0x2bc] sm:$0xff]
    %v3721 = vld [vmem:[%s7 + $0x2c4] sm:$0xff]
    %v3722 = vld [vmem:[%s7 + $0x2cc] sm:$0xff]
    %v3723 = vld [vmem:[%s7 + $0x2d4] sm:$0xf]
    %v3724 = vld [vmem:[%s7 + $0x2d8] sm:$0xff]
    %v3725 = vld [vmem:[%s7 + $0x2e0] sm:$0xff]
    %v3726 = vld [vmem:[%s7 + $0x2e8] sm:$0xff]
    %v3727 = vld [vmem:[%s7 + $0x2f0] sm:$0xf]
    %v3728 = vld [vmem:[%s7 + $0x2f4] sm:$0xff]
    %v3729 = vld [vmem:[%s7 + $0x2fc] sm:$0xff]
    %v3730 = vld [vmem:[%s7 + $0x304] sm:$0xff]
    %v3731 = vld [vmem:[%s7 + $0x30c] sm:$0xf]
    %v3732 = vld [vmem:[%s7 + $0x310] sm:$0xff]
    %v3733 = vld [vmem:[%s7 + $0x318] sm:$0xff]
    %v3734 = vld [vmem:[%s7 + $0x320] sm:$0xff]
    %v3735 = vld [vmem:[%s7 + $0x328] sm:$0xf]
    %v3736 = vld [vmem:[%s7 + $0x32c] sm:$0xff]
    %v3737 = vld [vmem:[%s7 + $0x334] sm:$0xff]
    %v3738 = vld [vmem:[%s7 + $0x33c] sm:$0xff]
    %v3739 = vld [vmem:[%s7 + $0x344] sm:$0xf]
    %v3740 = vld [vmem:[%s7 + $0x348] sm:$0xff]
    %v3741 = vld [vmem:[%s7 + $0x350] sm:$0xff]
    %v3742 = vld [vmem:[%s7 + $0x358] sm:$0xff]
    %v3743 = vld [vmem:[%s7 + $0x360] sm:$0xf]
    %v3744 = vld [vmem:[%s7 + $0x364] sm:$0xff]
    %v3745 = vld [vmem:[%s7 + $0x36c] sm:$0xff]
    %v3746 = vld [vmem:[%s7 + $0x374] sm:$0xff]
    %v3747 = vld [vmem:[%s7 + $0x37c] sm:$0xf]
    %v3748 = vld [vmem:[%s7 + $0x380] sm:$0xff]
    %v3749 = vld [vmem:[%s7 + $0x388] sm:$0xff]
    %v3750 = vld [vmem:[%s7 + $0x390] sm:$0xff]
    %v3751 = vld [vmem:[%s7 + $0x398] sm:$0xf]
    %v3752 = vld [vmem:[%s7 + $0x39c] sm:$0xff]
    %v3753 = vld [vmem:[%s7 + $0x3a4] sm:$0xff]
    %v3754 = vld [vmem:[%s7 + $0x3ac] sm:$0xff]
    %v3755 = vld [vmem:[%s7 + $0x3b4] sm:$0xf]
    %v3756 = vld [vmem:[%s7 + $0x3b8] sm:$0xff]
    %v3757 = vld [vmem:[%s7 + $0x3c0] sm:$0xff]
    %v3758 = vld [vmem:[%s7 + $0x3c8] sm:$0xff]
    %v3759 = vld [vmem:[%s7 + $0x3d0] sm:$0xf]
    %v3760 = vld [vmem:[%s7 + $0x3d4] sm:$0xff]
    %v3761 = vld [vmem:[%s7 + $0x3dc] sm:$0xff]
    %v3762 = vld [vmem:[%s7 + $0x3e4] sm:$0xff]
    %v3763 = vld [vmem:[%s7 + $0x3ec] sm:$0xf]
    %v3764 = vld [vmem:[%s7 + $0x3f0] sm:$0xff]
    %v3765 = vld [vmem:[%s7 + $0x3f8] sm:$0xff]
    %v3766 = vld [vmem:[%s7 + $0x400] sm:$0xff]
    %v3767 = vld [vmem:[%s7 + $0x408] sm:$0xf]
    %v3768 = vld [vmem:[%s7 + $0x40c] sm:$0xff]
    %v3769 = vld [vmem:[%s7 + $0x414] sm:$0xff]
    %v3770 = vld [vmem:[%s7 + $0x41c] sm:$0xff]
    %v3771 = vld [vmem:[%s7 + $0x424] sm:$0xf]
    %v3772 = vld [vmem:[%s7 + $0x428] sm:$0xff]
    %v3773 = vld [vmem:[%s7 + $0x430] sm:$0xff]
    %v3774 = vld [vmem:[%s7 + $0x438] sm:$0xff]
    %v3775 = vld [vmem:[%s7 + $0x440] sm:$0xf]
    %v3776 = vld [vmem:[%s7 + $0x444] sm:$0xff]
    %v3777 = vld [vmem:[%s7 + $0x44c] sm:$0xff]
    %v3778 = vld [vmem:[%s7 + $0x454] sm:$0xff]
    %v3779 = vld [vmem:[%s7 + $0x45c] sm:$0xf]
    %v3780 = vld [vmem:[%s7 + $0x460] sm:$0xff]
    %v3781 = vld [vmem:[%s7 + $0x468] sm:$0xff]
    %v3782 = vld [vmem:[%s7 + $0x470] sm:$0xff]
    %v3783 = vld [vmem:[%s7 + $0x478] sm:$0xf]
    %v3784 = vld [vmem:[%s7 + $0x47c] sm:$0xff]
    %v3785 = vld [vmem:[%s7 + $0x484] sm:$0xff]
    %v3786 = vld [vmem:[%s7 + $0x48c] sm:$0xff]
    %v3787 = vld [vmem:[%s7 + $0x494] sm:$0xf]
    %v3788 = vld [vmem:[%s7 + $0x498] sm:$0xff]
    %v3789 = vld [vmem:[%s7 + $0x4a0] sm:$0xff]
    %v3790 = vld [vmem:[%s7 + $0x4a8] sm:$0xff]
    %v3791 = vld [vmem:[%s7 + $0x4b0] sm:$0xf]
    %v3792 = vld [vmem:[%s7 + $0x4b4] sm:$0xff]
    %v3793 = vld [vmem:[%s7 + $0x4bc] sm:$0xff]
    %v3794 = vld [vmem:[%s7 + $0x4c4] sm:$0xff]
    %v3795 = vld [vmem:[%s7 + $0x4cc] sm:$0xf]
    %v3796 = vld [vmem:[%s7 + $0x4d0] sm:$0xff]
    %v3797 = vld [vmem:[%s7 + $0x4d8] sm:$0xff]
    %v3798 = vld [vmem:[%s7 + $0x4e0] sm:$0xff]
    %v3799 = vld [vmem:[%s7 + $0x4e8] sm:$0xf]
    %v3800 = vld [vmem:[%s7 + $0x4ec] sm:$0xff]
    %v3801 = vld [vmem:[%s7 + $0x4f4] sm:$0xff]
    %v3802 = vld [vmem:[%s7 + $0x4fc] sm:$0xff]
    %v3803 = vld [vmem:[%s7 + $0x504] sm:$0xf]
    %v3804 = vld [vmem:[%s7 + $0x508] sm:$0xff]
    %v3805 = vld [vmem:[%s7 + $0x510] sm:$0xff]
    %v3806 = vld [vmem:[%s7 + $0x518] sm:$0xff]
    %v3807 = vld [vmem:[%s7 + $0x520] sm:$0xf]
    %v3808 = vld [vmem:[%s7 + $0x524] sm:$0xff]
    %v3809 = vld [vmem:[%s7 + $0x52c] sm:$0xff]
    %v3810 = vld [vmem:[%s7 + $0x534] sm:$0xff]
    %v3811 = vld [vmem:[%s7 + $0x53c] sm:$0xf]
    %v3812 = vld [vmem:[%s7 + $0x540] sm:$0xff]
    %v3813 = vld [vmem:[%s7 + $0x548] sm:$0xff]
    %v3814 = vld [vmem:[%s7 + $0x550] sm:$0xff]
    %v3815 = vld [vmem:[%s7 + $0x558] sm:$0xf]
    %v3816 = vld [vmem:[%s7 + $0x55c] sm:$0xff]
    %v3817 = vld [vmem:[%s7 + $0x564] sm:$0xff]
    %v3818 = vld [vmem:[%s7 + $0x56c] sm:$0xff]
    %v3819 = vld [vmem:[%s7 + $0x574] sm:$0xf]
    %v3820 = vld [vmem:[%s7 + $0x578] sm:$0xff]
    %v3821 = vld [vmem:[%s7 + $0x580] sm:$0xff]
    %v3822 = vld [vmem:[%s7 + $0x588] sm:$0xff]
    %v3823 = vld [vmem:[%s7 + $0x590] sm:$0xf]
    %v3824 = vld [vmem:[%s7 + $0x594] sm:$0xff]
    %v3825 = vld [vmem:[%s7 + $0x59c] sm:$0xff]
    %v3826 = vld [vmem:[%s7 + $0x5a4] sm:$0xff]
    %v3827 = vld [vmem:[%s7 + $0x5ac] sm:$0xf]
    %v3828 = vld [vmem:[%s7 + $0x5b0] sm:$0xff]
    %v3829 = vld [vmem:[%s7 + $0x5b8] sm:$0xff]
    %v3830 = vld [vmem:[%s7 + $0x5c0] sm:$0xff]
    %v3831 = vld [vmem:[%s7 + $0x5c8] sm:$0xf]
    %v3832 = vld [vmem:[%s7 + $0x5cc] sm:$0xff]
    %v3833 = vld [vmem:[%s7 + $0x5d4] sm:$0xff]
    %v3834 = vld [vmem:[%s7 + $0x5dc] sm:$0xff]
    %v3835 = vld [vmem:[%s7 + $0x5e4] sm:$0xf]
    %v3836 = vld [vmem:[%s7 + $0x5e8] sm:$0xff]
    %v3837 = vld [vmem:[%s7 + $0x5f0] sm:$0xff]
    %v3838 = vld [vmem:[%s7 + $0x5f8] sm:$0xff]
    %v3839 = vld [vmem:[%s7 + $0x600] sm:$0xf]
    %v3840 = vld [vmem:[%s7 + $0x604] sm:$0xff]
    %v3841 = vld [vmem:[%s7 + $0x60c] sm:$0xff]
    %v3842 = vld [vmem:[%s7 + $0x614] sm:$0xff]
    %v3843 = vld [vmem:[%s7 + $0x61c] sm:$0xf]
    %v3844 = vpack.c.bf16 %v3616, %v3616
    %v3845 = vpack.c.bf16 %v3617, %v3617
    %v3846 = vpack.c.bf16 %v3618, %v3618
    %v3847 = vpack.c.bf16 %v3619, %v3619
    %v3849 = vlaneseq
    %v3850 = vshrl.u32 %v3849, 7
    %v3851 = vsub.s32 0, %v3850
    %v3852 = vrot.slane %v47, %v3851
    %v3853 = vlaneseq
    %v3854 = vshrl.u32 %v3853, 7
    %v3855 = vsub.s32 1, %v3854
    %v3856 = vrot.slane %v47, %v3855
    %v3857 = vlaneseq
    %v3858 = vshrl.u32 %v3857, 7
    %v3859 = vsub.s32 2, %v3858
    %v3860 = vrot.slane %v47, %v3859
    %v3861 = vlaneseq
    %v3862 = vshrl.u32 %v3861, 7
    %v3863 = vsub.s32 3, %v3862
    %v3864 = vrot.slane %v47, %v3863
    %v3865 = vlaneseq
    %v3866 = vshrl.u32 %v3865, 7
    %v3867 = vsub.s32 4, %v3866
    %v3868 = vrot.slane %v47, %v3867
    %v3869 = vlaneseq
    %v3870 = vshrl.u32 %v3869, 7
    %v3871 = vsub.s32 5, %v3870
    %v3872 = vrot.slane %v47, %v3871
    %v3873 = vlaneseq
    %v3874 = vshrl.u32 %v3873, 7
    %v3875 = vsub.s32 6, %v3874
    %v3876 = vrot.slane %v47, %v3875
    %v4108 = vunpack.c.l.b16 %v3620
    %v4109 = vunpack.c.h.b16 %v3620
    %v4110 = vunpack.c.l.b16 %v3621
    %v4111 = vunpack.c.h.b16 %v3621
    %v4112 = vunpack.c.l.b16 %v3622
    %v4113 = vunpack.c.h.b16 %v3622
    %v4114 = vunpack.c.l.b16 %v3623
    %v4115 = vunpack.c.l.b16 %v3624
    %v4116 = vunpack.c.h.b16 %v3624
    %v4117 = vunpack.c.l.b16 %v3625
    %v4118 = vunpack.c.h.b16 %v3625
    %v4119 = vunpack.c.l.b16 %v3626
    %v4120 = vunpack.c.h.b16 %v3626
    %v4121 = vunpack.c.l.b16 %v3627
    %v4122 = vunpack.c.l.b16 %v3628
    %v4123 = vunpack.c.h.b16 %v3628
    %v4124 = vunpack.c.l.b16 %v3629
    %v4125 = vunpack.c.h.b16 %v3629
    %v4126 = vunpack.c.l.b16 %v3630
    %v4127 = vunpack.c.h.b16 %v3630
    %v4128 = vunpack.c.l.b16 %v3631
    %v4129 = vunpack.c.l.b16 %v3632
    %v4130 = vunpack.c.h.b16 %v3632
    %v4131 = vunpack.c.l.b16 %v3633
    %v4132 = vunpack.c.h.b16 %v3633
    %v4133 = vunpack.c.l.b16 %v3634
    %v4134 = vunpack.c.h.b16 %v3634
    %v4135 = vunpack.c.l.b16 %v3635
    %v4136 = vunpack.c.l.b16 %v3636
    %v4137 = vunpack.c.h.b16 %v3636
    %v4138 = vunpack.c.l.b16 %v3637
    %v4139 = vunpack.c.h.b16 %v3637
    %v4140 = vunpack.c.l.b16 %v3638
    %v4141 = vunpack.c.h.b16 %v3638
    %v4142 = vunpack.c.l.b16 %v3639
    %v4143 = vunpack.c.l.b16 %v3640
    %v4144 = vunpack.c.h.b16 %v3640
    %v4145 = vunpack.c.l.b16 %v3641
    %v4146 = vunpack.c.h.b16 %v3641
    %v4147 = vunpack.c.l.b16 %v3642
    %v4148 = vunpack.c.h.b16 %v3642
    %v4149 = vunpack.c.l.b16 %v3643
    %v4150 = vunpack.c.l.b16 %v3644
    %v4151 = vunpack.c.h.b16 %v3644
    %v4152 = vunpack.c.l.b16 %v3645
    %v4153 = vunpack.c.h.b16 %v3645
    %v4154 = vunpack.c.l.b16 %v3646
    %v4155 = vunpack.c.h.b16 %v3646
    %v4156 = vunpack.c.l.b16 %v3647
    %v4157 = vunpack.c.l.b16 %v3648
    %v4158 = vunpack.c.h.b16 %v3648
    %v4159 = vunpack.c.l.b16 %v3649
    %v4160 = vunpack.c.h.b16 %v3649
    %v4161 = vunpack.c.l.b16 %v3650
    %v4162 = vunpack.c.h.b16 %v3650
    %v4163 = vunpack.c.l.b16 %v3651
    %v4164 = vunpack.c.l.b16 %v3652
    %v4165 = vunpack.c.h.b16 %v3652
    %v4166 = vunpack.c.l.b16 %v3653
    %v4167 = vunpack.c.h.b16 %v3653
    %v4168 = vunpack.c.l.b16 %v3654
    %v4169 = vunpack.c.h.b16 %v3654
    %v4170 = vunpack.c.l.b16 %v3655
    %v4171 = vunpack.c.l.b16 %v3656
    %v4172 = vunpack.c.h.b16 %v3656
    %v4173 = vunpack.c.l.b16 %v3657
    %v4174 = vunpack.c.h.b16 %v3657
    %v4175 = vunpack.c.l.b16 %v3658
    %v4176 = vunpack.c.h.b16 %v3658
    %v4177 = vunpack.c.l.b16 %v3659
    %v4178 = vunpack.c.l.b16 %v3660
    %v4179 = vunpack.c.h.b16 %v3660
    %v4180 = vunpack.c.l.b16 %v3661
    %v4181 = vunpack.c.h.b16 %v3661
    %v4182 = vunpack.c.l.b16 %v3662
    %v4183 = vunpack.c.h.b16 %v3662
    %v4184 = vunpack.c.l.b16 %v3663
    %v4185 = vunpack.c.l.b16 %v3664
    %v4186 = vunpack.c.h.b16 %v3664
    %v4187 = vunpack.c.l.b16 %v3665
    %v4188 = vunpack.c.h.b16 %v3665
    %v4189 = vunpack.c.l.b16 %v3666
    %v4190 = vunpack.c.h.b16 %v3666
    %v4191 = vunpack.c.l.b16 %v3667
    %v4192 = vunpack.c.l.b16 %v3668
    %v4193 = vunpack.c.h.b16 %v3668
    %v4194 = vunpack.c.l.b16 %v3669
    %v4195 = vunpack.c.h.b16 %v3669
    %v4196 = vunpack.c.l.b16 %v3670
    %v4197 = vunpack.c.h.b16 %v3670
    %v4198 = vunpack.c.l.b16 %v3671
    %v4199 = vunpack.c.l.b16 %v3672
    %v4200 = vunpack.c.h.b16 %v3672
    %v4201 = vunpack.c.l.b16 %v3673
    %v4202 = vunpack.c.h.b16 %v3673
    %v4203 = vunpack.c.l.b16 %v3674
    %v4204 = vunpack.c.h.b16 %v3674
    %v4205 = vunpack.c.l.b16 %v3675
    %v4206 = vunpack.c.l.b16 %v3676
    %v4207 = vunpack.c.h.b16 %v3676
    %v4208 = vunpack.c.l.b16 %v3677
    %v4209 = vunpack.c.h.b16 %v3677
    %v4210 = vunpack.c.l.b16 %v3678
    %v4211 = vunpack.c.h.b16 %v3678
    %v4212 = vunpack.c.l.b16 %v3679
    %v4213 = vunpack.c.l.b16 %v3680
    %v4214 = vunpack.c.h.b16 %v3680
    %v4215 = vunpack.c.l.b16 %v3681
    %v4216 = vunpack.c.h.b16 %v3681
    %v4217 = vunpack.c.l.b16 %v3682
    %v4218 = vunpack.c.h.b16 %v3682
    %v4219 = vunpack.c.l.b16 %v3683
    %v4220 = vunpack.c.l.b16 %v3684
    %v4221 = vunpack.c.h.b16 %v3684
    %v4222 = vunpack.c.l.b16 %v3685
    %v4223 = vunpack.c.h.b16 %v3685
    %v4224 = vunpack.c.l.b16 %v3686
    %v4225 = vunpack.c.h.b16 %v3686
    %v4226 = vunpack.c.l.b16 %v3687
    %v4227 = vunpack.c.l.b16 %v3688
    %v4228 = vunpack.c.h.b16 %v3688
    %v4229 = vunpack.c.l.b16 %v3689
    %v4230 = vunpack.c.h.b16 %v3689
    %v4231 = vunpack.c.l.b16 %v3690
    %v4232 = vunpack.c.h.b16 %v3690
    %v4233 = vunpack.c.l.b16 %v3691
    %v4234 = vunpack.c.l.b16 %v3692
    %v4235 = vunpack.c.h.b16 %v3692
    %v4236 = vunpack.c.l.b16 %v3693
    %v4237 = vunpack.c.h.b16 %v3693
    %v4238 = vunpack.c.l.b16 %v3694
    %v4239 = vunpack.c.h.b16 %v3694
    %v4240 = vunpack.c.l.b16 %v3695
    %v4241 = vunpack.c.l.b16 %v3696
    %v4242 = vunpack.c.h.b16 %v3696
    %v4243 = vunpack.c.l.b16 %v3697
    %v4244 = vunpack.c.h.b16 %v3697
    %v4245 = vunpack.c.l.b16 %v3698
    %v4246 = vunpack.c.h.b16 %v3698
    %v4247 = vunpack.c.l.b16 %v3699
    %v4248 = vunpack.c.l.b16 %v3700
    %v4249 = vunpack.c.h.b16 %v3700
    %v4250 = vunpack.c.l.b16 %v3701
    %v4251 = vunpack.c.h.b16 %v3701
    %v4252 = vunpack.c.l.b16 %v3702
    %v4253 = vunpack.c.h.b16 %v3702
    %v4254 = vunpack.c.l.b16 %v3703
    %v4255 = vunpack.c.l.b16 %v3704
    %v4256 = vunpack.c.h.b16 %v3704
    %v4257 = vunpack.c.l.b16 %v3705
    %v4258 = vunpack.c.h.b16 %v3705
    %v4259 = vunpack.c.l.b16 %v3706
    %v4260 = vunpack.c.h.b16 %v3706
    %v4261 = vunpack.c.l.b16 %v3707
    %v4262 = vunpack.c.l.b16 %v3708
    %v4263 = vunpack.c.h.b16 %v3708
    %v4264 = vunpack.c.l.b16 %v3709
    %v4265 = vunpack.c.h.b16 %v3709
    %v4266 = vunpack.c.l.b16 %v3710
    %v4267 = vunpack.c.h.b16 %v3710
    %v4268 = vunpack.c.l.b16 %v3711
    %v4269 = vunpack.c.l.b16 %v3712
    %v4270 = vunpack.c.h.b16 %v3712
    %v4271 = vunpack.c.l.b16 %v3713
    %v4272 = vunpack.c.h.b16 %v3713
    %v4273 = vunpack.c.l.b16 %v3714
    %v4274 = vunpack.c.h.b16 %v3714
    %v4275 = vunpack.c.l.b16 %v3715
    %v4276 = vunpack.c.l.b16 %v3716
    %v4277 = vunpack.c.h.b16 %v3716
    %v4278 = vunpack.c.l.b16 %v3717
    %v4279 = vunpack.c.h.b16 %v3717
    %v4280 = vunpack.c.l.b16 %v3718
    %v4281 = vunpack.c.h.b16 %v3718
    %v4282 = vunpack.c.l.b16 %v3719
    %v4283 = vunpack.c.l.b16 %v3720
    %v4284 = vunpack.c.h.b16 %v3720
    %v4285 = vunpack.c.l.b16 %v3721
    %v4286 = vunpack.c.h.b16 %v3721
    %v4287 = vunpack.c.l.b16 %v3722
    %v4288 = vunpack.c.h.b16 %v3722
    %v4289 = vunpack.c.l.b16 %v3723
    %v4290 = vunpack.c.l.b16 %v3724
    %v4291 = vunpack.c.h.b16 %v3724
    %v4292 = vunpack.c.l.b16 %v3725
    %v4293 = vunpack.c.h.b16 %v3725
    %v4294 = vunpack.c.l.b16 %v3726
    %v4295 = vunpack.c.h.b16 %v3726
    %v4296 = vunpack.c.l.b16 %v3727
    %v4297 = vunpack.c.l.b16 %v3728
    %v4298 = vunpack.c.h.b16 %v3728
    %v4299 = vunpack.c.l.b16 %v3729
    %v4300 = vunpack.c.h.b16 %v3729
    %v4301 = vunpack.c.l.b16 %v3730
    %v4302 = vunpack.c.h.b16 %v3730
    %v4303 = vunpack.c.l.b16 %v3731
    %v4304 = vunpack.c.l.b16 %v3732
    %v4305 = vunpack.c.h.b16 %v3732
    %v4306 = vunpack.c.l.b16 %v3733
    %v4307 = vunpack.c.h.b16 %v3733
    %v4308 = vunpack.c.l.b16 %v3734
    %v4309 = vunpack.c.h.b16 %v3734
    %v4310 = vunpack.c.l.b16 %v3735
    %v4311 = vunpack.c.l.b16 %v3736
    %v4312 = vunpack.c.h.b16 %v3736
    %v4313 = vunpack.c.l.b16 %v3737
    %v4314 = vunpack.c.h.b16 %v3737
    %v4315 = vunpack.c.l.b16 %v3738
    %v4316 = vunpack.c.h.b16 %v3738
    %v4317 = vunpack.c.l.b16 %v3739
    %v4318 = vunpack.c.l.b16 %v3740
    %v4319 = vunpack.c.h.b16 %v3740
    %v4320 = vunpack.c.l.b16 %v3741
    %v4321 = vunpack.c.h.b16 %v3741
    %v4322 = vunpack.c.l.b16 %v3742
    %v4323 = vunpack.c.h.b16 %v3742
    %v4324 = vunpack.c.l.b16 %v3743
    %v4325 = vunpack.c.l.b16 %v3744
    %v4326 = vunpack.c.h.b16 %v3744
    %v4327 = vunpack.c.l.b16 %v3745
    %v4328 = vunpack.c.h.b16 %v3745
    %v4329 = vunpack.c.l.b16 %v3746
    %v4330 = vunpack.c.h.b16 %v3746
    %v4331 = vunpack.c.l.b16 %v3747
    %v4332 = vunpack.c.l.b16 %v3748
    %v4333 = vunpack.c.h.b16 %v3748
    %v4334 = vunpack.c.l.b16 %v3749
    %v4335 = vunpack.c.h.b16 %v3749
    %v4336 = vunpack.c.l.b16 %v3750
    %v4337 = vunpack.c.h.b16 %v3750
    %v4338 = vunpack.c.l.b16 %v3751
    %v4339 = vunpack.c.l.b16 %v3752
    %v4340 = vunpack.c.h.b16 %v3752
    %v4341 = vunpack.c.l.b16 %v3753
    %v4342 = vunpack.c.h.b16 %v3753
    %v4343 = vunpack.c.l.b16 %v3754
    %v4344 = vunpack.c.h.b16 %v3754
    %v4345 = vunpack.c.l.b16 %v3755
    %v4346 = vunpack.c.l.b16 %v3756
    %v4347 = vunpack.c.h.b16 %v3756
    %v4348 = vunpack.c.l.b16 %v3757
    %v4349 = vunpack.c.h.b16 %v3757
    %v4350 = vunpack.c.l.b16 %v3758
    %v4351 = vunpack.c.h.b16 %v3758
    %v4352 = vunpack.c.l.b16 %v3759
    %v4353 = vunpack.c.l.b16 %v3760
    %v4354 = vunpack.c.h.b16 %v3760
    %v4355 = vunpack.c.l.b16 %v3761
    %v4356 = vunpack.c.h.b16 %v3761
    %v4357 = vunpack.c.l.b16 %v3762
    %v4358 = vunpack.c.h.b16 %v3762
    %v4359 = vunpack.c.l.b16 %v3763
    %v4360 = vunpack.c.l.b16 %v3764
    %v4361 = vunpack.c.h.b16 %v3764
    %v4362 = vunpack.c.l.b16 %v3765
    %v4363 = vunpack.c.h.b16 %v3765
    %v4364 = vunpack.c.l.b16 %v3766
    %v4365 = vunpack.c.h.b16 %v3766
    %v4366 = vunpack.c.l.b16 %v3767
    %v4367 = vunpack.c.l.b16 %v3768
    %v4368 = vunpack.c.h.b16 %v3768
    %v4369 = vunpack.c.l.b16 %v3769
    %v4370 = vunpack.c.h.b16 %v3769
    %v4371 = vunpack.c.l.b16 %v3770
    %v4372 = vunpack.c.h.b16 %v3770
    %v4373 = vunpack.c.l.b16 %v3771
    %v4374 = vunpack.c.l.b16 %v3772
    %v4375 = vunpack.c.h.b16 %v3772
    %v4376 = vunpack.c.l.b16 %v3773
    %v4377 = vunpack.c.h.b16 %v3773
    %v4378 = vunpack.c.l.b16 %v3774
    %v4379 = vunpack.c.h.b16 %v3774
    %v4380 = vunpack.c.l.b16 %v3775
    %v4381 = vunpack.c.l.b16 %v3776
    %v4382 = vunpack.c.h.b16 %v3776
    %v4383 = vunpack.c.l.b16 %v3777
    %v4384 = vunpack.c.h.b16 %v3777
    %v4385 = vunpack.c.l.b16 %v3778
    %v4386 = vunpack.c.h.b16 %v3778
    %v4387 = vunpack.c.l.b16 %v3779
    %v4388 = vunpack.c.l.b16 %v3780
    %v4389 = vunpack.c.h.b16 %v3780
    %v4390 = vunpack.c.l.b16 %v3781
    %v4391 = vunpack.c.h.b16 %v3781
    %v4392 = vunpack.c.l.b16 %v3782
    %v4393 = vunpack.c.h.b16 %v3782
    %v4394 = vunpack.c.l.b16 %v3783
    %v4395 = vunpack.c.l.b16 %v3784
    %v4396 = vunpack.c.h.b16 %v3784
    %v4397 = vunpack.c.l.b16 %v3785
    %v4398 = vunpack.c.h.b16 %v3785
    %v4399 = vunpack.c.l.b16 %v3786
    %v4400 = vunpack.c.h.b16 %v3786
    %v4401 = vunpack.c.l.b16 %v3787
    %v4402 = vunpack.c.l.b16 %v3788
    %v4403 = vunpack.c.h.b16 %v3788
    %v4404 = vunpack.c.l.b16 %v3789
    %v4405 = vunpack.c.h.b16 %v3789
    %v4406 = vunpack.c.l.b16 %v3790
    %v4407 = vunpack.c.h.b16 %v3790
    %v4408 = vunpack.c.l.b16 %v3791
    %v4409 = vunpack.c.l.b16 %v3792
    %v4410 = vunpack.c.h.b16 %v3792
    %v4411 = vunpack.c.l.b16 %v3793
    %v4412 = vunpack.c.h.b16 %v3793
    %v4413 = vunpack.c.l.b16 %v3794
    %v4414 = vunpack.c.h.b16 %v3794
    %v4415 = vunpack.c.l.b16 %v3795
    %v4416 = vunpack.c.l.b16 %v3796
    %v4417 = vunpack.c.h.b16 %v3796
    %v4418 = vunpack.c.l.b16 %v3797
    %v4419 = vunpack.c.h.b16 %v3797
    %v4420 = vunpack.c.l.b16 %v3798
    %v4421 = vunpack.c.h.b16 %v3798
    %v4422 = vunpack.c.l.b16 %v3799
    %v4423 = vunpack.c.l.b16 %v3800
    %v4424 = vunpack.c.h.b16 %v3800
    %v4425 = vunpack.c.l.b16 %v3801
    %v4426 = vunpack.c.h.b16 %v3801
    %v4427 = vunpack.c.l.b16 %v3802
    %v4428 = vunpack.c.h.b16 %v3802
    %v4429 = vunpack.c.l.b16 %v3803
    %v4430 = vunpack.c.l.b16 %v3804
    %v4431 = vunpack.c.h.b16 %v3804
    %v4432 = vunpack.c.l.b16 %v3805
    %v4433 = vunpack.c.h.b16 %v3805
    %v4434 = vunpack.c.l.b16 %v3806
    %v4435 = vunpack.c.h.b16 %v3806
    %v4436 = vunpack.c.l.b16 %v3807
    %v4437 = vunpack.c.l.b16 %v3808
    %v4438 = vunpack.c.h.b16 %v3808
    %v4439 = vunpack.c.l.b16 %v3809
    %v4440 = vunpack.c.h.b16 %v3809
    %v4441 = vunpack.c.l.b16 %v3810
    %v4442 = vunpack.c.h.b16 %v3810
    %v4443 = vunpack.c.l.b16 %v3811
    %v4444 = vunpack.c.l.b16 %v3812
    %v4445 = vunpack.c.h.b16 %v3812
    %v4446 = vunpack.c.l.b16 %v3813
    %v4447 = vunpack.c.h.b16 %v3813
    %v4448 = vunpack.c.l.b16 %v3814
    %v4449 = vunpack.c.h.b16 %v3814
    %v4450 = vunpack.c.l.b16 %v3815
    %v4451 = vunpack.c.l.b16 %v3816
    %v4452 = vunpack.c.h.b16 %v3816
    %v4453 = vunpack.c.l.b16 %v3817
    %v4454 = vunpack.c.h.b16 %v3817
    %v4455 = vunpack.c.l.b16 %v3818
    %v4456 = vunpack.c.h.b16 %v3818
    %v4457 = vunpack.c.l.b16 %v3819
    %v4458 = vunpack.c.l.b16 %v3820
    %v4459 = vunpack.c.h.b16 %v3820
    %v4460 = vunpack.c.l.b16 %v3821
    %v4461 = vunpack.c.h.b16 %v3821
    %v4462 = vunpack.c.l.b16 %v3822
    %v4463 = vunpack.c.h.b16 %v3822
    %v4464 = vunpack.c.l.b16 %v3823
    %v4465 = vunpack.c.l.b16 %v3824
    %v4466 = vunpack.c.h.b16 %v3824
    %v4467 = vunpack.c.l.b16 %v3825
    %v4468 = vunpack.c.h.b16 %v3825
    %v4469 = vunpack.c.l.b16 %v3826
    %v4470 = vunpack.c.h.b16 %v3826
    %v4471 = vunpack.c.l.b16 %v3827
    %v4472 = vunpack.c.l.b16 %v3828
    %v4473 = vunpack.c.h.b16 %v3828
    %v4474 = vunpack.c.l.b16 %v3829
    %v4475 = vunpack.c.h.b16 %v3829
    %v4476 = vunpack.c.l.b16 %v3830
    %v4477 = vunpack.c.h.b16 %v3830
    %v4478 = vunpack.c.l.b16 %v3831
    %v4479 = vunpack.c.l.b16 %v3832
    %v4480 = vunpack.c.h.b16 %v3832
    %v4481 = vunpack.c.l.b16 %v3833
    %v4482 = vunpack.c.h.b16 %v3833
    %v4483 = vunpack.c.l.b16 %v3834
    %v4484 = vunpack.c.h.b16 %v3834
    %v4485 = vunpack.c.l.b16 %v3835
    %v4486 = vunpack.c.l.b16 %v3836
    %v4487 = vunpack.c.h.b16 %v3836
    %v4488 = vunpack.c.l.b16 %v3837
    %v4489 = vunpack.c.h.b16 %v3837
    %v4490 = vunpack.c.l.b16 %v3838
    %v4491 = vunpack.c.h.b16 %v3838
    %v4492 = vunpack.c.l.b16 %v3839
    %v4493 = vunpack.c.l.b16 %v3840
    %v4494 = vunpack.c.h.b16 %v3840
    %v4495 = vunpack.c.l.b16 %v3841
    %v4496 = vunpack.c.h.b16 %v3841
    %v4497 = vunpack.c.l.b16 %v3842
    %v4498 = vunpack.c.h.b16 %v3842
    %v4499 = vunpack.c.l.b16 %v3843
    %v4500 = vpack.c.b16 %v4115, %v4108
    %v4501 = vpack.c.b16 %v4116, %v4109
    %v4502 = vpack.c.b16 %v4117, %v4110
    %v4503 = vpack.c.b16 %v4118, %v4111
    %v4504 = vpack.c.b16 %v4119, %v4112
    %v4505 = vpack.c.b16 %v4120, %v4113
    %v4506 = vpack.c.b16 %v4121, %v4114
    %v4507 = vpack.c.b16 %v4129, %v4122
    %v4508 = vpack.c.b16 %v4130, %v4123
    %v4509 = vpack.c.b16 %v4131, %v4124
    %v4510 = vpack.c.b16 %v4132, %v4125
    %v4511 = vpack.c.b16 %v4133, %v4126
    %v4512 = vpack.c.b16 %v4134, %v4127
    %v4513 = vpack.c.b16 %v4135, %v4128
    %v4514 = vpack.c.b16 %v4143, %v4136
    %v4515 = vpack.c.b16 %v4144, %v4137
    %v4516 = vpack.c.b16 %v4145, %v4138
    %v4517 = vpack.c.b16 %v4146, %v4139
    %v4518 = vpack.c.b16 %v4147, %v4140
    %v4519 = vpack.c.b16 %v4148, %v4141
    %v4520 = vpack.c.b16 %v4149, %v4142
    %v4521 = vpack.c.b16 %v4157, %v4150
    %v4522 = vpack.c.b16 %v4158, %v4151
    %v4523 = vpack.c.b16 %v4159, %v4152
    %v4524 = vpack.c.b16 %v4160, %v4153
    %v4525 = vpack.c.b16 %v4161, %v4154
    %v4526 = vpack.c.b16 %v4162, %v4155
    %v4527 = vpack.c.b16 %v4163, %v4156
    %v4528 = vpack.c.b16 %v4171, %v4164
    %v4529 = vpack.c.b16 %v4172, %v4165
    %v4530 = vpack.c.b16 %v4173, %v4166
    %v4531 = vpack.c.b16 %v4174, %v4167
    %v4532 = vpack.c.b16 %v4175, %v4168
    %v4533 = vpack.c.b16 %v4176, %v4169
    %v4534 = vpack.c.b16 %v4177, %v4170
    %v4535 = vpack.c.b16 %v4185, %v4178
    %v4536 = vpack.c.b16 %v4186, %v4179
    %v4537 = vpack.c.b16 %v4187, %v4180
    %v4538 = vpack.c.b16 %v4188, %v4181
    %v4539 = vpack.c.b16 %v4189, %v4182
    %v4540 = vpack.c.b16 %v4190, %v4183
    %v4541 = vpack.c.b16 %v4191, %v4184
    %v4542 = vpack.c.b16 %v4199, %v4192
    %v4543 = vpack.c.b16 %v4200, %v4193
    %v4544 = vpack.c.b16 %v4201, %v4194
    %v4545 = vpack.c.b16 %v4202, %v4195
    %v4546 = vpack.c.b16 %v4203, %v4196
    %v4547 = vpack.c.b16 %v4204, %v4197
    %v4548 = vpack.c.b16 %v4205, %v4198
    %v4549 = vpack.c.b16 %v4213, %v4206
    %v4550 = vpack.c.b16 %v4214, %v4207
    %v4551 = vpack.c.b16 %v4215, %v4208
    %v4552 = vpack.c.b16 %v4216, %v4209
    %v4553 = vpack.c.b16 %v4217, %v4210
    %v4554 = vpack.c.b16 %v4218, %v4211
    %v4555 = vpack.c.b16 %v4219, %v4212
    %v4556 = vpack.c.b16 %v4227, %v4220
    %v4557 = vpack.c.b16 %v4228, %v4221
    %v4558 = vpack.c.b16 %v4229, %v4222
    %v4559 = vpack.c.b16 %v4230, %v4223
    %v4560 = vpack.c.b16 %v4231, %v4224
    %v4561 = vpack.c.b16 %v4232, %v4225
    %v4562 = vpack.c.b16 %v4233, %v4226
    %v4563 = vpack.c.b16 %v4241, %v4234
    %v4564 = vpack.c.b16 %v4242, %v4235
    %v4565 = vpack.c.b16 %v4243, %v4236
    %v4566 = vpack.c.b16 %v4244, %v4237
    %v4567 = vpack.c.b16 %v4245, %v4238
    %v4568 = vpack.c.b16 %v4246, %v4239
    %v4569 = vpack.c.b16 %v4247, %v4240
    %v4570 = vpack.c.b16 %v4255, %v4248
    %v4571 = vpack.c.b16 %v4256, %v4249
    %v4572 = vpack.c.b16 %v4257, %v4250
    %v4573 = vpack.c.b16 %v4258, %v4251
    %v4574 = vpack.c.b16 %v4259, %v4252
    %v4575 = vpack.c.b16 %v4260, %v4253
    %v4576 = vpack.c.b16 %v4261, %v4254
    %v4577 = vpack.c.b16 %v4269, %v4262
    %v4578 = vpack.c.b16 %v4270, %v4263
    %v4579 = vpack.c.b16 %v4271, %v4264
    %v4580 = vpack.c.b16 %v4272, %v4265
    %v4581 = vpack.c.b16 %v4273, %v4266
    %v4582 = vpack.c.b16 %v4274, %v4267
    %v4583 = vpack.c.b16 %v4275, %v4268
    %v4584 = vpack.c.b16 %v4283, %v4276
    %v4585 = vpack.c.b16 %v4284, %v4277
    %v4586 = vpack.c.b16 %v4285, %v4278
    %v4587 = vpack.c.b16 %v4286, %v4279
    %v4588 = vpack.c.b16 %v4287, %v4280
    %v4589 = vpack.c.b16 %v4288, %v4281
    %v4590 = vpack.c.b16 %v4289, %v4282
    %v4591 = vpack.c.b16 %v4297, %v4290
    %v4592 = vpack.c.b16 %v4298, %v4291
    %v4593 = vpack.c.b16 %v4299, %v4292
    %v4594 = vpack.c.b16 %v4300, %v4293
    %v4595 = vpack.c.b16 %v4301, %v4294
    %v4596 = vpack.c.b16 %v4302, %v4295
    %v4597 = vpack.c.b16 %v4303, %v4296
    %v4598 = vpack.c.b16 %v4311, %v4304
    %v4599 = vpack.c.b16 %v4312, %v4305
    %v4600 = vpack.c.b16 %v4313, %v4306
    %v4601 = vpack.c.b16 %v4314, %v4307
    %v4602 = vpack.c.b16 %v4315, %v4308
    %v4603 = vpack.c.b16 %v4316, %v4309
    %v4604 = vpack.c.b16 %v4317, %v4310
    %v4605 = vpack.c.b16 %v4325, %v4318
    %v4606 = vpack.c.b16 %v4326, %v4319
    %v4607 = vpack.c.b16 %v4327, %v4320
    %v4608 = vpack.c.b16 %v4328, %v4321
    %v4609 = vpack.c.b16 %v4329, %v4322
    %v4610 = vpack.c.b16 %v4330, %v4323
    %v4611 = vpack.c.b16 %v4331, %v4324
    %v4612 = vpack.c.b16 %v4339, %v4332
    %v4613 = vpack.c.b16 %v4340, %v4333
    %v4614 = vpack.c.b16 %v4341, %v4334
    %v4615 = vpack.c.b16 %v4342, %v4335
    %v4616 = vpack.c.b16 %v4343, %v4336
    %v4617 = vpack.c.b16 %v4344, %v4337
    %v4618 = vpack.c.b16 %v4345, %v4338
    %v4619 = vpack.c.b16 %v4353, %v4346
    %v4620 = vpack.c.b16 %v4354, %v4347
    %v4621 = vpack.c.b16 %v4355, %v4348
    %v4622 = vpack.c.b16 %v4356, %v4349
    %v4623 = vpack.c.b16 %v4357, %v4350
    %v4624 = vpack.c.b16 %v4358, %v4351
    %v4625 = vpack.c.b16 %v4359, %v4352
    %v4626 = vpack.c.b16 %v4367, %v4360
    %v4627 = vpack.c.b16 %v4368, %v4361
    %v4628 = vpack.c.b16 %v4369, %v4362
    %v4629 = vpack.c.b16 %v4370, %v4363
    %v4630 = vpack.c.b16 %v4371, %v4364
    %v4631 = vpack.c.b16 %v4372, %v4365
    %v4632 = vpack.c.b16 %v4373, %v4366
    %v4633 = vpack.c.b16 %v4381, %v4374
    %v4634 = vpack.c.b16 %v4382, %v4375
    %v4635 = vpack.c.b16 %v4383, %v4376
    %v4636 = vpack.c.b16 %v4384, %v4377
    %v4637 = vpack.c.b16 %v4385, %v4378
    %v4638 = vpack.c.b16 %v4386, %v4379
    %v4639 = vpack.c.b16 %v4387, %v4380
    %v4640 = vpack.c.b16 %v4395, %v4388
    %v4641 = vpack.c.b16 %v4396, %v4389
    %v4642 = vpack.c.b16 %v4397, %v4390
    %v4643 = vpack.c.b16 %v4398, %v4391
    %v4644 = vpack.c.b16 %v4399, %v4392
    %v4645 = vpack.c.b16 %v4400, %v4393
    %v4646 = vpack.c.b16 %v4401, %v4394
    %v4647 = vpack.c.b16 %v4409, %v4402
    %v4648 = vpack.c.b16 %v4410, %v4403
    %v4649 = vpack.c.b16 %v4411, %v4404
    %v4650 = vpack.c.b16 %v4412, %v4405
    %v4651 = vpack.c.b16 %v4413, %v4406
    %v4652 = vpack.c.b16 %v4414, %v4407
    %v4653 = vpack.c.b16 %v4415, %v4408
    %v4654 = vpack.c.b16 %v4423, %v4416
    %v4655 = vpack.c.b16 %v4424, %v4417
    %v4656 = vpack.c.b16 %v4425, %v4418
    %v4657 = vpack.c.b16 %v4426, %v4419
    %v4658 = vpack.c.b16 %v4427, %v4420
    %v4659 = vpack.c.b16 %v4428, %v4421
    %v4660 = vpack.c.b16 %v4429, %v4422
    %v4661 = vpack.c.b16 %v4437, %v4430
    %v4662 = vpack.c.b16 %v4438, %v4431
    %v4663 = vpack.c.b16 %v4439, %v4432
    %v4664 = vpack.c.b16 %v4440, %v4433
    %v4665 = vpack.c.b16 %v4441, %v4434
    %v4666 = vpack.c.b16 %v4442, %v4435
    %v4667 = vpack.c.b16 %v4443, %v4436
    %v4668 = vpack.c.b16 %v4451, %v4444
    %v4669 = vpack.c.b16 %v4452, %v4445
    %v4670 = vpack.c.b16 %v4453, %v4446
    %v4671 = vpack.c.b16 %v4454, %v4447
    %v4672 = vpack.c.b16 %v4455, %v4448
    %v4673 = vpack.c.b16 %v4456, %v4449
    %v4674 = vpack.c.b16 %v4457, %v4450
    %v4675 = vpack.c.b16 %v4465, %v4458
    %v4676 = vpack.c.b16 %v4466, %v4459
    %v4677 = vpack.c.b16 %v4467, %v4460
    %v4678 = vpack.c.b16 %v4468, %v4461
    %v4679 = vpack.c.b16 %v4469, %v4462
    %v4680 = vpack.c.b16 %v4470, %v4463
    %v4681 = vpack.c.b16 %v4471, %v4464
    %v4682 = vpack.c.b16 %v4479, %v4472
    %v4683 = vpack.c.b16 %v4480, %v4473
    %v4684 = vpack.c.b16 %v4481, %v4474
    %v4685 = vpack.c.b16 %v4482, %v4475
    %v4686 = vpack.c.b16 %v4483, %v4476
    %v4687 = vpack.c.b16 %v4484, %v4477
    %v4688 = vpack.c.b16 %v4485, %v4478
    %v4689 = vpack.c.b16 %v4493, %v4486
    %v4690 = vpack.c.b16 %v4494, %v4487
    %v4691 = vpack.c.b16 %v4495, %v4488
    %v4692 = vpack.c.b16 %v4496, %v4489
    %v4693 = vpack.c.b16 %v4497, %v4490
    %v4694 = vpack.c.b16 %v4498, %v4491
    %v4695 = vpack.c.b16 %v4499, %v4492
    %v4893 = vsel %vm2381, %v3847, 0
    %4895 = vmatprep.subr.bf16.mxu0 %v4501
    %4896 = vmatpush1.bf16.msra.mxu0 %v4500
    %4897 = vmatprep.subr.bf16.mxu0 %v4508
    %4898 = vmatpush1.bf16.msra.mxu0 %v4507
    %4899 = vmatprep.subr.bf16.mxu0 %v4515
    %4900 = vmatpush1.bf16.msra.mxu0 %v4514
    %4901 = vmatprep.subr.bf16.mxu0 %v4522
    %4902 = vmatpush1.bf16.msra.mxu0 %v4521
    %4903 = vmatprep.subr.bf16.mxu0 %v4529
    %4904 = vmatpush1.bf16.msra.mxu0 %v4528
    %4905 = vmatprep.subr.bf16.mxu0 %v4536
    %4906 = vmatpush1.bf16.msra.mxu0 %v4535
    %4907 = vmatprep.subr.bf16.mxu0 %v4543
    %4908 = vmatpush1.bf16.msra.mxu0 %v4542
    %4909 = vmatprep.subr.bf16.mxu0 %v4550
    %4910 = vmatpush1.bf16.msra.mxu0 %v4549
    %4911 = vmatprep.subr.bf16.mxu0 %v4557
    %4912 = vmatpush1.bf16.msra.mxu0 %v4556
    %4913 = vmatprep.subr.bf16.mxu0 %v4564
    %4914 = vmatpush1.bf16.msra.mxu0 %v4563
    %4915 = vmatprep.subr.bf16.mxu0 %v4571
    %4916 = vmatpush1.bf16.msra.mxu0 %v4570
    %4917 = vmatprep.subr.bf16.mxu0 %v4578
    %4918 = vmatpush1.bf16.msra.mxu0 %v4577
    %4919 = vmatprep.subr.bf16.mxu0 %v4585
    %4920 = vmatpush1.bf16.msra.mxu0 %v4584
    %4921 = vmatprep.subr.bf16.mxu0 %v4592
    %4922 = vmatpush1.bf16.msra.mxu0 %v4591
    %4923 = vmatprep.subr.bf16.mxu0 %v4599
    %4924 = vmatpush1.bf16.msra.mxu0 %v4598
    %4925 = vmatprep.subr.bf16.mxu0 %v4606
    %4926 = vmatpush1.bf16.msra.mxu0 %v4605
    %4927 = vmatprep.mubr.bf16.mxu0 %v3845
    %4928 = vmatmul.mubr.bf16.gmra.mrb[0].mxu0 %v3844
    %v4929 = vpop.f32.mrb[0].mxu0
    %v4930 = vadd.f32 %v3852, %v4929
    %v4931 = vpop.f32.mrb[0].mxu0
    %v4932 = vadd.f32 %v3856, %v4931
    %v4933 = vpop.f32.mrb[0].mxu0
    %v4934 = vpop.f32.mrb[0].mxu0
    %4935 = vdwg.mxu0
    %4936 = vmatprep.subr.bf16.mxu0 %v4613
    %4937 = vmatpush1.bf16.msra.mxu0 %v4612
    %4938 = vmatprep.subr.bf16.mxu0 %v4620
    %4939 = vmatpush1.bf16.msra.mxu0 %v4619
    %4940 = vmatprep.subr.bf16.mxu0 %v4627
    %4941 = vmatpush1.bf16.msra.mxu0 %v4626
    %4942 = vmatprep.subr.bf16.mxu0 %v4634
    %4943 = vmatpush1.bf16.msra.mxu0 %v4633
    %4944 = vmatprep.subr.bf16.mxu0 %v4641
    %4945 = vmatpush1.bf16.msra.mxu0 %v4640
    %4946 = vmatprep.subr.bf16.mxu0 %v4648
    %4947 = vmatpush1.bf16.msra.mxu0 %v4647
    %4948 = vmatprep.subr.bf16.mxu0 %v4655
    %4949 = vmatpush1.bf16.msra.mxu0 %v4654
    %4950 = vmatprep.subr.bf16.mxu0 %v4662
    %4951 = vmatpush1.bf16.msra.mxu0 %v4661
    %4952 = vmatprep.subr.bf16.mxu0 %v4669
    %4953 = vmatpush1.bf16.msra.mxu0 %v4668
    %4954 = vmatprep.subr.bf16.mxu0 %v4676
    %4955 = vmatpush1.bf16.msra.mxu0 %v4675
    %4956 = vmatprep.subr.bf16.mxu0 %v4683
    %4957 = vmatpush1.bf16.msra.mxu0 %v4682
    %4958 = vmatprep.subr.bf16.mxu0 %v4690
    %4959 = vmatpush1.bf16.msra.mxu0 %v4689
    %4960 = vmatprep.subr.bf16.mxu0 0
    %4961 = vmatpush1.bf16.msra.mxu0 0
    %4962 = vmatprep.subr.bf16.mxu0 0
    %4963 = vmatpush1.bf16.msra.mxu0 0
    %4964 = vmatprep.subr.bf16.mxu0 0
    %4965 = vmatpush1.bf16.msra.mxu0 0
    %4966 = vmatprep.subr.bf16.mxu0 0
    %4967 = vmatpush1.bf16.msra.mxu0 0
    %4968 = vmatprep.mubr.bf16.mxu0 %v4893
    %4969 = vmatmul.mubr.bf16.gmra.mrb[0].mxu0 %v3846
    %v4970 = vpop.f32.mrb[0].mxu0
    %v4971 = vadd.f32 %v4930, %v4970
    %v4972 = vpop.f32.mrb[0].mxu0
    %v4973 = vadd.f32 %v4932, %v4972
    %v4974 = vpop.f32.mrb[0].mxu0
    %v4975 = vpop.f32.mrb[0].mxu0
    %4976 = vdwg.mxu0
    %4977 = vmatprep.subr.bf16.mxu0 %v4503
    %4978 = vmatpush1.bf16.msra.mxu0 %v4502
    %4979 = vmatprep.subr.bf16.mxu0 %v4510
    %4980 = vmatpush1.bf16.msra.mxu0 %v4509
    %4981 = vmatprep.subr.bf16.mxu0 %v4517
    %4982 = vmatpush1.bf16.msra.mxu0 %v4516
    %4983 = vmatprep.subr.bf16.mxu0 %v4524
    %4984 = vmatpush1.bf16.msra.mxu0 %v4523
    %4985 = vmatprep.subr.bf16.mxu0 %v4531
    %4986 = vmatpush1.bf16.msra.mxu0 %v4530
    %4987 = vmatprep.subr.bf16.mxu0 %v4538
    %4988 = vmatpush1.bf16.msra.mxu0 %v4537
    %4989 = vmatprep.subr.bf16.mxu0 %v4545
    %4990 = vmatpush1.bf16.msra.mxu0 %v4544
    %4991 = vmatprep.subr.bf16.mxu0 %v4552
    %4992 = vmatpush1.bf16.msra.mxu0 %v4551
    %4993 = vmatprep.subr.bf16.mxu0 %v4559
    %4994 = vmatpush1.bf16.msra.mxu0 %v4558
    %4995 = vmatprep.subr.bf16.mxu0 %v4566
    %4996 = vmatpush1.bf16.msra.mxu0 %v4565
    %4997 = vmatprep.subr.bf16.mxu0 %v4573
    %4998 = vmatpush1.bf16.msra.mxu0 %v4572
    %4999 = vmatprep.subr.bf16.mxu0 %v4580
    %5000 = vmatpush1.bf16.msra.mxu0 %v4579
    %5001 = vmatprep.subr.bf16.mxu0 %v4587
    %5002 = vmatpush1.bf16.msra.mxu0 %v4586
    %5003 = vmatprep.subr.bf16.mxu0 %v4594
    %5004 = vmatpush1.bf16.msra.mxu0 %v4593
    %5005 = vmatprep.subr.bf16.mxu0 %v4601
    %5006 = vmatpush1.bf16.msra.mxu0 %v4600
    %5007 = vmatprep.subr.bf16.mxu0 %v4608
    %5008 = vmatpush1.bf16.msra.mxu0 %v4607
    %5009 = vmatprep.mubr.bf16.mxu0 %v3845
    %5010 = vmatmul.mubr.bf16.gmra.mrb[0].mxu0 %v3844
    %v5011 = vpop.f32.mrb[0].mxu0
    %v5012 = vadd.f32 %v3860, %v5011
    %v5013 = vpop.f32.mrb[0].mxu0
    %v5014 = vadd.f32 %v3864, %v5013
    %v5015 = vpop.f32.mrb[0].mxu0
    %v5016 = vpop.f32.mrb[0].mxu0
    %5017 = vdwg.mxu0
    %5018 = vmatprep.subr.bf16.mxu0 %v4615
    %5019 = vmatpush1.bf16.msra.mxu0 %v4614
    %5020 = vmatprep.subr.bf16.mxu0 %v4622
    %5021 = vmatpush1.bf16.msra.mxu0 %v4621
    %5022 = vmatprep.subr.bf16.mxu0 %v4629
    %5023 = vmatpush1.bf16.msra.mxu0 %v4628
    %5024 = vmatprep.subr.bf16.mxu0 %v4636
    %5025 = vmatpush1.bf16.msra.mxu0 %v4635
    %5026 = vmatprep.subr.bf16.mxu0 %v4643
    %5027 = vmatpush1.bf16.msra.mxu0 %v4642
    %5028 = vmatprep.subr.bf16.mxu0 %v4650
    %5029 = vmatpush1.bf16.msra.mxu0 %v4649
    %5030 = vmatprep.subr.bf16.mxu0 %v4657
    %5031 = vmatpush1.bf16.msra.mxu0 %v4656
    %5032 = vmatprep.subr.bf16.mxu0 %v4664
    %5033 = vmatpush1.bf16.msra.mxu0 %v4663
    %5034 = vmatprep.subr.bf16.mxu0 %v4671
    %5035 = vmatpush1.bf16.msra.mxu0 %v4670
    %5036 = vmatprep.subr.bf16.mxu0 %v4678
    %5037 = vmatpush1.bf16.msra.mxu0 %v4677
    %5038 = vmatprep.subr.bf16.mxu0 %v4685
    %5039 = vmatpush1.bf16.msra.mxu0 %v4684
    %5040 = vmatprep.subr.bf16.mxu0 %v4692
    %5041 = vmatpush1.bf16.msra.mxu0 %v4691
    %5042 = vmatprep.subr.bf16.mxu0 0
    %5043 = vmatpush1.bf16.msra.mxu0 0
    %5044 = vmatprep.subr.bf16.mxu0 0
    %5045 = vmatpush1.bf16.msra.mxu0 0
    %5046 = vmatprep.subr.bf16.mxu0 0
    %5047 = vmatpush1.bf16.msra.mxu0 0
    %5048 = vmatprep.subr.bf16.mxu0 0
    %5049 = vmatpush1.bf16.msra.mxu0 0
    %5050 = vmatprep.mubr.bf16.mxu0 %v4893
    %5051 = vmatmul.mubr.bf16.gmra.mrb[0].mxu0 %v3846
    %v5052 = vpop.f32.mrb[0].mxu0
    %v5053 = vadd.f32 %v5012, %v5052
    %v5054 = vpop.f32.mrb[0].mxu0
    %v5055 = vadd.f32 %v5014, %v5054
    %v5056 = vpop.f32.mrb[0].mxu0
    %v5057 = vpop.f32.mrb[0].mxu0
    %5058 = vdwg.mxu0
    %5059 = vmatprep.subr.bf16.mxu0 %v4505
    %5060 = vmatpush1.bf16.msra.mxu0 %v4504
    %5061 = vmatprep.subr.bf16.mxu0 %v4512
    %5062 = vmatpush1.bf16.msra.mxu0 %v4511
    %5063 = vmatprep.subr.bf16.mxu0 %v4519
    %5064 = vmatpush1.bf16.msra.mxu0 %v4518
    %5065 = vmatprep.subr.bf16.mxu0 %v4526
    %5066 = vmatpush1.bf16.msra.mxu0 %v4525
    %5067 = vmatprep.subr.bf16.mxu0 %v4533
    %5068 = vmatpush1.bf16.msra.mxu0 %v4532
    %5069 = vmatprep.subr.bf16.mxu0 %v4540
    %5070 = vmatpush1.bf16.msra.mxu0 %v4539
    %5071 = vmatprep.subr.bf16.mxu0 %v4547
    %5072 = vmatpush1.bf16.msra.mxu0 %v4546
    %5073 = vmatprep.subr.bf16.mxu0 %v4554
    %5074 = vmatpush1.bf16.msra.mxu0 %v4553
    %5075 = vmatprep.subr.bf16.mxu0 %v4561
    %5076 = vmatpush1.bf16.msra.mxu0 %v4560
    %5077 = vmatprep.subr.bf16.mxu0 %v4568
    %5078 = vmatpush1.bf16.msra.mxu0 %v4567
    %5079 = vmatprep.subr.bf16.mxu0 %v4575
    %5080 = vmatpush1.bf16.msra.mxu0 %v4574
    %5081 = vmatprep.subr.bf16.mxu0 %v4582
    %5082 = vmatpush1.bf16.msra.mxu0 %v4581
    %5083 = vmatprep.subr.bf16.mxu0 %v4589
    %5084 = vmatpush1.bf16.msra.mxu0 %v4588
    %5085 = vmatprep.subr.bf16.mxu0 %v4596
    %5086 = vmatpush1.bf16.msra.mxu0 %v4595
    %5087 = vmatprep.subr.bf16.mxu0 %v4603
    %5088 = vmatpush1.bf16.msra.mxu0 %v4602
    %5089 = vmatprep.subr.bf16.mxu0 %v4610
    %5090 = vmatpush1.bf16.msra.mxu0 %v4609
    %5091 = vmatprep.mubr.bf16.mxu0 %v3845
    %5092 = vmatmul.mubr.bf16.gmra.mrb[0].mxu0 %v3844
    %v5093 = vpop.f32.mrb[0].mxu0
    %v5094 = vadd.f32 %v3868, %v5093
    %v5095 = vpop.f32.mrb[0].mxu0
    %v5096 = vadd.f32 %v3872, %v5095
    %v5097 = vpop.f32.mrb[0].mxu0
    %v5098 = vpop.f32.mrb[0].mxu0
    %5099 = vdwg.mxu0
    %5100 = vmatprep.subr.bf16.mxu0 %v4617
    %5101 = vmatpush1.bf16.msra.mxu0 %v4616
    %5102 = vmatprep.subr.bf16.mxu0 %v4624
    %5103 = vmatpush1.bf16.msra.mxu0 %v4623
    %5104 = vmatprep.subr.bf16.mxu0 %v4631
    %5105 = vmatpush1.bf16.msra.mxu0 %v4630
    %5106 = vmatprep.subr.bf16.mxu0 %v4638
    %5107 = vmatpush1.bf16.msra.mxu0 %v4637
    %5108 = vmatprep.subr.bf16.mxu0 %v4645
    %5109 = vmatpush1.bf16.msra.mxu0 %v4644
    %5110 = vmatprep.subr.bf16.mxu0 %v4652
    %5111 = vmatpush1.bf16.msra.mxu0 %v4651
    %5112 = vmatprep.subr.bf16.mxu0 %v4659
    %5113 = vmatpush1.bf16.msra.mxu0 %v4658
    %5114 = vmatprep.subr.bf16.mxu0 %v4666
    %5115 = vmatpush1.bf16.msra.mxu0 %v4665
    %5116 = vmatprep.subr.bf16.mxu0 %v4673
    %5117 = vmatpush1.bf16.msra.mxu0 %v4672
    %5118 = vmatprep.subr.bf16.mxu0 %v4680
    %5119 = vmatpush1.bf16.msra.mxu0 %v4679
    %5120 = vmatprep.subr.bf16.mxu0 %v4687
    %5121 = vmatpush1.bf16.msra.mxu0 %v4686
    %5122 = vmatprep.subr.bf16.mxu0 %v4694
    %5123 = vmatpush1.bf16.msra.mxu0 %v4693
    %5124 = vmatprep.subr.bf16.mxu0 0
    %5125 = vmatpush1.bf16.msra.mxu0 0
    %5126 = vmatprep.subr.bf16.mxu0 0
    %5127 = vmatpush1.bf16.msra.mxu0 0
    %5128 = vmatprep.subr.bf16.mxu0 0
    %5129 = vmatpush1.bf16.msra.mxu0 0
    %5130 = vmatprep.subr.bf16.mxu0 0
    %5131 = vmatpush1.bf16.msra.mxu0 0
    %5132 = vmatprep.mubr.bf16.mxu0 %v4893
    %5133 = vmatmul.mubr.bf16.gmra.mrb[0].mxu0 %v3846
    %v5134 = vpop.f32.mrb[0].mxu0
    %v5135 = vadd.f32 %v5094, %v5134
    %v5136 = vpop.f32.mrb[0].mxu0
    %v5137 = vadd.f32 %v5096, %v5136
    %v5138 = vpop.f32.mrb[0].mxu0
    %v5139 = vpop.f32.mrb[0].mxu0
    %5140 = vdwg.mxu0
    %5141 = vmatprep.subr.bf16.mxu0 0
    %5142 = vmatpush1.bf16.msra.mxu0 %v4506
    %5143 = vmatprep.subr.bf16.mxu0 0
    %5144 = vmatpush1.bf16.msra.mxu0 %v4513
    %5145 = vmatprep.subr.bf16.mxu0 0
    %5146 = vmatpush1.bf16.msra.mxu0 %v4520
    %5147 = vmatprep.subr.bf16.mxu0 0
    %5148 = vmatpush1.bf16.msra.mxu0 %v4527
    %5149 = vmatprep.subr.bf16.mxu0 0
    %5150 = vmatpush1.bf16.msra.mxu0 %v4534
    %5151 = vmatprep.subr.bf16.mxu0 0
    %5152 = vmatpush1.bf16.msra.mxu0 %v4541
    %5153 = vmatprep.subr.bf16.mxu0 0
    %5154 = vmatpush1.bf16.msra.mxu0 %v4548
    %5155 = vmatprep.subr.bf16.mxu0 0
    %5156 = vmatpush1.bf16.msra.mxu0 %v4555
    %5157 = vmatprep.subr.bf16.mxu0 0
    %5158 = vmatpush1.bf16.msra.mxu0 %v4562
    %5159 = vmatprep.subr.bf16.mxu0 0
    %5160 = vmatpush1.bf16.msra.mxu0 %v4569
    %5161 = vmatprep.subr.bf16.mxu0 0
    %5162 = vmatpush1.bf16.msra.mxu0 %v4576
    %5163 = vmatprep.subr.bf16.mxu0 0
    %5164 = vmatpush1.bf16.msra.mxu0 %v4583
    %5165 = vmatprep.subr.bf16.mxu0 0
    %5166 = vmatpush1.bf16.msra.mxu0 %v4590
    %5167 = vmatprep.subr.bf16.mxu0 0
    %5168 = vmatpush1.bf16.msra.mxu0 %v4597
    %5169 = vmatprep.subr.bf16.mxu0 0
    %5170 = vmatpush1.bf16.msra.mxu0 %v4604
    %5171 = vmatprep.subr.bf16.mxu0 0
    %5172 = vmatpush1.bf16.msra.mxu0 %v4611
    %5173 = vmatprep.mubr.bf16.mxu0 %v3845
    %5174 = vmatmul.mubr.bf16.gmra.mrb[0].mxu0 %v3844
    %v5175 = vpop.f32.mrb[0].mxu0
    %v5176 = vadd.f32 %v3876, %v5175
    %v5177 = vpop.f32.mrb[0].mxu0
    %v5178 = vpop.f32.mrb[0].mxu0
    %v5179 = vpop.f32.mrb[0].mxu0
    %5180 = vdwg.mxu0
    %5181 = vmatprep.subr.bf16.mxu0 0
    %5182 = vmatpush1.bf16.msra.mxu0 %v4618
    %5183 = vmatprep.subr.bf16.mxu0 0
    %5184 = vmatpush1.bf16.msra.mxu0 %v4625
    %5185 = vmatprep.subr.bf16.mxu0 0
    %5186 = vmatpush1.bf16.msra.mxu0 %v4632
    %5187 = vmatprep.subr.bf16.mxu0 0
    %5188 = vmatpush1.bf16.msra.mxu0 %v4639
    %5189 = vmatprep.subr.bf16.mxu0 0
    %5190 = vmatpush1.bf16.msra.mxu0 %v4646
    %5191 = vmatprep.subr.bf16.mxu0 0
    %5192 = vmatpush1.bf16.msra.mxu0 %v4653
    %5193 = vmatprep.subr.bf16.mxu0 0
    %5194 = vmatpush1.bf16.msra.mxu0 %v4660
    %5195 = vmatprep.subr.bf16.mxu0 0
    %5196 = vmatpush1.bf16.msra.mxu0 %v4667
    %5197 = vmatprep.subr.bf16.mxu0 0
    %5198 = vmatpush1.bf16.msra.mxu0 %v4674
    %5199 = vmatprep.subr.bf16.mxu0 0
    %5200 = vmatpush1.bf16.msra.mxu0 %v4681
    %5201 = vmatprep.subr.bf16.mxu0 0
    %5202 = vmatpush1.bf16.msra.mxu0 %v4688
    %5203 = vmatprep.subr.bf16.mxu0 0
    %5204 = vmatpush1.bf16.msra.mxu0 %v4695
    %5205 = vmatprep.subr.bf16.mxu0 0
    %5206 = vmatpush1.bf16.msra.mxu0 0
    %5207 = vmatprep.subr.bf16.mxu0 0
    %5208 = vmatpush1.bf16.msra.mxu0 0
    %5209 = vmatprep.subr.bf16.mxu0 0
    %5210 = vmatpush1.bf16.msra.mxu0 0
    %5211 = vmatprep.subr.bf16.mxu0 0
    %5212 = vmatpush1.bf16.msra.mxu0 0
    %5213 = vmatprep.mubr.bf16.mxu0 %v4893
    %5214 = vmatmul.mubr.bf16.gmra.mrb[0].mxu0 %v3846
    %v5215 = vpop.f32.mrb[0].mxu0
    %v5216 = vadd.f32 %v5176, %v5215
    %v5217 = vpop.f32.mrb[0].mxu0
    %v5218 = vpop.f32.mrb[0].mxu0
    %v5219 = vpop.f32.mrb[0].mxu0
    %5220 = vdwg.mxu0
    %v5221 = vmax.f32 %v4971, 0.0
    %v5222 = vmax.f32 %v4973, 0.0
    %v5223 = vmax.f32 %v5053, 0.0
    %v5224 = vmax.f32 %v5055, 0.0
    %v5225 = vmax.f32 %v5135, 0.0
    %v5226 = vmax.f32 %v5137, 0.0
    %v5227 = vmax.f32 %v5216, 0.0
    %5232 = vrot.lane.b32.xlu0 %v3616, 64
    %v5233 = vpop.permute.xlu0 %5232
    %5234 = vrot.lane.b32.xlu0 %v3617, 64
    %v5235 = vpop.permute.xlu0 %5234
    %5236 = vrot.lane.b32.xlu0 %v3618, 64
    %v5237 = vpop.permute.xlu0 %5236
    %5238 = vrot.lane.b32.xlu0 %v3619, 64
    %v5239 = vpop.permute.xlu0 %5238
    %v5240 = vsel %vm2381, %v5233, %v5235
    %v5241 = vsel %vm2381, %v5235, %v5237
    %v5242 = vsel %vm2381, %v5237, %v5239
    %v5247 = vsel %vm2381, %v3619, %v5233
    %v5248 = vadd.f32 %v3616, %v5221
    %v5249 = vadd.f32 %v3617, %v5222
    %v5250 = vadd.f32 %v3618, %v5223
    %v5251 = vadd.f32 %v5247, %v5224
    %v5252 = vadd.f32 %v5240, %v5225
    %v5253 = vadd.f32 %v5241, %v5226
    %v5254 = vadd.f32 %v5242, %v5227
    %v5255 = vld [vmem:[%s8] sm:$0xf]
    %v5256 = vld [vmem:[%s8 + $0x4] sm:$0xf]
    %v5257 = vld [vmem:[%s8 + $0x8] sm:$0xf]
    %v5258 = vld [vmem:[%s8 + $0xc] sm:$0xf]
    %v5259 = vld [vmem:[%s8 + $0x10] sm:$0xf]
    %v5260 = vld [vmem:[%s8 + $0x14] sm:$0xf]
    %v5261 = vld [vmem:[%s8 + $0x18] sm:$0xf]
    %v5262 = vld [vmem:[%s8 + $0x1c] sm:$0xf]
    %v5263 = vld [vmem:[%s8 + $0x20] sm:$0xf]
    %v5264 = vld [vmem:[%s8 + $0x24] sm:$0xf]
    %v5265 = vld [vmem:[%s8 + $0x28] sm:$0xf]
    %v5266 = vld [vmem:[%s8 + $0x2c] sm:$0xf]
    %v5267 = vld [vmem:[%s8 + $0x30] sm:$0xf]
    %v5268 = vld [vmem:[%s8 + $0x34] sm:$0xf]
    %v5269 = vld [vmem:[%s8 + $0x38] sm:$0xf]
    %v5270 = vld [vmem:[%s8 + $0x3c] sm:$0xf]
    %v5271 = vld [vmem:[%s8 + $0x40] sm:$0xf]
    %v5272 = vld [vmem:[%s8 + $0x44] sm:$0xf]
    %v5273 = vld [vmem:[%s8 + $0x48] sm:$0xf]
    %v5274 = vld [vmem:[%s8 + $0x4c] sm:$0xf]
    %v5275 = vld [vmem:[%s8 + $0x50] sm:$0xf]
    %v5276 = vld [vmem:[%s8 + $0x54] sm:$0xf]
    %v5277 = vld [vmem:[%s8 + $0x58] sm:$0xf]
    %v5278 = vld [vmem:[%s8 + $0x5c] sm:$0xf]
    %v5279 = vld [vmem:[%s8 + $0x60] sm:$0xf]
    %v5280 = vld [vmem:[%s8 + $0x64] sm:$0xf]
    %v5281 = vld [vmem:[%s8 + $0x68] sm:$0xf]
    %v5282 = vld [vmem:[%s8 + $0x6c] sm:$0xf]
    %v5283 = vld [vmem:[%s8 + $0x70] sm:$0xf]
    %v5284 = vld [vmem:[%s8 + $0x74] sm:$0xf]
    %v5285 = vld [vmem:[%s8 + $0x78] sm:$0xf]
    %v5286 = vld [vmem:[%s8 + $0x7c] sm:$0xf]
    %v5287 = vld [vmem:[%s8 + $0x80] sm:$0xf]
    %v5288 = vld [vmem:[%s8 + $0x84] sm:$0xf]
    %v5289 = vld [vmem:[%s8 + $0x88] sm:$0xf]
    %v5290 = vld [vmem:[%s8 + $0x8c] sm:$0xf]
    %v5291 = vld [vmem:[%s8 + $0x90] sm:$0xf]
    %v5292 = vld [vmem:[%s8 + $0x94] sm:$0xf]
    %v5293 = vld [vmem:[%s8 + $0x98] sm:$0xf]
    %v5294 = vld [vmem:[%s8 + $0x9c] sm:$0xf]
    %v5295 = vld [vmem:[%s8 + $0xa0] sm:$0xf]
    %v5296 = vld [vmem:[%s8 + $0xa4] sm:$0xf]
    %v5297 = vld [vmem:[%s8 + $0xa8] sm:$0xf]
    %v5298 = vld [vmem:[%s8 + $0xac] sm:$0xf]
    %v5299 = vld [vmem:[%s8 + $0xb0] sm:$0xf]
    %v5300 = vld [vmem:[%s8 + $0xb4] sm:$0xf]
    %v5301 = vld [vmem:[%s8 + $0xb8] sm:$0xf]
    %v5302 = vld [vmem:[%s8 + $0xbc] sm:$0xf]
    %v5303 = vld [vmem:[%s8 + $0xc0] sm:$0xf]
    %v5304 = vld [vmem:[%s8 + $0xc4] sm:$0xf]
    %v5305 = vld [vmem:[%s8 + $0xc8] sm:$0xf]
    %v5306 = vld [vmem:[%s8 + $0xcc] sm:$0xf]
    %v5307 = vld [vmem:[%s8 + $0xd0] sm:$0xf]
    %v5308 = vld [vmem:[%s8 + $0xd4] sm:$0xf]
    %v5309 = vld [vmem:[%s8 + $0xd8] sm:$0xf]
    %v5310 = vld [vmem:[%s8 + $0xdc] sm:$0xf]
    %v5311 = vld [vmem:[%s8 + $0xe0] sm:$0xf]
    %v5312 = vld [vmem:[%s8 + $0xe4] sm:$0xf]
    %v5313 = vld [vmem:[%s8 + $0xe8] sm:$0xf]
    %v5314 = vld [vmem:[%s8 + $0xec] sm:$0xf]
    %v5315 = vld [vmem:[%s8 + $0xf0] sm:$0xf]
    %v5316 = vld [vmem:[%s8 + $0xf4] sm:$0xf]
    %v5317 = vld [vmem:[%s8 + $0xf8] sm:$0xf]
    %v5318 = vld [vmem:[%s8 + $0xfc] sm:$0xf]
    %v5319 = vld [vmem:[%s8 + $0x100] sm:$0xf]
    %v5320 = vld [vmem:[%s8 + $0x104] sm:$0xf]
    %v5321 = vld [vmem:[%s8 + $0x108] sm:$0xf]
    %v5322 = vld [vmem:[%s8 + $0x10c] sm:$0xf]
    %v5323 = vld [vmem:[%s8 + $0x110] sm:$0xf]
    %v5324 = vld [vmem:[%s8 + $0x114] sm:$0xf]
    %v5325 = vld [vmem:[%s8 + $0x118] sm:$0xf]
    %v5326 = vld [vmem:[%s8 + $0x11c] sm:$0xf]
    %v5327 = vld [vmem:[%s8 + $0x120] sm:$0xf]
    %v5328 = vld [vmem:[%s8 + $0x124] sm:$0xf]
    %v5329 = vld [vmem:[%s8 + $0x128] sm:$0xf]
    %v5330 = vld [vmem:[%s8 + $0x12c] sm:$0xf]
    %v5331 = vld [vmem:[%s8 + $0x130] sm:$0xf]
    %v5332 = vld [vmem:[%s8 + $0x134] sm:$0xf]
    %v5333 = vld [vmem:[%s8 + $0x138] sm:$0xf]
    %v5334 = vld [vmem:[%s8 + $0x13c] sm:$0xf]
    %v5335 = vld [vmem:[%s8 + $0x140] sm:$0xf]
    %v5336 = vld [vmem:[%s8 + $0x144] sm:$0xf]
    %v5337 = vld [vmem:[%s8 + $0x148] sm:$0xf]
    %v5338 = vld [vmem:[%s8 + $0x14c] sm:$0xf]
    %v5339 = vld [vmem:[%s8 + $0x150] sm:$0xf]
    %v5340 = vld [vmem:[%s8 + $0x154] sm:$0xf]
    %v5341 = vld [vmem:[%s8 + $0x158] sm:$0xf]
    %v5342 = vld [vmem:[%s8 + $0x15c] sm:$0xf]
    %v5343 = vld [vmem:[%s8 + $0x160] sm:$0xf]
    %v5344 = vld [vmem:[%s8 + $0x164] sm:$0xf]
    %v5345 = vld [vmem:[%s8 + $0x168] sm:$0xf]
    %v5346 = vld [vmem:[%s8 + $0x16c] sm:$0xf]
    %v5347 = vld [vmem:[%s8 + $0x170] sm:$0xf]
    %v5348 = vld [vmem:[%s8 + $0x174] sm:$0xf]
    %v5349 = vld [vmem:[%s8 + $0x178] sm:$0xf]
    %v5350 = vld [vmem:[%s8 + $0x17c] sm:$0xf]
    %v5351 = vld [vmem:[%s8 + $0x180] sm:$0xf]
    %v5352 = vld [vmem:[%s8 + $0x184] sm:$0xf]
    %v5353 = vld [vmem:[%s8 + $0x188] sm:$0xf]
    %v5354 = vld [vmem:[%s8 + $0x18c] sm:$0xf]
    %v5355 = vld [vmem:[%s8 + $0x190] sm:$0xf]
    %v5356 = vld [vmem:[%s8 + $0x194] sm:$0xf]
    %v5357 = vld [vmem:[%s8 + $0x198] sm:$0xf]
    %v5358 = vld [vmem:[%s8 + $0x19c] sm:$0xf]
    %v5359 = vld [vmem:[%s8 + $0x1a0] sm:$0xf]
    %v5360 = vld [vmem:[%s8 + $0x1a4] sm:$0xf]
    %v5361 = vld [vmem:[%s8 + $0x1a8] sm:$0xf]
    %v5362 = vld [vmem:[%s8 + $0x1ac] sm:$0xf]
    %v5363 = vld [vmem:[%s8 + $0x1b0] sm:$0xf]
    %v5364 = vld [vmem:[%s8 + $0x1b4] sm:$0xf]
    %v5365 = vld [vmem:[%s8 + $0x1b8] sm:$0xf]
    %v5366 = vld [vmem:[%s8 + $0x1bc] sm:$0xf]
    %v5367 = vpack.c.bf16 %v5248, %v5248
    %v5368 = vpack.c.bf16 %v5249, %v5249
    %v5369 = vpack.c.bf16 %v5250, %v5250
    %v5370 = vpack.c.bf16 %v5251, %v5251
    %v5371 = vpack.c.bf16 %v5252, %v5252
    %v5372 = vpack.c.bf16 %v5253, %v5253
    %v5373 = vpack.c.bf16 %v5254, %v5254
    %v5486 = vunpack.c.l.b16 %v5255
    %v5487 = vunpack.c.l.b16 %v5256
    %v5488 = vunpack.c.l.b16 %v5257
    %v5489 = vunpack.c.l.b16 %v5258
    %v5490 = vunpack.c.l.b16 %v5259
    %v5491 = vunpack.c.l.b16 %v5260
    %v5492 = vunpack.c.l.b16 %v5261
    %v5493 = vunpack.c.l.b16 %v5262
    %v5494 = vunpack.c.l.b16 %v5263
    %v5495 = vunpack.c.l.b16 %v5264
    %v5496 = vunpack.c.l.b16 %v5265
    %v5497 = vunpack.c.l.b16 %v5266
    %v5498 = vunpack.c.l.b16 %v5267
    %v5499 = vunpack.c.l.b16 %v5268
    %v5500 = vunpack.c.l.b16 %v5269
    %v5501 = vunpack.c.l.b16 %v5270
    %v5502 = vunpack.c.l.b16 %v5271
    %v5503 = vunpack.c.l.b16 %v5272
    %v5504 = vunpack.c.l.b16 %v5273
    %v5505 = vunpack.c.l.b16 %v5274
    %v5506 = vunpack.c.l.b16 %v5275
    %v5507 = vunpack.c.l.b16 %v5276
    %v5508 = vunpack.c.l.b16 %v5277
    %v5509 = vunpack.c.l.b16 %v5278
    %v5510 = vunpack.c.l.b16 %v5279
    %v5511 = vunpack.c.l.b16 %v5280
    %v5512 = vunpack.c.l.b16 %v5281
    %v5513 = vunpack.c.l.b16 %v5282
    %v5514 = vunpack.c.l.b16 %v5283
    %v5515 = vunpack.c.l.b16 %v5284
    %v5516 = vunpack.c.l.b16 %v5285
    %v5517 = vunpack.c.l.b16 %v5286
    %v5518 = vunpack.c.l.b16 %v5287
    %v5519 = vunpack.c.l.b16 %v5288
    %v5520 = vunpack.c.l.b16 %v5289
    %v5521 = vunpack.c.l.b16 %v5290
    %v5522 = vunpack.c.l.b16 %v5291
    %v5523 = vunpack.c.l.b16 %v5292
    %v5524 = vunpack.c.l.b16 %v5293
    %v5525 = vunpack.c.l.b16 %v5294
    %v5526 = vunpack.c.l.b16 %v5295
    %v5527 = vunpack.c.l.b16 %v5296
    %v5528 = vunpack.c.l.b16 %v5297
    %v5529 = vunpack.c.l.b16 %v5298
    %v5530 = vunpack.c.l.b16 %v5299
    %v5531 = vunpack.c.l.b16 %v5300
    %v5532 = vunpack.c.l.b16 %v5301
    %v5533 = vunpack.c.l.b16 %v5302
    %v5534 = vunpack.c.l.b16 %v5303
    %v5535 = vunpack.c.l.b16 %v5304
    %v5536 = vunpack.c.l.b16 %v5305
    %v5537 = vunpack.c.l.b16 %v5306
    %v5538 = vunpack.c.l.b16 %v5307
    %v5539 = vunpack.c.l.b16 %v5308
    %v5540 = vunpack.c.l.b16 %v5309
    %v5541 = vunpack.c.l.b16 %v5310
    %v5542 = vunpack.c.l.b16 %v5311
    %v5543 = vunpack.c.l.b16 %v5312
    %v5544 = vunpack.c.l.b16 %v5313
    %v5545 = vunpack.c.l.b16 %v5314
    %v5546 = vunpack.c.l.b16 %v5315
    %v5547 = vunpack.c.l.b16 %v5316
    %v5548 = vunpack.c.l.b16 %v5317
    %v5549 = vunpack.c.l.b16 %v5318
    %v5550 = vunpack.c.l.b16 %v5319
    %v5551 = vunpack.c.l.b16 %v5320
    %v5552 = vunpack.c.l.b16 %v5321
    %v5553 = vunpack.c.l.b16 %v5322
    %v5554 = vunpack.c.l.b16 %v5323
    %v5555 = vunpack.c.l.b16 %v5324
    %v5556 = vunpack.c.l.b16 %v5325
    %v5557 = vunpack.c.l.b16 %v5326
    %v5558 = vunpack.c.l.b16 %v5327
    %v5559 = vunpack.c.l.b16 %v5328
    %v5560 = vunpack.c.l.b16 %v5329
    %v5561 = vunpack.c.l.b16 %v5330
    %v5562 = vunpack.c.l.b16 %v5331
    %v5563 = vunpack.c.l.b16 %v5332
    %v5564 = vunpack.c.l.b16 %v5333
    %v5565 = vunpack.c.l.b16 %v5334
    %v5566 = vunpack.c.l.b16 %v5335
    %v5567 = vunpack.c.l.b16 %v5336
    %v5568 = vunpack.c.l.b16 %v5337
    %v5569 = vunpack.c.l.b16 %v5338
    %v5570 = vunpack.c.l.b16 %v5339
    %v5571 = vunpack.c.l.b16 %v5340
    %v5572 = vunpack.c.l.b16 %v5341
    %v5573 = vunpack.c.l.b16 %v5342
    %v5574 = vunpack.c.l.b16 %v5343
    %v5575 = vunpack.c.l.b16 %v5344
    %v5576 = vunpack.c.l.b16 %v5345
    %v5577 = vunpack.c.l.b16 %v5346
    %v5578 = vunpack.c.l.b16 %v5347
    %v5579 = vunpack.c.l.b16 %v5348
    %v5580 = vunpack.c.l.b16 %v5349
    %v5581 = vunpack.c.l.b16 %v5350
    %v5582 = vunpack.c.l.b16 %v5351
    %v5583 = vunpack.c.l.b16 %v5352
    %v5584 = vunpack.c.l.b16 %v5353
    %v5585 = vunpack.c.l.b16 %v5354
    %v5586 = vunpack.c.l.b16 %v5355
    %v5587 = vunpack.c.l.b16 %v5356
    %v5588 = vunpack.c.l.b16 %v5357
    %v5589 = vunpack.c.l.b16 %v5358
    %v5590 = vunpack.c.l.b16 %v5359
    %v5591 = vunpack.c.l.b16 %v5360
    %v5592 = vunpack.c.l.b16 %v5361
    %v5593 = vunpack.c.l.b16 %v5362
    %v5594 = vunpack.c.l.b16 %v5363
    %v5595 = vunpack.c.l.b16 %v5364
    %v5596 = vunpack.c.l.b16 %v5365
    %v5597 = vunpack.c.l.b16 %v5366
    %v5598 = vpack.c.b16 %v5487, %v5486
    %v5599 = vpack.c.b16 %v5489, %v5488
    %v5600 = vpack.c.b16 %v5491, %v5490
    %v5601 = vpack.c.b16 %v5493, %v5492
    %v5602 = vpack.c.b16 %v5495, %v5494
    %v5603 = vpack.c.b16 %v5497, %v5496
    %v5604 = vpack.c.b16 %v5499, %v5498
    %v5605 = vpack.c.b16 %v5501, %v5500
    %v5606 = vpack.c.b16 %v5503, %v5502
    %v5607 = vpack.c.b16 %v5505, %v5504
    %v5608 = vpack.c.b16 %v5507, %v5506
    %v5609 = vpack.c.b16 %v5509, %v5508
    %v5610 = vpack.c.b16 %v5511, %v5510
    %v5611 = vpack.c.b16 %v5513, %v5512
    %v5612 = vpack.c.b16 %v5515, %v5514
    %v5613 = vpack.c.b16 %v5517, %v5516
    %v5614 = vpack.c.b16 %v5519, %v5518
    %v5615 = vpack.c.b16 %v5521, %v5520
    %v5616 = vpack.c.b16 %v5523, %v5522
    %v5617 = vpack.c.b16 %v5525, %v5524
    %v5618 = vpack.c.b16 %v5527, %v5526
    %v5619 = vpack.c.b16 %v5529, %v5528
    %v5620 = vpack.c.b16 %v5531, %v5530
    %v5621 = vpack.c.b16 %v5533, %v5532
    %v5622 = vpack.c.b16 %v5535, %v5534
    %v5623 = vpack.c.b16 %v5537, %v5536
    %v5624 = vpack.c.b16 %v5539, %v5538
    %v5625 = vpack.c.b16 %v5541, %v5540
    %v5626 = vpack.c.b16 %v5543, %v5542
    %v5627 = vpack.c.b16 %v5545, %v5544
    %v5628 = vpack.c.b16 %v5547, %v5546
    %v5629 = vpack.c.b16 %v5549, %v5548
    %v5630 = vpack.c.b16 %v5551, %v5550
    %v5631 = vpack.c.b16 %v5553, %v5552
    %v5632 = vpack.c.b16 %v5555, %v5554
    %v5633 = vpack.c.b16 %v5557, %v5556
    %v5634 = vpack.c.b16 %v5559, %v5558
    %v5635 = vpack.c.b16 %v5561, %v5560
    %v5636 = vpack.c.b16 %v5563, %v5562
    %v5637 = vpack.c.b16 %v5565, %v5564
    %v5638 = vpack.c.b16 %v5567, %v5566
    %v5639 = vpack.c.b16 %v5569, %v5568
    %v5640 = vpack.c.b16 %v5571, %v5570
    %v5641 = vpack.c.b16 %v5573, %v5572
    %v5642 = vpack.c.b16 %v5575, %v5574
    %v5643 = vpack.c.b16 %v5577, %v5576
    %v5644 = vpack.c.b16 %v5579, %v5578
    %v5645 = vpack.c.b16 %v5581, %v5580
    %v5646 = vpack.c.b16 %v5583, %v5582
    %v5647 = vpack.c.b16 %v5585, %v5584
    %v5648 = vpack.c.b16 %v5587, %v5586
    %v5649 = vpack.c.b16 %v5589, %v5588
    %v5650 = vpack.c.b16 %v5591, %v5590
    %v5651 = vpack.c.b16 %v5593, %v5592
    %v5652 = vpack.c.b16 %v5595, %v5594
    %v5653 = vpack.c.b16 %v5597, %v5596
    %5710 = vmatprep.subr.bf16.mxu0 0
    %5711 = vmatpush1.bf16.msra.mxu0 %v5598
    %5712 = vmatprep.subr.bf16.mxu0 0
    %5713 = vmatpush1.bf16.msra.mxu0 %v5599
    %5714 = vmatprep.subr.bf16.mxu0 0
    %5715 = vmatpush1.bf16.msra.mxu0 %v5600
    %5716 = vmatprep.subr.bf16.mxu0 0
    %5717 = vmatpush1.bf16.msra.mxu0 %v5601
    %5718 = vmatprep.subr.bf16.mxu0 0
    %5719 = vmatpush1.bf16.msra.mxu0 %v5602
    %5720 = vmatprep.subr.bf16.mxu0 0
    %5721 = vmatpush1.bf16.msra.mxu0 %v5603
    %5722 = vmatprep.subr.bf16.mxu0 0
    %5723 = vmatpush1.bf16.msra.mxu0 %v5604
    %5724 = vmatprep.subr.bf16.mxu0 0
    %5725 = vmatpush1.bf16.msra.mxu0 %v5605
    %5726 = vmatprep.subr.bf16.mxu0 0
    %5727 = vmatpush1.bf16.msra.mxu0 %v5606
    %5728 = vmatprep.subr.bf16.mxu0 0
    %5729 = vmatpush1.bf16.msra.mxu0 %v5607
    %5730 = vmatprep.subr.bf16.mxu0 0
    %5731 = vmatpush1.bf16.msra.mxu0 %v5608
    %5732 = vmatprep.subr.bf16.mxu0 0
    %5733 = vmatpush1.bf16.msra.mxu0 %v5609
    %5734 = vmatprep.subr.bf16.mxu0 0
    %5735 = vmatpush1.bf16.msra.mxu0 %v5610
    %5736 = vmatprep.subr.bf16.mxu0 0
    %5737 = vmatpush1.bf16.msra.mxu0 %v5611
    %5738 = vmatprep.subr.bf16.mxu0 0
    %5739 = vmatpush1.bf16.msra.mxu0 %v5612
    %5740 = vmatprep.subr.bf16.mxu0 0
    %5741 = vmatpush1.bf16.msra.mxu0 %v5613
    %5742 = vmatprep.mubr.bf16.mxu0 %v5368
    %5743 = vmatmul.mubr.bf16.gmra.mrb[0].mxu0 %v5367
    %v5744 = vpop.f32.mrb[0].mxu0
    %v5745 = vadd.f32 %v48, %v5744
    %v5746 = vpop.f32.mrb[0].mxu0
    %v5747 = vpop.f32.mrb[0].mxu0
    %v5748 = vpop.f32.mrb[0].mxu0
    %5749 = vdwg.mxu0
    %5750 = vmatprep.subr.bf16.mxu0 0
    %5751 = vmatpush1.bf16.msra.mxu0 %v5614
    %5752 = vmatprep.subr.bf16.mxu0 0
    %5753 = vmatpush1.bf16.msra.mxu0 %v5615
    %5754 = vmatprep.subr.bf16.mxu0 0
    %5755 = vmatpush1.bf16.msra.mxu0 %v5616
    %5756 = vmatprep.subr.bf16.mxu0 0
    %5757 = vmatpush1.bf16.msra.mxu0 %v5617
    %5758 = vmatprep.subr.bf16.mxu0 0
    %5759 = vmatpush1.bf16.msra.mxu0 %v5618
    %5760 = vmatprep.subr.bf16.mxu0 0
    %5761 = vmatpush1.bf16.msra.mxu0 %v5619
    %5762 = vmatprep.subr.bf16.mxu0 0
    %5763 = vmatpush1.bf16.msra.mxu0 %v5620
    %5764 = vmatprep.subr.bf16.mxu0 0
    %5765 = vmatpush1.bf16.msra.mxu0 %v5621
    %5766 = vmatprep.subr.bf16.mxu0 0
    %5767 = vmatpush1.bf16.msra.mxu0 %v5622
    %5768 = vmatprep.subr.bf16.mxu0 0
    %5769 = vmatpush1.bf16.msra.mxu0 %v5623
    %5770 = vmatprep.subr.bf16.mxu0 0
    %5771 = vmatpush1.bf16.msra.mxu0 %v5624
    %5772 = vmatprep.subr.bf16.mxu0 0
    %5773 = vmatpush1.bf16.msra.mxu0 %v5625
    %5774 = vmatprep.subr.bf16.mxu0 0
    %5775 = vmatpush1.bf16.msra.mxu0 %v5626
    %5776 = vmatprep.subr.bf16.mxu0 0
    %5777 = vmatpush1.bf16.msra.mxu0 %v5627
    %5778 = vmatprep.subr.bf16.mxu0 0
    %5779 = vmatpush1.bf16.msra.mxu0 %v5628
    %5780 = vmatprep.subr.bf16.mxu0 0
    %5781 = vmatpush1.bf16.msra.mxu0 %v5629
    %5782 = vmatprep.mubr.bf16.mxu0 %v5370
    %5783 = vmatmul.mubr.bf16.gmra.mrb[0].mxu0 %v5369
    %v5784 = vpop.f32.mrb[0].mxu0
    %v5785 = vadd.f32 %v5745, %v5784
    %v5786 = vpop.f32.mrb[0].mxu0
    %v5787 = vpop.f32.mrb[0].mxu0
    %v5788 = vpop.f32.mrb[0].mxu0
    %5789 = vdwg.mxu0
    %5790 = vmatprep.subr.bf16.mxu0 0
    %5791 = vmatpush1.bf16.msra.mxu0 %v5630
    %5792 = vmatprep.subr.bf16.mxu0 0
    %5793 = vmatpush1.bf16.msra.mxu0 %v5631
    %5794 = vmatprep.subr.bf16.mxu0 0
    %5795 = vmatpush1.bf16.msra.mxu0 %v5632
    %5796 = vmatprep.subr.bf16.mxu0 0
    %5797 = vmatpush1.bf16.msra.mxu0 %v5633
    %5798 = vmatprep.subr.bf16.mxu0 0
    %5799 = vmatpush1.bf16.msra.mxu0 %v5634
    %5800 = vmatprep.subr.bf16.mxu0 0
    %5801 = vmatpush1.bf16.msra.mxu0 %v5635
    %5802 = vmatprep.subr.bf16.mxu0 0
    %5803 = vmatpush1.bf16.msra.mxu0 %v5636
    %5804 = vmatprep.subr.bf16.mxu0 0
    %5805 = vmatpush1.bf16.msra.mxu0 %v5637
    %5806 = vmatprep.subr.bf16.mxu0 0
    %5807 = vmatpush1.bf16.msra.mxu0 %v5638
    %5808 = vmatprep.subr.bf16.mxu0 0
    %5809 = vmatpush1.bf16.msra.mxu0 %v5639
    %5810 = vmatprep.subr.bf16.mxu0 0
    %5811 = vmatpush1.bf16.msra.mxu0 %v5640
    %5812 = vmatprep.subr.bf16.mxu0 0
    %5813 = vmatpush1.bf16.msra.mxu0 %v5641
    %5814 = vmatprep.subr.bf16.mxu0 0
    %5815 = vmatpush1.bf16.msra.mxu0 %v5642
    %5816 = vmatprep.subr.bf16.mxu0 0
    %5817 = vmatpush1.bf16.msra.mxu0 %v5643
    %5818 = vmatprep.subr.bf16.mxu0 0
    %5819 = vmatpush1.bf16.msra.mxu0 %v5644
    %5820 = vmatprep.subr.bf16.mxu0 0
    %5821 = vmatpush1.bf16.msra.mxu0 %v5645
    %5822 = vmatprep.mubr.bf16.mxu0 %v5372
    %5823 = vmatmul.mubr.bf16.gmra.mrb[0].mxu0 %v5371
    %v5824 = vpop.f32.mrb[0].mxu0
    %v5825 = vadd.f32 %v5785, %v5824
    %v5826 = vpop.f32.mrb[0].mxu0
    %v5827 = vpop.f32.mrb[0].mxu0
    %v5828 = vpop.f32.mrb[0].mxu0
    %5829 = vdwg.mxu0
    %5830 = vmatprep.subr.bf16.mxu0 0
    %5831 = vmatpush1.bf16.msra.mxu0 %v5646
    %5832 = vmatprep.subr.bf16.mxu0 0
    %5833 = vmatpush1.bf16.msra.mxu0 %v5647
    %5834 = vmatprep.subr.bf16.mxu0 0
    %5835 = vmatpush1.bf16.msra.mxu0 %v5648
    %5836 = vmatprep.subr.bf16.mxu0 0
    %5837 = vmatpush1.bf16.msra.mxu0 %v5649
    %5838 = vmatprep.subr.bf16.mxu0 0
    %5839 = vmatpush1.bf16.msra.mxu0 %v5650
    %5840 = vmatprep.subr.bf16.mxu0 0
    %5841 = vmatpush1.bf16.msra.mxu0 %v5651
    %5842 = vmatprep.subr.bf16.mxu0 0
    %5843 = vmatpush1.bf16.msra.mxu0 %v5652
    %5844 = vmatprep.subr.bf16.mxu0 0
    %5845 = vmatpush1.bf16.msra.mxu0 %v5653
    %5846 = vmatprep.subr.bf16.mxu0 0
    %5847 = vmatpush1.bf16.msra.mxu0 0
    %5848 = vmatprep.subr.bf16.mxu0 0
    %5849 = vmatpush1.bf16.msra.mxu0 0
    %5850 = vmatprep.subr.bf16.mxu0 0
    %5851 = vmatpush1.bf16.msra.mxu0 0
    %5852 = vmatprep.subr.bf16.mxu0 0
    %5853 = vmatpush1.bf16.msra.mxu0 0
    %5854 = vmatprep.subr.bf16.mxu0 0
    %5855 = vmatpush1.bf16.msra.mxu0 0
    %5856 = vmatprep.subr.bf16.mxu0 0
    %5857 = vmatpush1.bf16.msra.mxu0 0
    %5858 = vmatprep.subr.bf16.mxu0 0
    %5859 = vmatpush1.bf16.msra.mxu0 0
    %5860 = vmatprep.subr.bf16.mxu0 0
    %5861 = vmatpush1.bf16.msra.mxu0 0
    %5862 = vmatprep.mubr.bf16.mxu0 0
    %5863 = vmatmul.mubr.bf16.gmra.mrb[0].mxu0 %v5373
    %v5864 = vpop.f32.mrb[0].mxu0
    %v5865 = vadd.f32 %v5825, %v5864
    %v5866 = vpop.f32.mrb[0].mxu0
    %v5867 = vpop.f32.mrb[0].mxu0
    %v5868 = vpop.f32.mrb[0].mxu0
    %5869 = vdwg.mxu0
    %v5870 = vadd.f32 %v5865, %v50
    %vm5871 = vcmask 1041408
    %v5872 = vsel %vm5871, %v5870, -inf
    %5873 = vmax.xlane.f32.xlu0 %v5872
    %v5874 = vpop.xlane.xlu0 %5873
    %v5875 = vsub.f32 %v5870, %v5874
    %v5876 = vmul.f32 %v5875, 1.442695
    %v5877 = vpow.pop %v5876
    %v5878 = vsel %vm5871, %v5877, 0.0
    %5879 = vadd.xlane.f32.xlu0 %v5878
    %v5880 = vpop.xlane.xlu0 %5879
    %v5881 = vrcp.pop %v5880
    %v5882 = vmul.f32 %v5877, %v5881
    %v5883 = vmul.f32 %v5865, %v49
    %v5884 = vadd.f32 %v5883, %v5882
    %5885 = vst [vmem:[#allocation2] sm:$0x3] %v5884
    // Predicated region
    $region42: #{policy_forward.1} parent=1 // pred_check
      _
    $region43: #{policy_forward.1} parent=1 // pred_check_branch
      %5887 = sbr.rel (0) target = $region45
    $region44: #{policy_forward.1} parent=1 // pred_region
      %s5889 = ssub.s32 32, 32
      %5890 = vsyncadd [#allocation3], %s5889
      %s5892 = sshll.u32 [#allocation2], 4
      %s5893 = int_to_ptr.vmem [resolvable:$true] %s5892
      %5895 = dma.vmem_to_hbm [thread:$0]  %s5893, 32, %s10, [#allocation3]
    $region45: #{policy_forward.1} parent=1 // pred_fallthru
      _
    // Predicated region
    $region46: #{policy_forward.1} parent=1 // pred_check
      _
    $region47: #{policy_forward.1} parent=1 // pred_check_branch
      %5897 = sbr.rel (0) target = $region49
    $region48: #{policy_forward.1} parent=1 // pred_region
      %5898 = dma.done [#allocation3], 32
    $region49: #{policy_forward.1} parent=1 // pred_fallthru
      _
    %5899 = vsyncpa [#allocation3], 1

</llo_original>
